<compile_context>
chip_gen: v6e
topology: v6e:2x2x1
jax: 0.10.0
libtpu: 0.0.40
codegen_flags: <defaults>
</compile_context>

<pallas_src>
import functools
import math

import jax
import jax.numpy as jnp
from jax import lax  # noqa: F401
from jax.experimental import pallas as pl
from jax.experimental.pallas import tpu as pltpu

# ----------------------------- model hyper-params ---------------------------
LATENT_DIM = 20
MARKER_DIM = 31
HIDDEN_DIM = 128
TIME_DIM = 2
N_CLUSTER = 5
X_EMB = 128
T_EMB = 8
SHARED_OUT = 256
ENC_L = (64, 64)
SIGMA_MIN = 0.01
GAMMA = 1.0

EMB_DIM = X_EMB + T_EMB                       # 136
GATE_DIM = 3 * HIDDEN_DIM                     # 384
HXTY_DIM = HIDDEN_DIM + EMB_DIM + N_CLUSTER   # 269
HZY_DIM = HIDDEN_DIM + LATENT_DIM + N_CLUSTER  # 153
HEAD_DIM = 2 * MARKER_DIM + 2                 # 64

MATMUL_DTYPE = jnp.bfloat16                   # MXU operand dtype (f32 accumulate)
LOG2PI = math.log(2.0 * math.pi)


# ----------------------------- Pallas kernels -------------------------------
def _embed_proj_kernel(xt_ref, we_ref, be_ref, wih_ref, bih_ref, phi_ref, gi_ref):
    """[x|t] -> ReLU(block-diag embed) -> phi_xt  and  gi = phi_xt @ [Wih_enc|Wih_gen] + b."""
    xt = xt_ref[...].astype(we_ref.dtype)
    phi = jnp.dot(xt, we_ref[...], preferred_element_type=jnp.float32) + be_ref[...]
    phi = jnp.maximum(phi, 0.0)                                   # ReLU (both embeddings)
    phi_ref[...] = phi
    gi_ref[...] = (jnp.dot(phi.astype(wih_ref.dtype), wih_ref[...],
                           preferred_element_type=jnp.float32) + bih_ref[...])


def embed_and_input_proj(xt, prep):
    n = xt.shape[0]
    return pl.pallas_call(
        _embed_proj_kernel,
        out_shape=(jax.ShapeDtypeStruct((n, EMB_DIM), jnp.float32),
                   jax.ShapeDtypeStruct((n, 2 * GATE_DIM), jnp.float32)),
    )(xt, prep["we"], prep["be"], prep["wih"], prep["bih"])


def _dual_gru_kernel(gi_ref, whe_ref, whg_ref, bhe_ref, bhg_ref,
                     hpe_ref, hpg_ref, hlast_ref, he_scr, hg_scr):
    """One grid step = one timestep for BOTH GRUs (input projection already hoisted)."""
    t = pl.program_id(0)

    @pl.when(t == 0)
    def _():
        he_scr[...] = jnp.zeros_like(he_scr)
        hg_scr[...] = jnp.zeros_like(hg_scr)

    he = he_scr[...]
    hg = hg_scr[...]
    # Emit the hidden state *before* this update: this is exactly hidden_seq[:-1] downstream.
    hpe_ref[0] = he
    hpg_ref[0] = hg

    gi = gi_ref[0]                                                # (BS, 2*GATE_DIM) f32
    H = HIDDEN_DIM

    def cell(gi_x, h, whh_ref, bhh_ref):
        gh = (jnp.dot(h.astype(whh_ref.dtype), whh_ref[...],
                      preferred_element_type=jnp.float32) + bhh_ref[...])
        r = jax.nn.sigmoid(gi_x[:, 0:H] + gh[:, 0:H])
        z = jax.nn.sigmoid(gi_x[:, H:2 * H] + gh[:, H:2 * H])
        n = jnp.tanh(gi_x[:, 2 * H:3 * H] + r * gh[:, 2 * H:3 * H])
        return (1.0 - z) * n + z * h

    he_new = cell(gi[:, :GATE_DIM], he, whe_ref, bhe_ref)
    hg_new = cell(gi[:, GATE_DIM:], hg, whg_ref, bhg_ref)

    he_scr[...] = he_new
    hg_scr[...] = hg_new
    hlast_ref[...] = he_new                                       # after last step == h_T (enc)


def dual_gru(gi3, prep):
    T, BS, G = gi3.shape
    return pl.pallas_call(
        _dual_gru_kernel,
        grid=(T,),
        in_specs=[
            pl.BlockSpec((1, BS, G), lambda t: (t, 0, 0)),
            pl.BlockSpec((HIDDEN_DIM, GATE_DIM), lambda t: (0, 0)),   # VMEM-resident weights
            pl.BlockSpec((HIDDEN_DIM, GATE_DIM), lambda t: (0, 0)),
            pl.BlockSpec((1, GATE_DIM), lambda t: (0, 0)),
            pl.BlockSpec((1, GATE_DIM), lambda t: (0, 0)),
        ],
        out_specs=(
            pl.BlockSpec((1, BS, HIDDEN_DIM), lambda t: (t, 0, 0)),
            pl.BlockSpec((1, BS, HIDDEN_DIM), lambda t: (t, 0, 0)),
            pl.BlockSpec((BS, HIDDEN_DIM), lambda t: (0, 0)),         # resident "last state" block
        ),
        out_shape=(
            jax.ShapeDtypeStruct((T, BS, HIDDEN_DIM), jnp.float32),
            jax.ShapeDtypeStruct((T, BS, HIDDEN_DIM), jnp.float32),
            jax.ShapeDtypeStruct((BS, HIDDEN_DIM), jnp.float32),
        ),
        scratch_shapes=[
            pltpu.VMEM((BS, HIDDEN_DIM), jnp.float32),
            pltpu.VMEM((BS, HIDDEN_DIM), jnp.float32),
        ],
        compiler_params=pltpu.CompilerParams(dimension_semantics=("arbitrary",)),
    )(gi3, prep["whh_enc"], prep["whh_gen"], prep["bhh_enc"], prep["bhh_gen"])


def _encoder_mlp_kernel(hxty_ref, wpre_ref, bpre_ref, w1_ref, b1_ref,
                        w2_ref, b2_ref, wz_ref, bz_ref, out_ref):
    def dense(v, w_ref, b_ref, relu):
        y = (jnp.dot(v.astype(w_ref.dtype), w_ref[...],
                     preferred_element_type=jnp.float32) + b_ref[...])
        return jnp.maximum(y, 0.0) if relu else y

    x = jnp.maximum(hxty_ref[...], 0.0)             # leading ReLU of inf_pre_module
    h = dense(x, wpre_ref, bpre_ref, True)          # inf_pre Linear+ReLU (Dropout == identity)
    h = dense(h, w1_ref, b1_ref, True)              # z_intmd layer 1
    h = dense(h, w2_ref, b2_ref, True)              # z_intmd layer 2
    out_ref[...] = dense(h, wz_ref, bz_ref, False)  # concatenated [mu_z | var_z_pre]


def encoder_mlp(hxty, prep):
    n = hxty.shape[0]
    return pl.pallas_call(
        _encoder_mlp_kernel,
        out_shape=jax.ShapeDtypeStruct((n, 2 * LATENT_DIM), jnp.float32),
    )(hxty, prep["inf_pre_w"], prep["inf_pre_b"], prep["z1_w"], prep["z1_b"],
      prep["z2_w"], prep["z2_b"], prep["zhead_w"], prep["zhead_b"])


def _gen_mlp_kernel(hzy_ref, wpre_ref, bpre_ref, wh_ref, bh_ref, out_ref):
    x = jnp.maximum(hzy_ref[...], 0.0)              # leading ReLU of gen_pre_module
    h = (jnp.dot(x.astype(wpre_ref.dtype), wpre_ref[...],
                 preferred_element_type=jnp.float32) + bpre_ref[...])
    h = jnp.maximum(h, 0.0)
    out_ref[...] = (jnp.dot(h.astype(wh_ref.dtype), wh_ref[...],
                            preferred_element_type=jnp.float32) + bh_ref[...])


def gen_mlp(hzy, prep):
    n = hzy.shape[0]
    return pl.pallas_call(
        _gen_mlp_kernel,
        out_shape=jax.ShapeDtypeStruct((n, HEAD_DIM), jnp.float32),
    )(hzy, prep["gen_pre_w"], prep["gen_pre_b"], prep["ghead_w"], prep["ghead_b"])


# ----------------------------- parameter init -------------------------------
def _init_linear(key, din, dout):
    k1, k2 = jax.random.split(key)
    bound = 1.0 / jnp.sqrt(float(din))
    w = jax.random.uniform(k1, (din, dout), jnp.float32, -bound, bound)
    b = jax.random.uniform(k2, (dout,), jnp.float32, -bound, bound)
    return w, b


def _init_gru(key, din, h):
    k1, k2, k3, k4 = jax.random.split(key, 4)
    bound = 1.0 / jnp.sqrt(float(h))
    return {
        "wih": jax.random.uniform(k1, (din, 3 * h), jnp.float32, -bound, bound),
        "whh": jax.random.uniform(k2, (h, 3 * h), jnp.float32, -bound, bound),
        "bih": jax.random.uniform(k3, (3 * h,), jnp.float32, -bound, bound),
        "bhh": jax.random.uniform(k4, (3 * h,), jnp.float32, -bound, bound),
    }


def init_params(key):
    keys = jax.random.split(key, 16)
    p = {}
    p["embed_x_w"], p["embed_x_b"] = _init_linear(keys[0], MARKER_DIM, X_EMB)
    p["embed_t_w"], p["embed_t_b"] = _init_linear(keys[1], TIME_DIM, T_EMB)
    p["inf_pre_w"], p["inf_pre_b"] = _init_linear(keys[2], HXTY_DIM, HXTY_DIM)
    p["gen_pre_w"], p["gen_pre_b"] = _init_linear(keys[3], HZY_DIM, SHARED_OUT)
    p["gen_rnn"] = _init_gru(keys[4], EMB_DIM, HIDDEN_DIM)
    p["enc_rnn"] = _init_gru(keys[5], EMB_DIM, HIDDEN_DIM)
    p["y_w"], p["y_b"] = _init_linear(keys[6], HIDDEN_DIM, N_CLUSTER)
    p["z1_w"], p["z1_b"] = _init_linear(keys[7], HXTY_DIM, ENC_L[0])
    p["z2_w"], p["z2_b"] = _init_linear(keys[8], ENC_L[0], ENC_L[1])
    p["zmu_w"], p["zmu_b"] = _init_linear(keys[9], ENC_L[1], LATENT_DIM)
    p["zvar_w"], p["zvar_b"] = _init_linear(keys[10], ENC_L[1], LATENT_DIM)
    p["tmu_w"], p["tmu_b"] = _init_linear(keys[11], SHARED_OUT, 1)
    p["tlogvar_w"], p["tlogvar_b"] = _init_linear(keys[12], SHARED_OUT, 1)
    p["xmu_w"], p["xmu_b"] = _init_linear(keys[13], SHARED_OUT, MARKER_DIM)
    p["xlogvar_w"], p["xlogvar_b"] = _init_linear(keys[14], SHARED_OUT, MARKER_DIM)
    return p


def prepare_params(p):
    """Pack/fuse weights for the fused kernels (done once, outside jit). Weights -> bf16."""
    bf = MATMUL_DTYPE

    # block-diagonal [x|t] embedding (ReLU commutes with the concat)
    we = jnp.zeros((MARKER_DIM + TIME_DIM, EMB_DIM), jnp.float32)
    we = we.at[:MARKER_DIM, :X_EMB].set(p["embed_x_w"])
    we = we.at[MARKER_DIM:, X_EMB:].set(p["embed_t_w"])
    be = jnp.concatenate([p["embed_x_b"], p["embed_t_b"]])[None, :]

    # hoisted GRU input projections for both GRUs: [enc | gen]
    wih = jnp.concatenate([p["enc_rnn"]["wih"], p["gen_rnn"]["wih"]], axis=1)
    bih = jnp.concatenate([p["enc_rnn"]["bih"], p["gen_rnn"]["bih"]])[None, :]

    # concatenated output heads
    zhead_w = jnp.concatenate([p["zmu_w"], p["zvar_w"]], axis=1)
    zhead_b = jnp.concatenate([p["zmu_b"], p["zvar_b"]])[None, :]
    ghead_w = jnp.concatenate([p["xmu_w"], p["xlogvar_w"], p["tmu_w"], p["tlogvar_w"]], axis=1)
    ghead_b = jnp.concatenate([p["xmu_b"], p["xlogvar_b"], p["tmu_b"], p["tlogvar_b"]])[None, :]

    return {
        "we": we.astype(bf), "be": be,
        "wih": wih.astype(bf), "bih": bih,
        "whh_enc": p["enc_rnn"]["whh"].astype(bf),
        "whh_gen": p["gen_rnn"]["whh"].astype(bf),
        "bhh_enc": p["enc_rnn"]["bhh"][None, :],
        "bhh_gen": p["gen_rnn"]["bhh"][None, :],
        "y_w": p["y_w"], "y_b": p["y_b"],
        "inf_pre_w": p["inf_pre_w"].astype(bf), "inf_pre_b": p["inf_pre_b"][None, :],
        "z1_w": p["z1_w"].astype(bf), "z1_b": p["z1_b"][None, :],
        "z2_w": p["z2_w"].astype(bf), "z2_b": p["z2_b"][None, :],
        "zhead_w": zhead_w.astype(bf), "zhead_b": zhead_b,
        "gen_pre_w": p["gen_pre_w"].astype(bf), "gen_pre_b": p["gen_pre_b"][None, :],
        "ghead_w": ghead_w.astype(bf), "ghead_b": ghead_b,
    }


# ----------------------------- forward --------------------------------------
@functools.partial(jax.jit, static_argnames=("temp",))
def model1_forward(prep, x, t, mask, rng, temp=0.5):
    T, BS, _ = x.shape
    N = T * BS

    # ----- embeddings + hoisted GRU input projections (1 Pallas launch) -----
    xt = jnp.concatenate([x, t], axis=-1).reshape(N, MARKER_DIM + TIME_DIM)
    phi_flat, gi_flat = embed_and_input_proj(xt, prep)            # (N,136), (N,768)
    phi_xt = phi_flat.reshape(T, BS, EMB_DIM)

    # ----- both GRUs fused, weights resident, grid over T (1 launch) -----
    hprev_enc, hprev_gen, hlast_enc = dual_gru(
        gi_flat.reshape(T, BS, 2 * GATE_DIM), prep)               # (T,BS,128) x2, (BS,128)

    # ----- y posterior from the last encoder hidden state (tiny; plain XLA) -----
    logits_last = hlast_enc @ prep["y_w"] + prep["y_b"]
    logits_y = jax.nn.log_softmax(logits_last, axis=-1)[None, :, :]     # (1,BS,5)

    rng, k_g, k_e = jax.random.split(rng, 3)
    u = jax.random.uniform(k_g, logits_y.shape)
    g = -jnp.log(-jnp.log(u + 1e-20))
    sample_y = jax.nn.softmax((g + logits_y) / temp, axis=-1)
    sample_y = jnp.broadcast_to(sample_y, (T, BS, N_CLUSTER))           # (T,BS,5)

    # ----- fused encoder MLP chain (1 launch) -----
    hxty = jnp.concatenate([hprev_enc, phi_xt, sample_y], axis=-1).reshape(N, HXTY_DIM)
    zhead = encoder_mlp(hxty, prep)                                     # (N, 40)
    mu_z = zhead[:, :LATENT_DIM].reshape(T, BS, LATENT_DIM)
    var_z = jax.nn.softplus(zhead[:, LATENT_DIM:]).reshape(T, BS, LATENT_DIM)
    logvar_z = jnp.log(var_z + SIGMA_MIN)
    eps = jax.random.normal(k_e, mu_z.shape)
    sample_z = mu_z + eps * jnp.exp(0.5 * logvar_z)                     # (T,BS,20)

    posterior_logits_y = jnp.broadcast_to(logits_y, (T, BS, N_CLUSTER))

    # ----- fused generative MLP chain + concatenated heads (1 launch) -----
    hzy = jnp.concatenate([hprev_gen, sample_z, sample_y], axis=-1).reshape(N, HZY_DIM)
    ghead = gen_mlp(hzy, prep)                                          # (N, 64)
    mu_marker = ghead[:, :MARKER_DIM].reshape(T, BS, MARKER_DIM)
    logvar_marker = ghead[:, MARKER_DIM:2 * MARKER_DIM].reshape(T, BS, MARKER_DIM)
    mu_time = ghead[:, 2 * MARKER_DIM:2 * MARKER_DIM + 1].reshape(T, BS, 1)
    logvar_time = ghead[:, 2 * MARKER_DIM + 1:].reshape(T, BS, 1)

    # ----- likelihoods -----
    # TODO(synk): compute_point_log_likelihood not given in source; Gaussian LL of t[...,0:1]
    #             is used here for time_loss='normal'.
    t_interval = t[:, :, 0:1]
    time_ll = (-0.5 * LOG2PI - 0.5 * logvar_time
               - 0.5 * (t_interval - mu_time) ** 2 / jnp.exp(logvar_time))[:, :, 0]      # (T,BS)

    # TODO(synk): compute_marker_log_likelihood not given; Gaussian LL summed over marker dim.
    marker_ll = jnp.sum(-0.5 * LOG2PI - 0.5 * logvar_marker
                        - 0.5 * (x - mu_marker) ** 2 / jnp.exp(logvar_marker), axis=-1)  # (T,BS)

    # ----- KL terms -----
    log_q_y = jax.nn.log_softmax(posterior_logits_y, axis=-1)
    q_y = jnp.exp(log_q_y)
    kl_cluster = jnp.sum(q_y * (log_q_y - jnp.log(1.0 / N_CLUSTER)), axis=-1) * mask     # (T,BS)
    kl_z = 0.5 * jnp.sum(jnp.exp(logvar_z) + mu_z ** 2 - 1.0 - logvar_z, axis=-1) * mask
    KL = kl_cluster.sum() + kl_z.sum()

    # ----- loss assembly (matches Model1.forward) -----
    marker_loss = (-1.0 * marker_ll * mask)[1:, :].sum()
    time_loss = (-1.0 * time_ll * mask)[1:, :].sum()
    NLL = GAMMA * time_loss + marker_loss
    loss = NLL + KL
    true_loss = time_loss + marker_loss

    # TODO(synk): get_marker_metric / get_time_metric not given; report masked MSE metrics.
    denom = jnp.maximum(mask.sum(), 1.0)
    marker_mse = jnp.sum(((mu_marker - x) ** 2).sum(-1) * mask) / denom
    time_mse = jnp.sum(((mu_time[:, :, 0] - t[:, :, 0]) ** 2) * mask) / denom

    meta = {
        "marker_nll": marker_loss,
        "time_nll": time_loss,
        "true_ll": true_loss,
        "kl": KL,
        "marker_mse": marker_mse,
        "time_mse": time_mse,
    }
    return loss, meta


# ----------------------------- driver ----------------------------------------
if __name__ == "__main__":
    T, BS = 8, 2
    root = jax.random.PRNGKey(0)
    k_params, k_x, k_t, k_fwd = jax.random.split(root, 4)

    params = init_params(k_params)
    prep = prepare_params(params)

    marker_seq = jax.random.normal(k_x, (T, BS, MARKER_DIM), jnp.float32)
    time_seq = jnp.abs(jax.random.normal(k_t, (T, BS, TIME_DIM), jnp.float32))
    mask = jnp.ones((T, BS), jnp.float32)

    loss, meta = model1_forward(prep, marker_seq, time_seq, mask, k_fwd, temp=0.5)
    jax.block_until_ready(loss)
    assert jnp.isfinite(loss)
    print("KERNEL_OK")
</pallas_src>

<mosaic_0001>
module attributes {stable_mosaic.version = 11 : i64} {
  func.func @_embed_proj_kernel(%arg0: memref<16x33xf32, #tpu.memory_space<vmem>>, %arg1: memref<33x136xbf16, #tpu.memory_space<vmem>>, %arg2: memref<1x136xf32, #tpu.memory_space<vmem>>, %arg3: memref<136x768xbf16, #tpu.memory_space<vmem>>, %arg4: memref<1x768xf32, #tpu.memory_space<vmem>>, %arg5: memref<16x136xf32, #tpu.memory_space<vmem>>, %arg6: memref<16x768xf32, #tpu.memory_space<vmem>>) attributes {dimension_semantics = [], scalar_prefetch = 0 : i64, scratch_operands = 0 : i64, tpu.core_type = #tpu.core_type<tc>} {
    %c0 = arith.constant 0 : index
    %c0_0 = arith.constant 0 : index
    %0 = vector.load %arg0[%c0, %c0_0] : memref<16x33xf32, #tpu.memory_space<vmem>>, vector<16x33xf32>
    %1 = arith.truncf %0 : vector<16x33xf32> to vector<16x33xbf16>
    %c0_1 = arith.constant 0 : index
    %c0_2 = arith.constant 0 : index
    %2 = vector.load %arg1[%c0_1, %c0_2] : memref<33x136xbf16, #tpu.memory_space<vmem>>, vector<33x136xbf16>
    %cst = arith.constant dense<0.000000e+00> : vector<16x136xf32>
    %3 = tpu.matmul %1, %2, %cst {dimension_numbers = #tpu.dot_dimension_numbers<[1], [0], [0], [1], [0, 0, 1, 1], [], []>} : vector<16x33xbf16>, vector<33x136xbf16>, vector<16x136xf32> -> vector<16x136xf32>
    %c0_3 = arith.constant 0 : index
    %c0_4 = arith.constant 0 : index
    %4 = vector.load %arg2[%c0_3, %c0_4] : memref<1x136xf32, #tpu.memory_space<vmem>>, vector<1x136xf32>
    %5 = vector.broadcast %4 : vector<1x136xf32> to vector<16x136xf32>
    %6 = arith.addf %3, %5 : vector<16x136xf32>
    %cst_5 = arith.constant 0.000000e+00 : f32
    %7 = vector.broadcast %cst_5 : f32 to vector<16x136xf32>
    %8 = arith.maximumf %6, %7 : vector<16x136xf32>
    %c0_6 = arith.constant 0 : index
    %c0_7 = arith.constant 0 : index
    %9 = vector.load %arg5[%c0_6, %c0_7] : memref<16x136xf32, #tpu.memory_space<vmem>>, vector<16x136xf32>
    tpu.vector_store %arg5[%c0_6, %c0_7], %8 {strides = array<i32>} : memref<16x136xf32, #tpu.memory_space<vmem>>, vector<16x136xf32>,
    %10 = arith.truncf %8 : vector<16x136xf32> to vector<16x136xbf16>
    %c0_8 = arith.constant 0 : index
    %c0_9 = arith.constant 0 : index
    %11 = vector.load %arg3[%c0_8, %c0_9] : memref<136x768xbf16, #tpu.memory_space<vmem>>, vector<136x768xbf16>
    %cst_10 = arith.constant dense<0.000000e+00> : vector<16x768xf32>
    %12 = tpu.matmul %10, %11, %cst_10 {dimension_numbers = #tpu.dot_dimension_numbers<[1], [0], [0], [1], [0, 0, 1, 1], [], []>} : vector<16x136xbf16>, vector<136x768xbf16>, vector<16x768xf32> -> vector<16x768xf32>
    %c0_11 = arith.constant 0 : index
    %c0_12 = arith.constant 0 : index
    %13 = vector.load %arg4[%c0_11, %c0_12] : memref<1x768xf32, #tpu.memory_space<vmem>>, vector<1x768xf32>
    %14 = vector.broadcast %13 : vector<1x768xf32> to vector<16x768xf32>
    %15 = arith.addf %12, %14 : vector<16x768xf32>
    %c0_13 = arith.constant 0 : index
    %c0_14 = arith.constant 0 : index
    %16 = vector.load %arg6[%c0_13, %c0_14] : memref<16x768xf32, #tpu.memory_space<vmem>>, vector<16x768xf32>
    tpu.vector_store %arg6[%c0_13, %c0_14], %15 {strides = array<i32>} : memref<16x768xf32, #tpu.memory_space<vmem>>, vector<16x768xf32>,
    return
  }
}

module attributes {stable_mosaic.version = 11 : i64} {
  func.func @_dual_gru_kernel(%arg0: i32, %arg1: memref<1x2x768xf32, #tpu.memory_space<vmem>>, %arg2: memref<128x384xbf16, #tpu.memory_space<vmem>>, %arg3: memref<128x384xbf16, #tpu.memory_space<vmem>>, %arg4: memref<1x384xf32, #tpu.memory_space<vmem>>, %arg5: memref<1x384xf32, #tpu.memory_space<vmem>>, %arg6: memref<1x2x128xf32, #tpu.memory_space<vmem>>, %arg7: memref<1x2x128xf32, #tpu.memory_space<vmem>>, %arg8: memref<2x128xf32, #tpu.memory_space<vmem>>, %arg9: memref<2x128xf32, #tpu.memory_space<vmem>>, %arg10: memref<2x128xf32, #tpu.memory_space<vmem>>) attributes {dimension_semantics = [#tpu.dimension_semantics<arbitrary>], iteration_bounds = array<i64: 8>, scalar_prefetch = 0 : i64, scratch_operands = 2 : i64, tpu.core_type = #tpu.core_type<tc>, window_params = [{transform_indices = @transform_0, window_bounds = array<i64: 1, 2, 768>}, {pipeline_mode = #tpu.pipeline_mode<synchronous>, transform_indices = @transform_1, window_bounds = array<i64: 128, 384>}, {pipeline_mode = #tpu.pipeline_mode<synchronous>, transform_indices = @transform_2, window_bounds = array<i64: 128, 384>}, {pipeline_mode = #tpu.pipeline_mode<synchronous>, transform_indices = @transform_3, window_bounds = array<i64: 1, 384>}, {pipeline_mode = #tpu.pipeline_mode<synchronous>, transform_indices = @transform_4, window_bounds = array<i64: 1, 384>}, {transform_indices = @transform_5, window_bounds = array<i64: 1, 2, 128>}, {transform_indices = @transform_6, window_bounds = array<i64: 1, 2, 128>}, {pipeline_mode = #tpu.pipeline_mode<synchronous>, transform_indices = @transform_7, window_bounds = array<i64: 2, 128>}]} {
    %c0_i32 = arith.constant 0 : i32
    %0 = arith.cmpi eq, %arg0, %c0_i32 : i32
    %1 = arith.extui %0 : i1 to i32
    %c0_i32_0 = arith.constant 0 : i32
    %2 = arith.cmpi ne, %1, %c0_i32_0 : i32
    scf.if %2 {
      %cst_34 = arith.constant 0.000000e+00 : f32
      %82 = vector.broadcast %cst_34 : f32 to vector<2x128xf32>
      %c0_35 = arith.constant 0 : index
      %c0_36 = arith.constant 0 : index
      %83 = vector.load %arg9[%c0_35, %c0_36] : memref<2x128xf32, #tpu.memory_space<vmem>>, vector<2x128xf32>
      tpu.vector_store %arg9[%c0_35, %c0_36], %82 {strides = array<i32>} : memref<2x128xf32, #tpu.memory_space<vmem>>, vector<2x128xf32>,
      %cst_37 = arith.constant 0.000000e+00 : f32
      %84 = vector.broadcast %cst_37 : f32 to vector<2x128xf32>
      %c0_38 = arith.constant 0 : index
      %c0_39 = arith.constant 0 : index
      %85 = vector.load %arg10[%c0_38, %c0_39] : memref<2x128xf32, #tpu.memory_space<vmem>>, vector<2x128xf32>
      tpu.vector_store %arg10[%c0_38, %c0_39], %84 {strides = array<i32>} : memref<2x128xf32, #tpu.memory_space<vmem>>, vector<2x128xf32>,
    } else {
    }
    %c0 = arith.constant 0 : index
    %c0_1 = arith.constant 0 : index
    %3 = vector.load %arg9[%c0, %c0_1] : memref<2x128xf32, #tpu.memory_space<vmem>>, vector<2x128xf32>
    %c0_2 = arith.constant 0 : index
    %c0_3 = arith.constant 0 : index
    %4 = vector.load %arg10[%c0_2, %c0_3] : memref<2x128xf32, #tpu.memory_space<vmem>>, vector<2x128xf32>
    %c0_4 = arith.constant 0 : index
    %c0_5 = arith.constant 0 : index
    %c0_6 = arith.constant 0 : index
    %5 = vector.load %arg6[%c0_4, %c0_5, %c0_6] : memref<1x2x128xf32, #tpu.memory_space<vmem>>, vector<1x2x128xf32>
    %6 = vector.shape_cast %5 : vector<1x2x128xf32> to vector<2x128xf32>
    %7 = vector.shape_cast %3 : vector<2x128xf32> to vector<1x2x128xf32>
    tpu.vector_store %arg6[%c0_4, %c0_5, %c0_6], %7 {strides = array<i32>} : memref<1x2x128xf32, #tpu.memory_space<vmem>>, vector<1x2x128xf32>,
    %c0_7 = arith.constant 0 : index
    %c0_8 = arith.constant 0 : index
    %c0_9 = arith.constant 0 : index
    %8 = vector.load %arg7[%c0_7, %c0_8, %c0_9] : memref<1x2x128xf32, #tpu.memory_space<vmem>>, vector<1x2x128xf32>
    %9 = vector.shape_cast %8 : vector<1x2x128xf32> to vector<2x128xf32>
    %10 = vector.shape_cast %4 : vector<2x128xf32> to vector<1x2x128xf32>
    tpu.vector_store %arg7[%c0_7, %c0_8, %c0_9], %10 {strides = array<i32>} : memref<1x2x128xf32, #tpu.memory_space<vmem>>, vector<1x2x128xf32>,
    %c0_10 = arith.constant 0 : index
    %c0_11 = arith.constant 0 : index
    %c0_12 = arith.constant 0 : index
    %11 = vector.load %arg1[%c0_10, %c0_11, %c0_12] : memref<1x2x768xf32, #tpu.memory_space<vmem>>, vector<1x2x768xf32>
    %12 = vector.shape_cast %11 : vector<1x2x768xf32> to vector<2x768xf32>
    %13 = vector.extract_strided_slice %12 {offsets = [0, 0], sizes = [2, 384], strides = [1, 1]} : vector<2x768xf32> to vector<2x384xf32>
    %14 = arith.truncf %3 : vector<2x128xf32> to vector<2x128xbf16>
    %c0_13 = arith.constant 0 : index
    %c0_14 = arith.constant 0 : index
    %15 = vector.load %arg2[%c0_13, %c0_14] : memref<128x384xbf16, #tpu.memory_space<vmem>>, vector<128x384xbf16>
    %cst = arith.constant dense<0.000000e+00> : vector<2x384xf32>
    %16 = tpu.matmul %14, %15, %cst {dimension_numbers = #tpu.dot_dimension_numbers<[1], [0], [0], [1], [0, 0, 1, 1], [], []>} : vector<2x128xbf16>, vector<128x384xbf16>, vector<2x384xf32> -> vector<2x384xf32>
    %c0_15 = arith.constant 0 : index
    %c0_16 = arith.constant 0 : index
    %17 = vector.load %arg4[%c0_15, %c0_16] : memref<1x384xf32, #tpu.memory_space<vmem>>, vector<1x384xf32>
    %18 = vector.broadcast %17 : vector<1x384xf32> to vector<2x384xf32>
    %19 = arith.addf %16, %18 : vector<2x384xf32>
    %20 = vector.extract_strided_slice %13 {offsets = [0, 0], sizes = [2, 128], strides = [1, 1]} : vector<2x384xf32> to vector<2x128xf32>
    %21 = vector.extract_strided_slice %19 {offsets = [0, 0], sizes = [2, 128], strides = [1, 1]} : vector<2x384xf32> to vector<2x128xf32>
    %22 = arith.addf %20, %21 : vector<2x128xf32>
    %23 = arith.negf %22 : vector<2x128xf32>
    %24 = math.exp %23 : vector<2x128xf32>
    %cst_17 = arith.constant 1.000000e+00 : f32
    %25 = vector.broadcast %cst_17 : f32 to vector<2x128xf32>
    %26 = arith.addf %25, %24 : vector<2x128xf32>
    %27 = arith.divf %25, %26 : vector<2x128xf32>
    %28 = vector.extract_strided_slice %13 {offsets = [0, 128], sizes = [2, 128], strides = [1, 1]} : vector<2x384xf32> to vector<2x128xf32>
    %29 = vector.extract_strided_slice %19 {offsets = [0, 128], sizes = [2, 128], strides = [1, 1]} : vector<2x384xf32> to vector<2x128xf32>
    %30 = arith.addf %28, %29 : vector<2x128xf32>
    %31 = arith.negf %30 : vector<2x128xf32>
    %32 = math.exp %31 : vector<2x128xf32>
    %cst_18 = arith.constant 1.000000e+00 : f32
    %33 = vector.broadcast %cst_18 : f32 to vector<2x128xf32>
    %34 = arith.addf %33, %32 : vector<2x128xf32>
    %35 = arith.divf %33, %34 : vector<2x128xf32>
    %36 = vector.extract_strided_slice %13 {offsets = [0, 256], sizes = [2, 128], strides = [1, 1]} : vector<2x384xf32> to vector<2x128xf32>
    %37 = vector.extract_strided_slice %19 {offsets = [0, 256], sizes = [2, 128], strides = [1, 1]} : vector<2x384xf32> to vector<2x128xf32>
    %38 = arith.mulf %27, %37 : vector<2x128xf32>
    %39 = arith.addf %36, %38 : vector<2x128xf32>
    %40 = math.tanh %39 : vector<2x128xf32>
    %cst_19 = arith.constant 1.000000e+00 : f32
    %41 = vector.broadcast %cst_19 : f32 to vector<2x128xf32>
    %42 = arith.subf %41, %35 : vector<2x128xf32>
    %43 = arith.mulf %42, %40 : vector<2x128xf32>
    %44 = arith.mulf %35, %3 : vector<2x128xf32>
    %45 = arith.addf %43, %44 : vector<2x128xf32>
    %46 = vector.extract_strided_slice %12 {offsets = [0, 384], sizes = [2, 384], strides = [1, 1]} : vector<2x768xf32> to vector<2x384xf32>
    %47 = arith.truncf %4 : vector<2x128xf32> to vector<2x128xbf16>
    %c0_20 = arith.constant 0 : index
    %c0_21 = arith.constant 0 : index
    %48 = vector.load %arg3[%c0_20, %c0_21] : memref<128x384xbf16, #tpu.memory_space<vmem>>, vector<128x384xbf16>
    %cst_22 = arith.constant dense<0.000000e+00> : vector<2x384xf32>
    %49 = tpu.matmul %47, %48, %cst_22 {dimension_numbers = #tpu.dot_dimension_numbers<[1], [0], [0], [1], [0, 0, 1, 1], [], []>} : vector<2x128xbf16>, vector<128x384xbf16>, vector<2x384xf32> -> vector<2x384xf32>
    %c0_23 = arith.constant 0 : index
    %c0_24 = arith.constant 0 : index
    %50 = vector.load %arg5[%c0_23, %c0_24] : memref<1x384xf32, #tpu.memory_space<vmem>>, vector<1x384xf32>
    %51 = vector.broadcast %50 : vector<1x384xf32> to vector<2x384xf32>
    %52 = arith.addf %49, %51 : vector<2x384xf32>
    %53 = vector.extract_strided_slice %46 {offsets = [0, 0], sizes = [2, 128], strides = [1, 1]} : vector<2x384xf32> to vector<2x128xf32>
    %54 = vector.extract_strided_slice %52 {offsets = [0, 0], sizes = [2, 128], strides = [1, 1]} : vector<2x384xf32> to vector<2x128xf32>
    %55 = arith.addf %53, %54 : vector<2x128xf32>
    %56 = arith.negf %55 : vector<2x128xf32>
    %57 = math.exp %56 : vector<2x128xf32>
    %cst_25 = arith.constant 1.000000e+00 : f32
    %58 = vector.broadcast %cst_25 : f32 to vector<2x128xf32>
    %59 = arith.addf %58, %57 : vector<2x128xf32>
    %60 = arith.divf %58, %59 : vector<2x128xf32>
    %61 = vector.extract_strided_slice %46 {offsets = [0, 128], sizes = [2, 128], strides = [1, 1]} : vector<2x384xf32> to vector<2x128xf32>
    %62 = vector.extract_strided_slice %52 {offsets = [0, 128], sizes = [2, 128], strides = [1, 1]} : vector<2x384xf32> to vector<2x128xf32>
    %63 = arith.addf %61, %62 : vector<2x128xf32>
    %64 = arith.negf %63 : vector<2x128xf32>
    %65 = math.exp %64 : vector<2x128xf32>
    %cst_26 = arith.constant 1.000000e+00 : f32
    %66 = vector.broadcast %cst_26 : f32 to vector<2x128xf32>
    %67 = arith.addf %66, %65 : vector<2x128xf32>
    %68 = arith.divf %66, %67 : vector<2x128xf32>
    %69 = vector.extract_strided_slice %46 {offsets = [0, 256], sizes = [2, 128], strides = [1, 1]} : vector<2x384xf32> to vector<2x128xf32>
    %70 = vector.extract_strided_slice %52 {offsets = [0, 256], sizes = [2, 128], strides = [1, 1]} : vector<2x384xf32> to vector<2x128xf32>
    %71 = arith.mulf %60, %70 : vector<2x128xf32>
    %72 = arith.addf %69, %71 : vector<2x128xf32>
    %73 = math.tanh %72 : vector<2x128xf32>
    %cst_27 = arith.constant 1.000000e+00 : f32
    %74 = vector.broadcast %cst_27 : f32 to vector<2x128xf32>
    %75 = arith.subf %74, %68 : vector<2x128xf32>
    %76 = arith.mulf %75, %73 : vector<2x128xf32>
    %77 = arith.mulf %68, %4 : vector<2x128xf32>
    %78 = arith.addf %76, %77 : vector<2x128xf32>
    %c0_28 = arith.constant 0 : index
    %c0_29 = arith.constant 0 : index
    %79 = vector.load %arg9[%c0_28, %c0_29] : memref<2x128xf32, #tpu.memory_space<vmem>>, vector<2x128xf32>
    tpu.vector_store %arg9[%c0_28, %c0_29], %45 {strides = array<i32>} : memref<2x128xf32, #tpu.memory_space<vmem>>, vector<2x128xf32>,
    %c0_30 = arith.constant 0 : index
    %c0_31 = arith.constant 0 : index
    %80 = vector.load %arg10[%c0_30, %c0_31] : memref<2x128xf32, #tpu.memory_space<vmem>>, vector<2x128xf32>
    tpu.vector_store %arg10[%c0_30, %c0_31], %78 {strides = array<i32>} : memref<2x128xf32, #tpu.memory_space<vmem>>, vector<2x128xf32>,
    %c0_32 = arith.constant 0 : index
    %c0_33 = arith.constant 0 : index
    %81 = vector.load %arg8[%c0_32, %c0_33] : memref<2x128xf32, #tpu.memory_space<vmem>>, vector<2x128xf32>
    tpu.vector_store %arg8[%c0_32, %c0_33], %45 {strides = array<i32>} : memref<2x128xf32, #tpu.memory_space<vmem>>, vector<2x128xf32>,
    return
  }
  func.func @transform_0(%arg0: i32) -> (i32, i32, i32) {
    %c0_i32 = arith.constant 0 : i32
    %c0_i32_0 = arith.constant 0 : i32
    %c0_i32_1 = arith.constant 0 : i32
    return %arg0, %c0_i32, %c0_i32_0 : i32, i32, i32
  }
  func.func @transform_1(%arg0: i32) -> (i32, i32) {
    %c0_i32 = arith.constant 0 : i32
    %c0_i32_0 = arith.constant 0 : i32
    %c0_i32_1 = arith.constant 0 : i32
    return %c0_i32, %c0_i32_0 : i32, i32
  }
  func.func @transform_2(%arg0: i32) -> (i32, i32) {
    %c0_i32 = arith.constant 0 : i32
    %c0_i32_0 = arith.constant 0 : i32
    %c0_i32_1 = arith.constant 0 : i32
    return %c0_i32, %c0_i32_0 : i32, i32
  }
  func.func @transform_3(%arg0: i32) -> (i32, i32) {
    %c0_i32 = arith.constant 0 : i32
    %c0_i32_0 = arith.constant 0 : i32
    %c0_i32_1 = arith.constant 0 : i32
    return %c0_i32, %c0_i32_0 : i32, i32
  }
  func.func @transform_4(%arg0: i32) -> (i32, i32) {
    %c0_i32 = arith.constant 0 : i32
    %c0_i32_0 = arith.constant 0 : i32
    %c0_i32_1 = arith.constant 0 : i32
    return %c0_i32, %c0_i32_0 : i32, i32
  }
  func.func @transform_5(%arg0: i32) -> (i32, i32, i32) {
    %c0_i32 = arith.constant 0 : i32
    %c0_i32_0 = arith.constant 0 : i32
    %c0_i32_1 = arith.constant 0 : i32
    return %arg0, %c0_i32, %c0_i32_0 : i32, i32, i32
  }
  func.func @transform_6(%arg0: i32) -> (i32, i32, i32) {
    %c0_i32 = arith.constant 0 : i32
    %c0_i32_0 = arith.constant 0 : i32
    %c0_i32_1 = arith.constant 0 : i32
    return %arg0, %c0_i32, %c0_i32_0 : i32, i32, i32
  }
  func.func @transform_7(%arg0: i32) -> (i32, i32) {
    %c0_i32 = arith.constant 0 : i32
    %c0_i32_0 = arith.constant 0 : i32
    %c0_i32_1 = arith.constant 0 : i32
    return %c0_i32, %c0_i32_0 : i32, i32
  }
}

module attributes {stable_mosaic.version = 11 : i64} {
  func.func @_encoder_mlp_kernel(%arg0: memref<16x269xf32, #tpu.memory_space<vmem>>, %arg1: memref<269x269xbf16, #tpu.memory_space<vmem>>, %arg2: memref<1x269xf32, #tpu.memory_space<vmem>>, %arg3: memref<269x64xbf16, #tpu.memory_space<vmem>>, %arg4: memref<1x64xf32, #tpu.memory_space<vmem>>, %arg5: memref<64x64xbf16, #tpu.memory_space<vmem>>, %arg6: memref<1x64xf32, #tpu.memory_space<vmem>>, %arg7: memref<64x40xbf16, #tpu.memory_space<vmem>>, %arg8: memref<1x40xf32, #tpu.memory_space<vmem>>, %arg9: memref<16x40xf32, #tpu.memory_space<vmem>>) attributes {dimension_semantics = [], scalar_prefetch = 0 : i64, scratch_operands = 0 : i64, tpu.core_type = #tpu.core_type<tc>} {
    %c0 = arith.constant 0 : index
    %c0_0 = arith.constant 0 : index
    %0 = vector.load %arg0[%c0, %c0_0] : memref<16x269xf32, #tpu.memory_space<vmem>>, vector<16x269xf32>
    %cst = arith.constant 0.000000e+00 : f32
    %1 = vector.broadcast %cst : f32 to vector<16x269xf32>
    %2 = arith.maximumf %0, %1 : vector<16x269xf32>
    %3 = arith.truncf %2 : vector<16x269xf32> to vector<16x269xbf16>
    %c0_1 = arith.constant 0 : index
    %c0_2 = arith.constant 0 : index
    %4 = vector.load %arg1[%c0_1, %c0_2] : memref<269x269xbf16, #tpu.memory_space<vmem>>, vector<269x269xbf16>
    %cst_3 = arith.constant dense<0.000000e+00> : vector<16x269xf32>
    %5 = tpu.matmul %3, %4, %cst_3 {dimension_numbers = #tpu.dot_dimension_numbers<[1], [0], [0], [1], [0, 0, 1, 1], [], []>} : vector<16x269xbf16>, vector<269x269xbf16>, vector<16x269xf32> -> vector<16x269xf32>
    %c0_4 = arith.constant 0 : index
    %c0_5 = arith.constant 0 : index
    %6 = vector.load %arg2[%c0_4, %c0_5] : memref<1x269xf32, #tpu.memory_space<vmem>>, vector<1x269xf32>
    %7 = vector.broadcast %6 : vector<1x269xf32> to vector<16x269xf32>
    %8 = arith.addf %5, %7 : vector<16x269xf32>
    %cst_6 = arith.constant 0.000000e+00 : f32
    %9 = vector.broadcast %cst_6 : f32 to vector<16x269xf32>
    %10 = arith.maximumf %8, %9 : vector<16x269xf32>
    %11 = arith.truncf %10 : vector<16x269xf32> to vector<16x269xbf16>
    %c0_7 = arith.constant 0 : index
    %c0_8 = arith.constant 0 : index
    %12 = vector.load %arg3[%c0_7, %c0_8] : memref<269x64xbf16, #tpu.memory_space<vmem>>, vector<269x64xbf16>
    %cst_9 = arith.constant dense<0.000000e+00> : vector<16x64xf32>
    %13 = tpu.matmul %11, %12, %cst_9 {dimension_numbers = #tpu.dot_dimension_numbers<[1], [0], [0], [1], [0, 0, 1, 1], [], []>} : vector<16x269xbf16>, vector<269x64xbf16>, vector<16x64xf32> -> vector<16x64xf32>
    %c0_10 = arith.constant 0 : index
    %c0_11 = arith.constant 0 : index
    %14 = vector.load %arg4[%c0_10, %c0_11] : memref<1x64xf32, #tpu.memory_space<vmem>>, vector<1x64xf32>
    %15 = vector.broadcast %14 : vector<1x64xf32> to vector<16x64xf32>
    %16 = arith.addf %13, %15 : vector<16x64xf32>
    %cst_12 = arith.constant 0.000000e+00 : f32
    %17 = vector.broadcast %cst_12 : f32 to vector<16x64xf32>
    %18 = arith.maximumf %16, %17 : vector<16x64xf32>
    %19 = arith.truncf %18 : vector<16x64xf32> to vector<16x64xbf16>
    %c0_13 = arith.constant 0 : index
    %c0_14 = arith.constant 0 : index
    %20 = vector.load %arg5[%c0_13, %c0_14] : memref<64x64xbf16, #tpu.memory_space<vmem>>, vector<64x64xbf16>
    %cst_15 = arith.constant dense<0.000000e+00> : vector<16x64xf32>
    %21 = tpu.matmul %19, %20, %cst_15 {dimension_numbers = #tpu.dot_dimension_numbers<[1], [0], [0], [1], [0, 0, 1, 1], [], []>} : vector<16x64xbf16>, vector<64x64xbf16>, vector<16x64xf32> -> vector<16x64xf32>
    %c0_16 = arith.constant 0 : index
    %c0_17 = arith.constant 0 : index
    %22 = vector.load %arg6[%c0_16, %c0_17] : memref<1x64xf32, #tpu.memory_space<vmem>>, vector<1x64xf32>
    %23 = vector.broadcast %22 : vector<1x64xf32> to vector<16x64xf32>
    %24 = arith.addf %21, %23 : vector<16x64xf32>
    %cst_18 = arith.constant 0.000000e+00 : f32
    %25 = vector.broadcast %cst_18 : f32 to vector<16x64xf32>
    %26 = arith.maximumf %24, %25 : vector<16x64xf32>
    %27 = arith.truncf %26 : vector<16x64xf32> to vector<16x64xbf16>
    %c0_19 = arith.constant 0 : index
    %c0_20 = arith.constant 0 : index
    %28 = vector.load %arg7[%c0_19, %c0_20] : memref<64x40xbf16, #tpu.memory_space<vmem>>, vector<64x40xbf16>
    %cst_21 = arith.constant dense<0.000000e+00> : vector<16x40xf32>
    %29 = tpu.matmul %27, %28, %cst_21 {dimension_numbers = #tpu.dot_dimension_numbers<[1], [0], [0], [1], [0, 0, 1, 1], [], []>} : vector<16x64xbf16>, vector<64x40xbf16>, vector<16x40xf32> -> vector<16x40xf32>
    %c0_22 = arith.constant 0 : index
    %c0_23 = arith.constant 0 : index
    %30 = vector.load %arg8[%c0_22, %c0_23] : memref<1x40xf32, #tpu.memory_space<vmem>>, vector<1x40xf32>
    %31 = vector.broadcast %30 : vector<1x40xf32> to vector<16x40xf32>
    %32 = arith.addf %29, %31 : vector<16x40xf32>
    %c0_24 = arith.constant 0 : index
    %c0_25 = arith.constant 0 : index
    %33 = vector.load %arg9[%c0_24, %c0_25] : memref<16x40xf32, #tpu.memory_space<vmem>>, vector<16x40xf32>
    tpu.vector_store %arg9[%c0_24, %c0_25], %32 {strides = array<i32>} : memref<16x40xf32, #tpu.memory_space<vmem>>, vector<16x40xf32>,
    return
  }
}

module attributes {stable_mosaic.version = 11 : i64} {
  func.func @_gen_mlp_kernel(%arg0: memref<16x153xf32, #tpu.memory_space<vmem>>, %arg1: memref<153x256xbf16, #tpu.memory_space<vmem>>, %arg2: memref<1x256xf32, #tpu.memory_space<vmem>>, %arg3: memref<256x64xbf16, #tpu.memory_space<vmem>>, %arg4: memref<1x64xf32, #tpu.memory_space<vmem>>, %arg5: memref<16x64xf32, #tpu.memory_space<vmem>>) attributes {dimension_semantics = [], scalar_prefetch = 0 : i64, scratch_operands = 0 : i64, tpu.core_type = #tpu.core_type<tc>} {
    %c0 = arith.constant 0 : index
    %c0_0 = arith.constant 0 : index
    %0 = vector.load %arg0[%c0, %c0_0] : memref<16x153xf32, #tpu.memory_space<vmem>>, vector<16x153xf32>
    %cst = arith.constant 0.000000e+00 : f32
    %1 = vector.broadcast %cst : f32 to vector<16x153xf32>
    %2 = arith.maximumf %0, %1 : vector<16x153xf32>
    %3 = arith.truncf %2 : vector<16x153xf32> to vector<16x153xbf16>
    %c0_1 = arith.constant 0 : index
    %c0_2 = arith.constant 0 : index
    %4 = vector.load %arg1[%c0_1, %c0_2] : memref<153x256xbf16, #tpu.memory_space<vmem>>, vector<153x256xbf16>
    %cst_3 = arith.constant dense<0.000000e+00> : vector<16x256xf32>
    %5 = tpu.matmul %3, %4, %cst_3 {dimension_numbers = #tpu.dot_dimension_numbers<[1], [0], [0], [1], [0, 0, 1, 1], [], []>} : vector<16x153xbf16>, vector<153x256xbf16>, vector<16x256xf32> -> vector<16x256xf32>
    %c0_4 = arith.constant 0 : index
    %c0_5 = arith.constant 0 : index
    %6 = vector.load %arg2[%c0_4, %c0_5] : memref<1x256xf32, #tpu.memory_space<vmem>>, vector<1x256xf32>
    %7 = vector.broadcast %6 : vector<1x256xf32> to vector<16x256xf32>
    %8 = arith.addf %5, %7 : vector<16x256xf32>
    %cst_6 = arith.constant 0.000000e+00 : f32
    %9 = vector.broadcast %cst_6 : f32 to vector<16x256xf32>
    %10 = arith.maximumf %8, %9 : vector<16x256xf32>
    %11 = arith.truncf %10 : vector<16x256xf32> to vector<16x256xbf16>
    %c0_7 = arith.constant 0 : index
    %c0_8 = arith.constant 0 : index
    %12 = vector.load %arg3[%c0_7, %c0_8] : memref<256x64xbf16, #tpu.memory_space<vmem>>, vector<256x64xbf16>
    %cst_9 = arith.constant dense<0.000000e+00> : vector<16x64xf32>
    %13 = tpu.matmul %11, %12, %cst_9 {dimension_numbers = #tpu.dot_dimension_numbers<[1], [0], [0], [1], [0, 0, 1, 1], [], []>} : vector<16x256xbf16>, vector<256x64xbf16>, vector<16x64xf32> -> vector<16x64xf32>
    %c0_10 = arith.constant 0 : index
    %c0_11 = arith.constant 0 : index
    %14 = vector.load %arg4[%c0_10, %c0_11] : memref<1x64xf32, #tpu.memory_space<vmem>>, vector<1x64xf32>
    %15 = vector.broadcast %14 : vector<1x64xf32> to vector<16x64xf32>
    %16 = arith.addf %13, %15 : vector<16x64xf32>
    %c0_12 = arith.constant 0 : index
    %c0_13 = arith.constant 0 : index
    %17 = vector.load %arg5[%c0_12, %c0_13] : memref<16x64xf32, #tpu.memory_space<vmem>>, vector<16x64xf32>
    tpu.vector_store %arg5[%c0_12, %c0_13], %16 {strides = array<i32>} : memref<16x64xf32, #tpu.memory_space<vmem>>, vector<16x64xf32>,
    return
  }
}

</mosaic_0001>

<llo_original>
// kernel: model1_forward.6
$region0: #{model1_forward.6}
  #allocation0 [shape = 'u32[]', space=smem, size = 0x4, offset = 0x4, fixed_abs, tag = 'smem constant byte address 0x4 - core index']
  #allocation1 [shape = 'u32[144,128]{1,0:T(1,128)}', space=vmem, size = 0x12000, scoped, tag = 'internal scratch']
  %s0 = inlined_call_operand.vmem [shape: f32[16,33], index: 0, kind: input, shape index: {}]
  %s1 = inlined_call_operand.vmem [shape: bf16[33,136], index: 1, kind: input, shape index: {}]
  %s2 = inlined_call_operand.vmem [shape: f32[1,136], index: 2, kind: input, shape index: {}]
  %s3 = inlined_call_operand.hbm [shape: bf16[136,768], index: 3, kind: input, shape index: {}]
  %s4 = inlined_call_operand.vmem [shape: f32[1,768], index: 4, kind: input, shape index: {}]
  %s5 = inlined_call_operand.vmem [shape: f32[16,136], index: 5, kind: output, shape index: {0}]
  %s6 = inlined_call_operand.vmem [shape: f32[16,768], index: 6, kind: output, shape index: {1}]
  %7 = xla_tuple %s5, %s6
  %s8 = sld [smem:[#allocation0]]
  $region42: #{model1_forward.6} parent=0
    _
  %s10 = ssub.s32 1, %s8
  %s11 = scalar_select 0, %s10, %s8
  $region1: #{model1_forward.6} parent=0
    #allocation2 [shape = 'u8[208896]{0}', space=vmem, size = 0x33000, scoped, tag = 'input window, operand 3, single buffered']
    #allocation3 [shape = 's32[1]{0}', space=sflag, size = 0x4, scoped, tag = 'scoped memory for model1_forward.6']
    %12 = vsyncpa [#allocation3], 0
    // Predicated region
    $region2: #{model1_forward.6} parent=1 // pred_check
      _
    $region3: #{model1_forward.6} parent=1 // pred_check_branch
      %14 = sbr.rel (0) target = $region5
    $region4: #{model1_forward.6} parent=1 // pred_region
      _
    $region5: #{model1_forward.6} parent=1 // pred_fallthru
      _
    // Predicated region
    $region6: #{model1_forward.6} parent=1 // pred_check
      _
    $region7: #{model1_forward.6} parent=1 // pred_check_branch
      %16 = sbr.rel (0) target = $region9
    $region8: #{model1_forward.6} parent=1 // pred_region
      _
    $region9: #{model1_forward.6} parent=1 // pred_fallthru
      _
    // Predicated region
    $region10: #{model1_forward.6} parent=1 // pred_check
      _
    $region11: #{model1_forward.6} parent=1 // pred_check_branch
      %18 = sbr.rel (0) target = $region13
    $region12: #{model1_forward.6} parent=1 // pred_region
      _
    $region13: #{model1_forward.6} parent=1 // pred_fallthru
      _
    // Predicated region
    $region14: #{model1_forward.6} parent=1 // pred_check
      _
    $region15: #{model1_forward.6} parent=1 // pred_check_branch
      %20 = sbr.rel (0) target = $region17
    $region16: #{model1_forward.6} parent=1 // pred_region
      %s22 = ssub.s32 6528, 6528
      %23 = vsyncadd [#allocation3], %s22
      %s24 = sshll.u32 [#allocation2], 4
      %s25 = int_to_ptr.vmem [resolvable:$true] %s24
      %30 = dma.hbm_to_vmem [thread:$0]  %s3, 6528, %s25, [#allocation3], 384, 384, 24
    $region17: #{model1_forward.6} parent=1 // pred_fallthru
      _
    // Predicated region
    $region18: #{model1_forward.6} parent=1 // pred_check
      _
    $region19: #{model1_forward.6} parent=1 // pred_check_branch
      %32 = sbr.rel (0) target = $region21
    $region20: #{model1_forward.6} parent=1 // pred_region
      _
    $region21: #{model1_forward.6} parent=1 // pred_fallthru
      _
    // Predicated region
    $region22: #{model1_forward.6} parent=1 // pred_check
      _
    $region23: #{model1_forward.6} parent=1 // pred_check_branch
      %34 = sbr.rel (0) target = $region25
    $region24: #{model1_forward.6} parent=1 // pred_region
      %35 = dma.done [#allocation3], 6528
    $region25: #{model1_forward.6} parent=1 // pred_fallthru
      _
    %v37 = vld [vmem:[%s0] sm:$0xff]
    %v38 = vld [vmem:[%s0 + $0x8] sm:$0xff]
    %v39 = vpack.c.bf16 %v38, %v37
    %v40 = vld [vmem:[%s1] sm:$0xff]
    %v41 = vld [vmem:[%s1 + $0x8] sm:$0xff]
    %v42 = vld [vmem:[%s1 + $0x10] sm:$0xff]
    %v43 = vld [vmem:[%s1 + $0x18] sm:$0xff]
    %v44 = vld [vmem:[%s1 + $0x20] sm:$0x11]
    %v45 = vld [vmem:[%s2] sm:$0x3]
    %v47 = vlaneseq
    %v48 = vshrl.u32 %v47, 7
    %v49 = vsub.s32 0, %v48
    %v50 = vrot.slane %v45, %v49
    %v51 = vlaneseq
    %v52 = vshrl.u32 %v51, 7
    %v53 = vsub.s32 1, %v52
    %v54 = vrot.slane %v45, %v53
    %v62 = vunpack.c.l.b16 %v40
    %v63 = vunpack.c.h.b16 %v40
    %v64 = vunpack.c.l.b16 %v41
    %v65 = vunpack.c.h.b16 %v41
    %v66 = vunpack.c.l.b16 %v42
    %v67 = vunpack.c.h.b16 %v42
    %v68 = vunpack.c.l.b16 %v43
    %v69 = vunpack.c.h.b16 %v43
    %v70 = vunpack.c.l.b16 %v44
    %v71 = vunpack.c.h.b16 %v44
    %v72 = vpack.c.b16 %v64, %v62
    %v73 = vpack.c.b16 %v65, %v63
    %v74 = vpack.c.b16 %v68, %v66
    %v75 = vpack.c.b16 %v69, %v67
    %v76 = vpack.c.b16 %v70, %v70
    %v77 = vpack.c.b16 %v71, %v71
    %vm82 = vcmask 269312
    %v84 = vsel %vm82, %v39, 0
    %vm86 = vcmask 1040384
    %v87 = vsel 0, 4294967295, 65535
    %v88 = vsel %vm86, %v87, 0
    %v90 = vand.u32 %v76, %v88
    %v93 = vand.u32 %v77, %v88
    %95 = vmatprep.subr.bf16.mxu0 0
    %96 = vmatpush1.bf16.msra.mxu0 0
    %97 = vmatprep.subr.bf16.mxu0 0
    %98 = vmatpush1.bf16.msra.mxu0 0
    %99 = vmatprep.subr.bf16.mxu0 0
    %100 = vmatpush1.bf16.msra.mxu0 0
    %101 = vmatprep.subr.bf16.mxu0 0
    %102 = vmatpush1.bf16.msra.mxu0 0
    %103 = vmatprep.subr.bf16.mxu0 0
    %104 = vmatpush1.bf16.msra.mxu0 0
    %105 = vmatprep.subr.bf16.mxu0 %v93
    %106 = vmatpush1.bf16.msra.mxu0 %v90
    %107 = vmatprep.subr.bf16.mxu0 %v75
    %108 = vmatpush1.bf16.msra.mxu0 %v74
    %109 = vmatprep.subr.bf16.mxu0 %v73
    %110 = vmatpush1.bf16.msra.mxu0 %v72
    %111 = vmatprep.subr.bf16.mxu0 0
    %112 = vmatpush2.bf16.msra.mxu0 0
    %113 = vmatprep.subr.bf16.mxu0 0
    %114 = vmatpush2.bf16.msra.mxu0 0
    %115 = vmatprep.subr.bf16.mxu0 0
    %116 = vmatpush2.bf16.msra.mxu0 0
    %117 = vmatprep.subr.bf16.mxu0 0
    %118 = vmatpush2.bf16.msra.mxu0 0
    %119 = vmatprep.subr.bf16.mxu0 0
    %120 = vmatpush2.bf16.msra.mxu0 0
    %121 = vmatprep.subr.bf16.mxu0 0
    %122 = vmatpush2.bf16.msra.mxu0 0
    %123 = vmatprep.subr.bf16.mxu0 0
    %124 = vmatpush2.bf16.msra.mxu0 0
    %125 = vmatprep.subr.bf16.mxu0 0
    %126 = vmatpush2.bf16.msra.mxu0 0
    %127 = vmatprep.mubr.bf16.mxu0 0
    %128 = vmatmul.mubr.bf16.gmra.mxu0 %v84
    %v129 = vpop.f32.mrf.mxu0
    %v130 = vadd.f32 %v50, %v129
    %v131 = vpop.f32.mrf.mxu0
    %v132 = vadd.f32 %v54, %v131
    %v133 = vpop.f32.mrf.mxu0
    %v134 = vadd.f32 %v50, %v133
    %v135 = vpop.f32.mrf.mxu0
    %v136 = vadd.f32 %v54, %v135
    %137 = vdwg.mxu0
    %v138 = vmax.f32 %v130, 0.0
    %v139 = vmax.f32 %v132, 0.0
    %v140 = vmax.f32 %v134, 0.0
    %v141 = vmax.f32 %v136, 0.0
    %142 = vst [vmem:[%s5] sm:$0xff] %v138
    %vm143 = vcmask 64512
    %144 = vst.msk [vmem:[%s5 + $0x8] sm:$0xff] %vm143, %v139
    %145 = vst [vmem:[%s5 + $0x10] sm:$0xff] %v140
    %146 = vst.msk [vmem:[%s5 + $0x18] sm:$0xff] %vm143, %v141
    %v147 = vpack.c.bf16 %v140, %v138
    %v148 = vpack.c.bf16 %v141, %v139
    %v149 = vld [vmem:[#allocation2] sm:$0xff]
    %v150 = vld [vmem:[#allocation2 + $0x8] sm:$0xff]
    %v151 = vld [vmem:[#allocation2 + $0x10] sm:$0xff]
    %v152 = vld [vmem:[#allocation2 + $0x18] sm:$0xff]
    %v153 = vld [vmem:[#allocation2 + $0x20] sm:$0xff]
    %v154 = vld [vmem:[#allocation2 + $0x28] sm:$0xff]
    %v155 = vld [vmem:[#allocation2 + $0x30] sm:$0xff]
    %v156 = vld [vmem:[#allocation2 + $0x38] sm:$0xff]
    %v157 = vld [vmem:[#allocation2 + $0x40] sm:$0xff]
    %v158 = vld [vmem:[#allocation2 + $0x48] sm:$0xff]
    %v159 = vld [vmem:[#allocation2 + $0x50] sm:$0xff]
    %v160 = vld [vmem:[#allocation2 + $0x58] sm:$0xff]
    %v161 = vld [vmem:[#allocation2 + $0x60] sm:$0xff]
    %v162 = vld [vmem:[#allocation2 + $0x68] sm:$0xff]
    %v163 = vld [vmem:[#allocation2 + $0x70] sm:$0xff]
    %v164 = vld [vmem:[#allocation2 + $0x78] sm:$0xff]
    %v165 = vld [vmem:[#allocation2 + $0x80] sm:$0xff]
    %v166 = vld [vmem:[#allocation2 + $0x88] sm:$0xff]
    %v167 = vld [vmem:[#allocation2 + $0x90] sm:$0xff]
    %v168 = vld [vmem:[#allocation2 + $0x98] sm:$0xff]
    %v169 = vld [vmem:[#allocation2 + $0xa0] sm:$0xff]
    %v170 = vld [vmem:[#allocation2 + $0xa8] sm:$0xff]
    %v171 = vld [vmem:[#allocation2 + $0xb0] sm:$0xff]
    %v172 = vld [vmem:[#allocation2 + $0xb8] sm:$0xff]
    %v173 = vld [vmem:[#allocation2 + $0xc0] sm:$0xff]
    %v174 = vld [vmem:[#allocation2 + $0xc8] sm:$0xff]
    %v175 = vld [vmem:[#allocation2 + $0xd0] sm:$0xff]
    %v176 = vld [vmem:[#allocation2 + $0xd8] sm:$0xff]
    %v177 = vld [vmem:[#allocation2 + $0xe0] sm:$0xff]
    %v178 = vld [vmem:[#allocation2 + $0xe8] sm:$0xff]
    %v179 = vld [vmem:[#allocation2 + $0xf0] sm:$0xff]
    %v180 = vld [vmem:[#allocation2 + $0xf8] sm:$0xff]
    %v181 = vld [vmem:[#allocation2 + $0x100] sm:$0xff]
    %v182 = vld [vmem:[#allocation2 + $0x108] sm:$0xff]
    %v183 = vld [vmem:[#allocation2 + $0x110] sm:$0xff]
    %v184 = vld [vmem:[#allocation2 + $0x118] sm:$0xff]
    %v185 = vld [vmem:[#allocation2 + $0x120] sm:$0xff]
    %v186 = vld [vmem:[#allocation2 + $0x128] sm:$0xff]
    %v187 = vld [vmem:[#allocation2 + $0x130] sm:$0xff]
    %v188 = vld [vmem:[#allocation2 + $0x138] sm:$0xff]
    %v189 = vld [vmem:[#allocation2 + $0x140] sm:$0xff]
    %v190 = vld [vmem:[#allocation2 + $0x148] sm:$0xff]
    %v191 = vld [vmem:[#allocation2 + $0x150] sm:$0xff]
    %v192 = vld [vmem:[#allocation2 + $0x158] sm:$0xff]
    %v193 = vld [vmem:[#allocation2 + $0x160] sm:$0xff]
    %v194 = vld [vmem:[#allocation2 + $0x168] sm:$0xff]
    %v195 = vld [vmem:[#allocation2 + $0x170] sm:$0xff]
    %v196 = vld [vmem:[#allocation2 + $0x178] sm:$0xff]
    %v197 = vld [vmem:[#allocation2 + $0x180] sm:$0xff]
    %v198 = vld [vmem:[#allocation2 + $0x188] sm:$0xff]
    %v199 = vld [vmem:[#allocation2 + $0x190] sm:$0xff]
    %v200 = vld [vmem:[%s4] sm:$0x3f]
    %v202 = vlaneseq
    %v203 = vshrl.u32 %v202, 7
    %v204 = vsub.s32 0, %v203
    %v205 = vrot.slane %v200, %v204
    %v206 = vlaneseq
    %v207 = vshrl.u32 %v206, 7
    %v208 = vsub.s32 1, %v207
    %v209 = vrot.slane %v200, %v208
    %v210 = vlaneseq
    %v211 = vshrl.u32 %v210, 7
    %v212 = vsub.s32 2, %v211
    %v213 = vrot.slane %v200, %v212
    %v214 = vlaneseq
    %v215 = vshrl.u32 %v214, 7
    %v216 = vsub.s32 3, %v215
    %v217 = vrot.slane %v200, %v216
    %v218 = vlaneseq
    %v219 = vshrl.u32 %v218, 7
    %v220 = vsub.s32 4, %v219
    %v221 = vrot.slane %v200, %v220
    %v222 = vlaneseq
    %v223 = vshrl.u32 %v222, 7
    %v224 = vsub.s32 5, %v223
    %v225 = vrot.slane %v200, %v224
    %v283 = vunpack.c.l.b16 %v149
    %v284 = vunpack.c.h.b16 %v149
    %v285 = vunpack.c.l.b16 %v150
    %v286 = vunpack.c.h.b16 %v150
    %v287 = vunpack.c.l.b16 %v151
    %v288 = vunpack.c.h.b16 %v151
    %v289 = vunpack.c.l.b16 %v152
    %v290 = vunpack.c.h.b16 %v152
    %v291 = vunpack.c.l.b16 %v153
    %v292 = vunpack.c.h.b16 %v153
    %v293 = vunpack.c.l.b16 %v154
    %v294 = vunpack.c.h.b16 %v154
    %v295 = vunpack.c.l.b16 %v155
    %v296 = vunpack.c.h.b16 %v155
    %v297 = vunpack.c.l.b16 %v156
    %v298 = vunpack.c.h.b16 %v156
    %v299 = vunpack.c.l.b16 %v157
    %v300 = vunpack.c.h.b16 %v157
    %v301 = vunpack.c.l.b16 %v158
    %v302 = vunpack.c.h.b16 %v158
    %v303 = vunpack.c.l.b16 %v159
    %v304 = vunpack.c.h.b16 %v159
    %v305 = vunpack.c.l.b16 %v160
    %v306 = vunpack.c.h.b16 %v160
    %v307 = vunpack.c.l.b16 %v161
    %v308 = vunpack.c.h.b16 %v161
    %v309 = vunpack.c.l.b16 %v162
    %v310 = vunpack.c.h.b16 %v162
    %v311 = vunpack.c.l.b16 %v163
    %v312 = vunpack.c.h.b16 %v163
    %v313 = vunpack.c.l.b16 %v164
    %v314 = vunpack.c.h.b16 %v164
    %v315 = vunpack.c.l.b16 %v165
    %v316 = vunpack.c.h.b16 %v165
    %v317 = vunpack.c.l.b16 %v166
    %v318 = vunpack.c.h.b16 %v166
    %v319 = vunpack.c.l.b16 %v167
    %v320 = vunpack.c.h.b16 %v167
    %v321 = vunpack.c.l.b16 %v168
    %v322 = vunpack.c.h.b16 %v168
    %v323 = vunpack.c.l.b16 %v169
    %v324 = vunpack.c.h.b16 %v169
    %v325 = vunpack.c.l.b16 %v170
    %v326 = vunpack.c.h.b16 %v170
    %v327 = vunpack.c.l.b16 %v171
    %v328 = vunpack.c.h.b16 %v171
    %v329 = vunpack.c.l.b16 %v172
    %v330 = vunpack.c.h.b16 %v172
    %v331 = vunpack.c.l.b16 %v173
    %v332 = vunpack.c.h.b16 %v173
    %v333 = vunpack.c.l.b16 %v174
    %v334 = vunpack.c.h.b16 %v174
    %v335 = vunpack.c.l.b16 %v175
    %v336 = vunpack.c.h.b16 %v175
    %v337 = vunpack.c.l.b16 %v176
    %v338 = vunpack.c.h.b16 %v176
    %v339 = vunpack.c.l.b16 %v177
    %v340 = vunpack.c.h.b16 %v177
    %v341 = vunpack.c.l.b16 %v178
    %v342 = vunpack.c.h.b16 %v178
    %v343 = vunpack.c.l.b16 %v179
    %v344 = vunpack.c.h.b16 %v179
    %v345 = vunpack.c.l.b16 %v180
    %v346 = vunpack.c.h.b16 %v180
    %v347 = vunpack.c.l.b16 %v181
    %v348 = vunpack.c.h.b16 %v181
    %v349 = vunpack.c.l.b16 %v182
    %v350 = vunpack.c.h.b16 %v182
    %v351 = vunpack.c.l.b16 %v183
    %v352 = vunpack.c.h.b16 %v183
    %v353 = vunpack.c.l.b16 %v184
    %v354 = vunpack.c.h.b16 %v184
    %v355 = vunpack.c.l.b16 %v185
    %v356 = vunpack.c.h.b16 %v185
    %v357 = vunpack.c.l.b16 %v186
    %v358 = vunpack.c.h.b16 %v186
    %v359 = vunpack.c.l.b16 %v187
    %v360 = vunpack.c.h.b16 %v187
    %v361 = vunpack.c.l.b16 %v188
    %v362 = vunpack.c.h.b16 %v188
    %v363 = vunpack.c.l.b16 %v189
    %v364 = vunpack.c.h.b16 %v189
    %v365 = vunpack.c.l.b16 %v190
    %v366 = vunpack.c.h.b16 %v190
    %v367 = vunpack.c.l.b16 %v191
    %v368 = vunpack.c.h.b16 %v191
    %v369 = vunpack.c.l.b16 %v192
    %v370 = vunpack.c.h.b16 %v192
    %v371 = vunpack.c.l.b16 %v193
    %v372 = vunpack.c.h.b16 %v193
    %v373 = vunpack.c.l.b16 %v194
    %v374 = vunpack.c.h.b16 %v194
    %v375 = vunpack.c.l.b16 %v195
    %v376 = vunpack.c.h.b16 %v195
    %v377 = vunpack.c.l.b16 %v196
    %v378 = vunpack.c.h.b16 %v196
    %v379 = vunpack.c.l.b16 %v197
    %v380 = vunpack.c.h.b16 %v197
    %v381 = vunpack.c.l.b16 %v198
    %v382 = vunpack.c.h.b16 %v198
    %v383 = vunpack.c.l.b16 %v199
    %v384 = vunpack.c.h.b16 %v199
    %v385 = vpack.c.b16 %v289, %v283
    %v386 = vpack.c.b16 %v290, %v284
    %v387 = vpack.c.b16 %v291, %v285
    %v388 = vpack.c.b16 %v292, %v286
    %v389 = vpack.c.b16 %v293, %v287
    %v390 = vpack.c.b16 %v294, %v288
    %v391 = vpack.c.b16 %v301, %v295
    %v392 = vpack.c.b16 %v302, %v296
    %v393 = vpack.c.b16 %v303, %v297
    %v394 = vpack.c.b16 %v304, %v298
    %v395 = vpack.c.b16 %v305, %v299
    %v396 = vpack.c.b16 %v306, %v300
    %v397 = vpack.c.b16 %v313, %v307
    %v398 = vpack.c.b16 %v314, %v308
    %v399 = vpack.c.b16 %v315, %v309
    %v400 = vpack.c.b16 %v316, %v310
    %v401 = vpack.c.b16 %v317, %v311
    %v402 = vpack.c.b16 %v318, %v312
    %v403 = vpack.c.b16 %v325, %v319
    %v404 = vpack.c.b16 %v326, %v320
    %v405 = vpack.c.b16 %v327, %v321
    %v406 = vpack.c.b16 %v328, %v322
    %v407 = vpack.c.b16 %v329, %v323
    %v408 = vpack.c.b16 %v330, %v324
    %v409 = vpack.c.b16 %v337, %v331
    %v410 = vpack.c.b16 %v338, %v332
    %v411 = vpack.c.b16 %v339, %v333
    %v412 = vpack.c.b16 %v340, %v334
    %v413 = vpack.c.b16 %v341, %v335
    %v414 = vpack.c.b16 %v342, %v336
    %v415 = vpack.c.b16 %v349, %v343
    %v416 = vpack.c.b16 %v350, %v344
    %v417 = vpack.c.b16 %v351, %v345
    %v418 = vpack.c.b16 %v352, %v346
    %v419 = vpack.c.b16 %v353, %v347
    %v420 = vpack.c.b16 %v354, %v348
    %v421 = vpack.c.b16 %v361, %v355
    %v422 = vpack.c.b16 %v362, %v356
    %v423 = vpack.c.b16 %v363, %v357
    %v424 = vpack.c.b16 %v364, %v358
    %v425 = vpack.c.b16 %v365, %v359
    %v426 = vpack.c.b16 %v366, %v360
    %v427 = vpack.c.b16 %v373, %v367
    %v428 = vpack.c.b16 %v374, %v368
    %v429 = vpack.c.b16 %v375, %v369
    %v430 = vpack.c.b16 %v376, %v370
    %v431 = vpack.c.b16 %v377, %v371
    %v432 = vpack.c.b16 %v378, %v372
    %v433 = vpack.c.b16 %v379, %v379
    %v434 = vpack.c.b16 %v380, %v380
    %v435 = vpack.c.b16 %v381, %v381
    %v436 = vpack.c.b16 %v382, %v382
    %v437 = vpack.c.b16 %v383, %v383
    %v438 = vpack.c.b16 %v384, %v384
    %v488 = vsel %vm143, %v148, 0
    %vm490 = vcmask 1043456
    %v492 = vsel %vm490, %v433, 0
    %v495 = vsel %vm490, %v434, 0
    %v498 = vsel %vm490, %v435, 0
    %v501 = vsel %vm490, %v436, 0
    %v504 = vsel %vm490, %v437, 0
    %v507 = vsel %vm490, %v438, 0
    %509 = vmatprep.subr.bf16.mxu0 %v428
    %510 = vmatpush1.bf16.msra.mxu0 %v427
    %511 = vmatprep.subr.bf16.mxu0 %v422
    %512 = vmatpush1.bf16.msra.mxu0 %v421
    %513 = vmatprep.subr.bf16.mxu0 %v416
    %514 = vmatpush1.bf16.msra.mxu0 %v415
    %515 = vmatprep.subr.bf16.mxu0 %v410
    %516 = vmatpush1.bf16.msra.mxu0 %v409
    %517 = vmatprep.subr.bf16.mxu0 %v404
    %518 = vmatpush1.bf16.msra.mxu0 %v403
    %519 = vmatprep.subr.bf16.mxu0 %v398
    %520 = vmatpush1.bf16.msra.mxu0 %v397
    %521 = vmatprep.subr.bf16.mxu0 %v392
    %522 = vmatpush1.bf16.msra.mxu0 %v391
    %523 = vmatprep.subr.bf16.mxu0 %v386
    %524 = vmatpush1.bf16.msra.mxu0 %v385
    %525 = vmatprep.subr.bf16.mxu0 0
    %526 = vmatpush2.bf16.msra.mxu0 0
    %527 = vmatprep.subr.bf16.mxu0 0
    %528 = vmatpush2.bf16.msra.mxu0 0
    %529 = vmatprep.subr.bf16.mxu0 0
    %530 = vmatpush2.bf16.msra.mxu0 0
    %531 = vmatprep.subr.bf16.mxu0 0
    %532 = vmatpush2.bf16.msra.mxu0 0
    %533 = vmatprep.subr.bf16.mxu0 0
    %534 = vmatpush2.bf16.msra.mxu0 0
    %535 = vmatprep.subr.bf16.mxu0 0
    %536 = vmatpush2.bf16.msra.mxu0 0
    %537 = vmatprep.subr.bf16.mxu0 0
    %538 = vmatpush2.bf16.msra.mxu0 0
    %539 = vmatprep.subr.bf16.mxu0 %v495
    %540 = vmatpush2.bf16.msra.mxu0 %v492
    %541 = vmatprep.mubr.bf16.mxu0 %v488
    %542 = vmatmul.mubr.bf16.gmra.mxu0 %v147
    %v543 = vpop.f32.mrf.mxu0
    %v544 = vadd.f32 %v205, %v543
    %v545 = vpop.f32.mrf.mxu0
    %v546 = vadd.f32 %v209, %v545
    %v547 = vpop.f32.mrf.mxu0
    %v548 = vadd.f32 %v205, %v547
    %v549 = vpop.f32.mrf.mxu0
    %v550 = vadd.f32 %v209, %v549
    %551 = vdwg.mxu0
    %552 = vmatprep.subr.bf16.mxu0 %v430
    %553 = vmatpush1.bf16.msra.mxu0 %v429
    %554 = vmatprep.subr.bf16.mxu0 %v424
    %555 = vmatpush1.bf16.msra.mxu0 %v423
    %556 = vmatprep.subr.bf16.mxu0 %v418
    %557 = vmatpush1.bf16.msra.mxu0 %v417
    %558 = vmatprep.subr.bf16.mxu0 %v412
    %559 = vmatpush1.bf16.msra.mxu0 %v411
    %560 = vmatprep.subr.bf16.mxu0 %v406
    %561 = vmatpush1.bf16.msra.mxu0 %v405
    %562 = vmatprep.subr.bf16.mxu0 %v400
    %563 = vmatpush1.bf16.msra.mxu0 %v399
    %564 = vmatprep.subr.bf16.mxu0 %v394
    %565 = vmatpush1.bf16.msra.mxu0 %v393
    %566 = vmatprep.subr.bf16.mxu0 %v388
    %567 = vmatpush1.bf16.msra.mxu0 %v387
    %568 = vmatprep.subr.bf16.mxu0 0
    %569 = vmatpush2.bf16.msra.mxu0 0
    %570 = vmatprep.subr.bf16.mxu0 0
    %571 = vmatpush2.bf16.msra.mxu0 0
    %572 = vmatprep.subr.bf16.mxu0 0
    %573 = vmatpush2.bf16.msra.mxu0 0
    %574 = vmatprep.subr.bf16.mxu0 0
    %575 = vmatpush2.bf16.msra.mxu0 0
    %576 = vmatprep.subr.bf16.mxu0 0
    %577 = vmatpush2.bf16.msra.mxu0 0
    %578 = vmatprep.subr.bf16.mxu0 0
    %579 = vmatpush2.bf16.msra.mxu0 0
    %580 = vmatprep.subr.bf16.mxu0 0
    %581 = vmatpush2.bf16.msra.mxu0 0
    %582 = vmatprep.subr.bf16.mxu0 %v501
    %583 = vmatpush2.bf16.msra.mxu0 %v498
    %584 = vmatprep.mubr.bf16.mxu0 %v488
    %585 = vmatmul.mubr.bf16.gmra.mxu0 %v147
    %v586 = vpop.f32.mrf.mxu0
    %v587 = vadd.f32 %v213, %v586
    %v588 = vpop.f32.mrf.mxu0
    %v589 = vadd.f32 %v217, %v588
    %v590 = vpop.f32.mrf.mxu0
    %v591 = vadd.f32 %v213, %v590
    %v592 = vpop.f32.mrf.mxu0
    %v593 = vadd.f32 %v217, %v592
    %594 = vdwg.mxu0
    %595 = vmatprep.subr.bf16.mxu0 %v432
    %596 = vmatpush1.bf16.msra.mxu0 %v431
    %597 = vmatprep.subr.bf16.mxu0 %v426
    %598 = vmatpush1.bf16.msra.mxu0 %v425
    %599 = vmatprep.subr.bf16.mxu0 %v420
    %600 = vmatpush1.bf16.msra.mxu0 %v419
    %601 = vmatprep.subr.bf16.mxu0 %v414
    %602 = vmatpush1.bf16.msra.mxu0 %v413
    %603 = vmatprep.subr.bf16.mxu0 %v408
    %604 = vmatpush1.bf16.msra.mxu0 %v407
    %605 = vmatprep.subr.bf16.mxu0 %v402
    %606 = vmatpush1.bf16.msra.mxu0 %v401
    %607 = vmatprep.subr.bf16.mxu0 %v396
    %608 = vmatpush1.bf16.msra.mxu0 %v395
    %609 = vmatprep.subr.bf16.mxu0 %v390
    %610 = vmatpush1.bf16.msra.mxu0 %v389
    %611 = vmatprep.subr.bf16.mxu0 0
    %612 = vmatpush2.bf16.msra.mxu0 0
    %613 = vmatprep.subr.bf16.mxu0 0
    %614 = vmatpush2.bf16.msra.mxu0 0
    %615 = vmatprep.subr.bf16.mxu0 0
    %616 = vmatpush2.bf16.msra.mxu0 0
    %617 = vmatprep.subr.bf16.mxu0 0
    %618 = vmatpush2.bf16.msra.mxu0 0
    %619 = vmatprep.subr.bf16.mxu0 0
    %620 = vmatpush2.bf16.msra.mxu0 0
    %621 = vmatprep.subr.bf16.mxu0 0
    %622 = vmatpush2.bf16.msra.mxu0 0
    %623 = vmatprep.subr.bf16.mxu0 0
    %624 = vmatpush2.bf16.msra.mxu0 0
    %625 = vmatprep.subr.bf16.mxu0 %v507
    %626 = vmatpush2.bf16.msra.mxu0 %v504
    %627 = vmatprep.mubr.bf16.mxu0 %v488
    %628 = vmatmul.mubr.bf16.gmra.mxu0 %v147
    %v629 = vpop.f32.mrf.mxu0
    %v630 = vadd.f32 %v221, %v629
    %v631 = vpop.f32.mrf.mxu0
    %v632 = vadd.f32 %v225, %v631
    %v633 = vpop.f32.mrf.mxu0
    %v634 = vadd.f32 %v221, %v633
    %v635 = vpop.f32.mrf.mxu0
    %v636 = vadd.f32 %v225, %v635
    %637 = vdwg.mxu0
    %638 = vst [vmem:[%s6] sm:$0xff] %v544
    %639 = vst [vmem:[%s6 + $0x8] sm:$0xff] %v546
    %640 = vst [vmem:[%s6 + $0x10] sm:$0xff] %v587
    %641 = vst [vmem:[%s6 + $0x18] sm:$0xff] %v589
    %642 = vst [vmem:[%s6 + $0x20] sm:$0xff] %v630
    %643 = vst [vmem:[%s6 + $0x28] sm:$0xff] %v632
    %644 = vst [vmem:[%s6 + $0x30] sm:$0xff] %v548
    %645 = vst [vmem:[%s6 + $0x38] sm:$0xff] %v550
    %646 = vst [vmem:[%s6 + $0x40] sm:$0xff] %v591
    %647 = vst [vmem:[%s6 + $0x48] sm:$0xff] %v593
    %648 = vst [vmem:[%s6 + $0x50] sm:$0xff] %v634
    %649 = vst [vmem:[%s6 + $0x58] sm:$0xff] %v636
    // Predicated region
    $region26: #{model1_forward.6} parent=1 // pred_check
      _
    $region27: #{model1_forward.6} parent=1 // pred_check_branch
      %651 = sbr.rel (0) target = $region29
    $region28: #{model1_forward.6} parent=1 // pred_region
      _
    $region29: #{model1_forward.6} parent=1 // pred_fallthru
      _
    // Predicated region
    $region30: #{model1_forward.6} parent=1 // pred_check
      _
    $region31: #{model1_forward.6} parent=1 // pred_check_branch
      %653 = sbr.rel (0) target = $region33
    $region32: #{model1_forward.6} parent=1 // pred_region
      _
    $region33: #{model1_forward.6} parent=1 // pred_fallthru
      _
    // Predicated region
    $region34: #{model1_forward.6} parent=1 // pred_check
      _
    $region35: #{model1_forward.6} parent=1 // pred_check_branch
      %655 = sbr.rel (0) target = $region37
    $region36: #{model1_forward.6} parent=1 // pred_region
      _
    $region37: #{model1_forward.6} parent=1 // pred_fallthru
      _
    // Predicated region
    $region38: #{model1_forward.6} parent=1 // pred_check
      _
    $region39: #{model1_forward.6} parent=1 // pred_check_branch
      %657 = sbr.rel (0) target = $region41
    $region40: #{model1_forward.6} parent=1 // pred_region
      _
    $region41: #{model1_forward.6} parent=1 // pred_fallthru
      _
    %658 = vsyncpa [#allocation3], 1

// kernel: model1_forward.7
$region0: #{model1_forward.7}
  #allocation0 [shape = 'u32[]', space=smem, size = 0x4, offset = 0x4, fixed_abs, tag = 'smem constant byte address 0x4 - core index']
  #allocation1 [shape = 'u32[144,128]{1,0:T(1,128)}', space=vmem, size = 0x12000, scoped, tag = 'internal scratch']
  #allocation2 [shape = 'f32[2,128]{1,0:T(2,128)}', space=vmem, size = 0x400, scoped, tag = 'scratch operand']
  #allocation3 [shape = 'f32[2,128]{1,0:T(2,128)}', space=vmem, size = 0x400, scoped, tag = 'scratch operand']
  %s0 = inlined_call_operand.vmem [shape: f32[8,2,768], index: 0, kind: input, shape index: {}]
  %s1 = inlined_call_operand.vmem [shape: bf16[128,384], index: 1, kind: input, shape index: {}]
  %s2 = inlined_call_operand.vmem [shape: bf16[128,384], index: 2, kind: input, shape index: {}]
  %s3 = inlined_call_operand.vmem [shape: f32[1,384], index: 3, kind: input, shape index: {}]
  %s4 = inlined_call_operand.vmem [shape: f32[1,384], index: 4, kind: input, shape index: {}]
  %s5 = inlined_call_operand.vmem [shape: f32[8,2,128], index: 5, kind: output, shape index: {0}]
  %s6 = inlined_call_operand.vmem [shape: f32[8,2,128], index: 6, kind: output, shape index: {1}]
  %s7 = inlined_call_operand.vmem [shape: f32[2,128], index: 7, kind: output, shape index: {2}]
  %8 = xla_tuple %s5, %s6, %s7
  %s9 = sld [smem:[#allocation0]]
  $region73: #{model1_forward.7} parent=0
    _
  %s11 = ssub.s32 1, %s9
  %s12 = scalar_select 0, %s11, %s9
  loop: start=0, step=1, limit=10
  $region2: #{model1_forward.7} parent=0 // loop_pre_header
    _
  $region3: #{model1_forward.7} parent=0 // loop_header
    %s14 = sphi 0, %s18
    %p15 = scmp.ge.s32.totalorder %s14, 10
    %s24 = sphi 0, %s26
    %s27 = sphi 0, %s24
    %s28 = sphi 0, %s27
    %s44 = sphi 0, %s28
    %s48 = sphi 0, %s48
    %s50 = sphi 0, %s48
    %s51 = sphi 0, %s50
    %s65 = sphi 0, %s51
    %s69 = sphi 0, %s69
    %s71 = sphi 0, %s69
    %s72 = sphi 0, %s71
    %s86 = sphi 0, %s72
    %s90 = sphi 0, %s90
    %s92 = sphi 0, %s90
    %s93 = sphi 0, %s92
    %s107 = sphi 0, %s93
    %s111 = sphi 0, %s111
    %s113 = sphi 0, %s111
    %s114 = sphi 0, %s113
    %s128 = sphi 0, %s114
    %s134 = sphi 0, %s136
    %s137 = sphi 0, %s134
    %s138 = sphi 0, %s137
    %s154 = sphi 0, %s138
    %s160 = sphi 0, %s162
    %s163 = sphi 0, %s160
    %s164 = sphi 0, %s163
    %s180 = sphi 0, %s164
    %s184 = sphi 0, %s184
    %s186 = sphi 0, %s184
    %s187 = sphi 0, %s186
    %s201 = sphi 0, %s187
  $region4: #{model1_forward.7} parent=0 // loop_header_branch
    %17 = sbr.rel (%p15) target = $region8
  $region5: #{model1_forward.7} parent=0 // loop_body
    %s19 = ssub.s32 %s14, 1
    %s20 = ssub.s32 %s14, 2
    %s21 = sadd.s32 %s14, 1
    %s22 = ssub.s32 %s14, %s21
    %p23 = scmp.eq.s32.totalorder %s22, 0
    %s25 = sadd.s32 %s24, 1
    %s26 = scalar_select %p23, %s24, %s25
    %p29 = pneg %p23
    %p30 = scmp.eq.s32.totalorder %s14, 7
    %p31 = por %p29, %p30
    %p32 = scmp.ne.s32.totalorder %s24, %s27
    %p33 = scmp.eq.s32.totalorder %s14, 0
    %p34 = por %p32, %p33
    %p35 = scmp.ne.s32.totalorder %s24, %s27
    %p36 = scmp.eq.s32.totalorder %s19, 7
    %p37 = por %p35, %p36
    %p38 = scmp.ne.s32.totalorder %s27, %s28
    %p39 = scmp.eq.s32.totalorder %s19, 0
    %p40 = por %p38, %p39
    %p41 = scmp.ne.s32.totalorder %s27, %s28
    %p42 = scmp.eq.s32.totalorder %s20, 7
    %p43 = por %p41, %p42
    %p45 = scmp.ne.s32.totalorder %s28, %s44
    %p46 = scmp.eq.s32.totalorder %s20, 0
    %p47 = por %p45, %p46
    %s49 = sadd.s32 %s48, 1
    %p52 = scmp.eq.s32.totalorder %s14, 7
    %p53 = scmp.ne.s32.totalorder %s48, %s50
    %p54 = scmp.eq.s32.totalorder %s14, 0
    %p55 = por %p53, %p54
    %p56 = scmp.ne.s32.totalorder %s48, %s50
    %p57 = scmp.eq.s32.totalorder %s19, 7
    %p58 = por %p56, %p57
    %p59 = scmp.ne.s32.totalorder %s50, %s51
    %p60 = scmp.eq.s32.totalorder %s19, 0
    %p61 = por %p59, %p60
    %p62 = scmp.ne.s32.totalorder %s50, %s51
    %p63 = scmp.eq.s32.totalorder %s20, 7
    %p64 = por %p62, %p63
    %p66 = scmp.ne.s32.totalorder %s51, %s65
    %p67 = scmp.eq.s32.totalorder %s20, 0
    %p68 = por %p66, %p67
    %s70 = sadd.s32 %s69, 1
    %p73 = scmp.eq.s32.totalorder %s14, 7
    %p74 = scmp.ne.s32.totalorder %s69, %s71
    %p75 = scmp.eq.s32.totalorder %s14, 0
    %p76 = por %p74, %p75
    %p77 = scmp.ne.s32.totalorder %s69, %s71
    %p78 = scmp.eq.s32.totalorder %s19, 7
    %p79 = por %p77, %p78
    %p80 = scmp.ne.s32.totalorder %s71, %s72
    %p81 = scmp.eq.s32.totalorder %s19, 0
    %p82 = por %p80, %p81
    %p83 = scmp.ne.s32.totalorder %s71, %s72
    %p84 = scmp.eq.s32.totalorder %s20, 7
    %p85 = por %p83, %p84
    %p87 = scmp.ne.s32.totalorder %s72, %s86
    %p88 = scmp.eq.s32.totalorder %s20, 0
    %p89 = por %p87, %p88
    %s91 = sadd.s32 %s90, 1
    %p94 = scmp.eq.s32.totalorder %s14, 7
    %p95 = scmp.ne.s32.totalorder %s90, %s92
    %p96 = scmp.eq.s32.totalorder %s14, 0
    %p97 = por %p95, %p96
    %p98 = scmp.ne.s32.totalorder %s90, %s92
    %p99 = scmp.eq.s32.totalorder %s19, 7
    %p100 = por %p98, %p99
    %p101 = scmp.ne.s32.totalorder %s92, %s93
    %p102 = scmp.eq.s32.totalorder %s19, 0
    %p103 = por %p101, %p102
    %p104 = scmp.ne.s32.totalorder %s92, %s93
    %p105 = scmp.eq.s32.totalorder %s20, 7
    %p106 = por %p104, %p105
    %p108 = scmp.ne.s32.totalorder %s93, %s107
    %p109 = scmp.eq.s32.totalorder %s20, 0
    %p110 = por %p108, %p109
    %s112 = sadd.s32 %s111, 1
    %p115 = scmp.eq.s32.totalorder %s14, 7
    %p116 = scmp.ne.s32.totalorder %s111, %s113
    %p117 = scmp.eq.s32.totalorder %s14, 0
    %p118 = por %p116, %p117
    %p119 = scmp.ne.s32.totalorder %s111, %s113
    %p120 = scmp.eq.s32.totalorder %s19, 7
    %p121 = por %p119, %p120
    %p122 = scmp.ne.s32.totalorder %s113, %s114
    %p123 = scmp.eq.s32.totalorder %s19, 0
    %p124 = por %p122, %p123
    %p125 = scmp.ne.s32.totalorder %s113, %s114
    %p126 = scmp.eq.s32.totalorder %s20, 7
    %p127 = por %p125, %p126
    %p129 = scmp.ne.s32.totalorder %s114, %s128
    %p130 = scmp.eq.s32.totalorder %s20, 0
    %p131 = por %p129, %p130
    %s132 = ssub.s32 %s14, %s21
    %p133 = scmp.eq.s32.totalorder %s132, 0
    %s135 = sadd.s32 %s134, 1
    %s136 = scalar_select %p133, %s134, %s135
    %p139 = pneg %p133
    %p140 = scmp.eq.s32.totalorder %s14, 7
    %p141 = por %p139, %p140
    %p142 = scmp.ne.s32.totalorder %s134, %s137
    %p143 = scmp.eq.s32.totalorder %s14, 0
    %p144 = por %p142, %p143
    %p145 = scmp.ne.s32.totalorder %s134, %s137
    %p146 = scmp.eq.s32.totalorder %s19, 7
    %p147 = por %p145, %p146
    %p148 = scmp.ne.s32.totalorder %s137, %s138
    %p149 = scmp.eq.s32.totalorder %s19, 0
    %p150 = por %p148, %p149
    %p151 = scmp.ne.s32.totalorder %s137, %s138
    %p152 = scmp.eq.s32.totalorder %s20, 7
    %p153 = por %p151, %p152
    %p155 = scmp.ne.s32.totalorder %s138, %s154
    %p156 = scmp.eq.s32.totalorder %s20, 0
    %p157 = por %p155, %p156
    %s158 = ssub.s32 %s14, %s21
    %p159 = scmp.eq.s32.totalorder %s158, 0
    %s161 = sadd.s32 %s160, 1
    %s162 = scalar_select %p159, %s160, %s161
    %p165 = pneg %p159
    %p166 = scmp.eq.s32.totalorder %s14, 7
    %p167 = por %p165, %p166
    %p168 = scmp.ne.s32.totalorder %s160, %s163
    %p169 = scmp.eq.s32.totalorder %s14, 0
    %p170 = por %p168, %p169
    %p171 = scmp.ne.s32.totalorder %s160, %s163
    %p172 = scmp.eq.s32.totalorder %s19, 7
    %p173 = por %p171, %p172
    %p174 = scmp.ne.s32.totalorder %s163, %s164
    %p175 = scmp.eq.s32.totalorder %s19, 0
    %p176 = por %p174, %p175
    %p177 = scmp.ne.s32.totalorder %s163, %s164
    %p178 = scmp.eq.s32.totalorder %s20, 7
    %p179 = por %p177, %p178
    %p181 = scmp.ne.s32.totalorder %s164, %s180
    %p182 = scmp.eq.s32.totalorder %s20, 0
    %p183 = por %p181, %p182
    %s185 = sadd.s32 %s184, 1
    %p188 = scmp.eq.s32.totalorder %s14, 7
    %p189 = scmp.ne.s32.totalorder %s184, %s186
    %p190 = scmp.eq.s32.totalorder %s14, 0
    %p191 = por %p189, %p190
    %p192 = scmp.ne.s32.totalorder %s184, %s186
    %p193 = scmp.eq.s32.totalorder %s19, 7
    %p194 = por %p192, %p193
    %p195 = scmp.ne.s32.totalorder %s186, %s187
    %p196 = scmp.eq.s32.totalorder %s19, 0
    %p197 = por %p195, %p196
    %p198 = scmp.ne.s32.totalorder %s186, %s187
    %p199 = scmp.eq.s32.totalorder %s20, 7
    %p200 = por %p198, %p199
    %p202 = scmp.ne.s32.totalorder %s187, %s201
    %p203 = scmp.eq.s32.totalorder %s20, 0
    %p204 = por %p202, %p203
    %p205 = scmp.le.s32.totalorder 1, %s14
    %p206 = scmp.lt.s32.totalorder %s14, 9
    %p207 = pnand %p205, %p206
    %p208 = pneg %p207
    // Predicated region
    $region9: #{model1_forward.7} parent=5 // pred_check
      _
    $region10: #{model1_forward.7} parent=5 // pred_check_branch
      %210 = sbr.rel (%p207) target = $region12
    $region11: #{model1_forward.7} parent=5 // pred_region
      %s211 = ssub.s32 %s14, 1
      // Predicated region
      $region13: #{model1_forward.7} parent=11 // pred_check
        %p212 = pneg %p61
      $region14: #{model1_forward.7} parent=11 // pred_check_branch
        %214 = sbr.rel (%p212) target = $region16
      $region15: #{model1_forward.7} parent=11 // pred_region
        _
      $region16: #{model1_forward.7} parent=11 // pred_fallthru
        _
      // Predicated region
      $region17: #{model1_forward.7} parent=11 // pred_check
        %p215 = pneg %p82
      $region18: #{model1_forward.7} parent=11 // pred_check_branch
        %217 = sbr.rel (%p215) target = $region20
      $region19: #{model1_forward.7} parent=11 // pred_region
        _
      $region20: #{model1_forward.7} parent=11 // pred_fallthru
        _
      // Predicated region
      $region21: #{model1_forward.7} parent=11 // pred_check
        %p218 = pneg %p103
      $region22: #{model1_forward.7} parent=11 // pred_check_branch
        %220 = sbr.rel (%p218) target = $region24
      $region23: #{model1_forward.7} parent=11 // pred_region
        _
      $region24: #{model1_forward.7} parent=11 // pred_fallthru
        _
      // Predicated region
      $region25: #{model1_forward.7} parent=11 // pred_check
        %p221 = pneg %p124
      $region26: #{model1_forward.7} parent=11 // pred_check_branch
        %223 = sbr.rel (%p221) target = $region28
      $region27: #{model1_forward.7} parent=11 // pred_region
        _
      $region28: #{model1_forward.7} parent=11 // pred_fallthru
        _
    $region12: #{model1_forward.7} parent=5 // pred_fallthru
      _
    %p224 = scmp.lt.s32.totalorder %s14, 8
    // Predicated region
    $region29: #{model1_forward.7} parent=5 // pred_check
      %p225 = pneg %p224
    $region30: #{model1_forward.7} parent=5 // pred_check_branch
      %227 = sbr.rel (%p225) target = $region32
    $region31: #{model1_forward.7} parent=5 // pred_region
      // Predicated region
      $region33: #{model1_forward.7} parent=31 // pred_check
        %p228 = pneg %p34
      $region34: #{model1_forward.7} parent=31 // pred_check_branch
        %230 = sbr.rel (%p228) target = $region36
      $region35: #{model1_forward.7} parent=31 // pred_region
        %p231 = scmp.lt.s32.totalorder %s14, 7
        %s232 = scalar_select %p231, %s14, 7
        %s233 = smul.addr %s232, 6
        %s234 = smul.addr %s233, 2
        %s235 = scalar_lea.vmem %s0, %s234
      $region36: #{model1_forward.7} parent=31 // pred_fallthru
        _
    $region32: #{model1_forward.7} parent=5 // pred_fallthru
      _
    %p236 = scmp.le.s32.totalorder 1, %s14
    %p237 = scmp.lt.s32.totalorder %s14, 9
    %p238 = pnand %p236, %p237
    %p239 = pneg %p238
    // Predicated region
    $region37: #{model1_forward.7} parent=5 // pred_check
      _
    $region38: #{model1_forward.7} parent=5 // pred_check_branch
      %241 = sbr.rel (%p238) target = $region40
    $region39: #{model1_forward.7} parent=5 // pred_region
      %s242 = ssub.s32 %s14, 1
      %p243 = scmp.lt.s32.totalorder %s19, 7
      %s244 = scalar_select %p243, %s19, 7
      %s245 = smul.addr %s244, 6
      %s246 = smul.addr %s245, 2
      %s247 = scalar_lea.vmem %s0, %s246
      %p248 = pneg %p40
      %p249 = pneg %p37
      %p250 = pneg %p61
      %p251 = pneg %p58
      %p252 = pneg %p82
      %p253 = pneg %p79
      %p254 = pneg %p103
      %p255 = pneg %p100
      %p256 = pneg %p124
      %p257 = pneg %p121
      %p258 = pneg %p150
      %p259 = pneg %p147
      %p260 = scmp.lt.s32.totalorder %s19, 7
      %s261 = scalar_select %p260, %s19, 7
      %s262 = smul.addr %s261, 2
      %s263 = scalar_lea.vmem %s5, %s262
      %p264 = pneg %p176
      %p265 = pneg %p173
      %p266 = scmp.lt.s32.totalorder %s19, 7
      %s267 = scalar_select %p266, %s19, 7
      %s268 = smul.addr %s267, 2
      %s269 = scalar_lea.vmem %s6, %s268
      %p270 = pneg %p197
      %p271 = pneg %p194
      %p272 = scmp.lt.s32.totalorder %s19, 7
      %s273 = scalar_select %p272, %s19, 7
      %s274 = smul.addr %s273, 6
      %s275 = smul.addr %s274, 2
      %s276 = scalar_lea.vmem %s0, %s275
      %p277 = scmp.lt.s32.totalorder %s19, 7
      %s278 = scalar_select %p277, %s19, 7
      %s279 = smul.addr %s278, 2
      %s280 = scalar_lea.vmem %s5, %s279
      %p281 = scmp.lt.s32.totalorder %s19, 7
      %s282 = scalar_select %p281, %s19, 7
      %s283 = smul.addr %s282, 2
      %s284 = scalar_lea.vmem %s6, %s283
      %p286 = scmp.eq.s32.totalorder %s19, 0
      // Predicated region
      $region41: #{model1_forward.7} parent=39 // pred_check
        %p287 = pneg %p286
      $region42: #{model1_forward.7} parent=39 // pred_check_branch
        %289 = sbr.rel (%p287) target = $region44
      $region43: #{model1_forward.7} parent=39 // pred_region
        %290 = vst [vmem:[#allocation2] sm:$0x3] 0.0
        %291 = vst [vmem:[#allocation3] sm:$0x3] 0.0
      $region44: #{model1_forward.7} parent=39 // pred_fallthru
        _
      %v292 = vld [vmem:[#allocation2] sm:$0x3]
      %v293 = vld [vmem:[#allocation3] sm:$0x3]
      %294 = vst [vmem:[%s280] sm:$0x3] %v292
      %295 = vst [vmem:[%s284] sm:$0x3] %v293
      %v296 = vld [vmem:[%s276] sm:$0xff]
      %v297 = vld [vmem:[%s276 + $0x8] sm:$0xf]
      %v298 = vpack.c.bf16 %v292, %v292
      %v299 = vld [vmem:[%s1] sm:$0xff]
      %v300 = vld [vmem:[%s1 + $0x8] sm:$0xf]
      %v301 = vld [vmem:[%s1 + $0xc] sm:$0xff]
      %v302 = vld [vmem:[%s1 + $0x14] sm:$0xf]
      %v303 = vld [vmem:[%s1 + $0x18] sm:$0xff]
      %v304 = vld [vmem:[%s1 + $0x20] sm:$0xf]
      %v305 = vld [vmem:[%s1 + $0x24] sm:$0xff]
      %v306 = vld [vmem:[%s1 + $0x2c] sm:$0xf]
      %v307 = vld [vmem:[%s1 + $0x30] sm:$0xff]
      %v308 = vld [vmem:[%s1 + $0x38] sm:$0xf]
      %v309 = vld [vmem:[%s1 + $0x3c] sm:$0xff]
      %v310 = vld [vmem:[%s1 + $0x44] sm:$0xf]
      %v311 = vld [vmem:[%s1 + $0x48] sm:$0xff]
      %v312 = vld [vmem:[%s1 + $0x50] sm:$0xf]
      %v313 = vld [vmem:[%s1 + $0x54] sm:$0xff]
      %v314 = vld [vmem:[%s1 + $0x5c] sm:$0xf]
      %v315 = vld [vmem:[%s1 + $0x60] sm:$0xff]
      %v316 = vld [vmem:[%s1 + $0x68] sm:$0xf]
      %v317 = vld [vmem:[%s1 + $0x6c] sm:$0xff]
      %v318 = vld [vmem:[%s1 + $0x74] sm:$0xf]
      %v319 = vld [vmem:[%s1 + $0x78] sm:$0xff]
      %v320 = vld [vmem:[%s1 + $0x80] sm:$0xf]
      %v321 = vld [vmem:[%s1 + $0x84] sm:$0xff]
      %v322 = vld [vmem:[%s1 + $0x8c] sm:$0xf]
      %v323 = vld [vmem:[%s1 + $0x90] sm:$0xff]
      %v324 = vld [vmem:[%s1 + $0x98] sm:$0xf]
      %v325 = vld [vmem:[%s1 + $0x9c] sm:$0xff]
      %v326 = vld [vmem:[%s1 + $0xa4] sm:$0xf]
      %v327 = vld [vmem:[%s1 + $0xa8] sm:$0xff]
      %v328 = vld [vmem:[%s1 + $0xb0] sm:$0xf]
      %v329 = vld [vmem:[%s1 + $0xb4] sm:$0xff]
      %v330 = vld [vmem:[%s1 + $0xbc] sm:$0xf]
      %v331 = vld [vmem:[%s3] sm:$0x7]
      %v333 = vlaneseq
      %v334 = vshrl.u32 %v333, 7
      %v335 = vsub.s32 0, %v334
      %v336 = vrot.slane %v331, %v335
      %v337 = vlaneseq
      %v338 = vshrl.u32 %v337, 7
      %v339 = vsub.s32 1, %v338
      %v340 = vrot.slane %v331, %v339
      %v341 = vlaneseq
      %v342 = vshrl.u32 %v341, 7
      %v343 = vsub.s32 2, %v342
      %v344 = vrot.slane %v331, %v343
      %v380 = vunpack.c.l.b16 %v299
      %v381 = vunpack.c.h.b16 %v299
      %v382 = vunpack.c.l.b16 %v300
      %v383 = vunpack.c.l.b16 %v301
      %v384 = vunpack.c.h.b16 %v301
      %v385 = vunpack.c.l.b16 %v302
      %v386 = vunpack.c.l.b16 %v303
      %v387 = vunpack.c.h.b16 %v303
      %v388 = vunpack.c.l.b16 %v304
      %v389 = vunpack.c.l.b16 %v305
      %v390 = vunpack.c.h.b16 %v305
      %v391 = vunpack.c.l.b16 %v306
      %v392 = vunpack.c.l.b16 %v307
      %v393 = vunpack.c.h.b16 %v307
      %v394 = vunpack.c.l.b16 %v308
      %v395 = vunpack.c.l.b16 %v309
      %v396 = vunpack.c.h.b16 %v309
      %v397 = vunpack.c.l.b16 %v310
      %v398 = vunpack.c.l.b16 %v311
      %v399 = vunpack.c.h.b16 %v311
      %v400 = vunpack.c.l.b16 %v312
      %v401 = vunpack.c.l.b16 %v313
      %v402 = vunpack.c.h.b16 %v313
      %v403 = vunpack.c.l.b16 %v314
      %v404 = vunpack.c.l.b16 %v315
      %v405 = vunpack.c.h.b16 %v315
      %v406 = vunpack.c.l.b16 %v316
      %v407 = vunpack.c.l.b16 %v317
      %v408 = vunpack.c.h.b16 %v317
      %v409 = vunpack.c.l.b16 %v318
      %v410 = vunpack.c.l.b16 %v319
      %v411 = vunpack.c.h.b16 %v319
      %v412 = vunpack.c.l.b16 %v320
      %v413 = vunpack.c.l.b16 %v321
      %v414 = vunpack.c.h.b16 %v321
      %v415 = vunpack.c.l.b16 %v322
      %v416 = vunpack.c.l.b16 %v323
      %v417 = vunpack.c.h.b16 %v323
      %v418 = vunpack.c.l.b16 %v324
      %v419 = vunpack.c.l.b16 %v325
      %v420 = vunpack.c.h.b16 %v325
      %v421 = vunpack.c.l.b16 %v326
      %v422 = vunpack.c.l.b16 %v327
      %v423 = vunpack.c.h.b16 %v327
      %v424 = vunpack.c.l.b16 %v328
      %v425 = vunpack.c.l.b16 %v329
      %v426 = vunpack.c.h.b16 %v329
      %v427 = vunpack.c.l.b16 %v330
      %v428 = vpack.c.b16 %v383, %v380
      %v429 = vpack.c.b16 %v384, %v381
      %v430 = vpack.c.b16 %v385, %v382
      %v431 = vpack.c.b16 %v389, %v386
      %v432 = vpack.c.b16 %v390, %v387
      %v433 = vpack.c.b16 %v391, %v388
      %v434 = vpack.c.b16 %v395, %v392
      %v435 = vpack.c.b16 %v396, %v393
      %v436 = vpack.c.b16 %v397, %v394
      %v437 = vpack.c.b16 %v401, %v398
      %v438 = vpack.c.b16 %v402, %v399
      %v439 = vpack.c.b16 %v403, %v400
      %v440 = vpack.c.b16 %v407, %v404
      %v441 = vpack.c.b16 %v408, %v405
      %v442 = vpack.c.b16 %v409, %v406
      %v443 = vpack.c.b16 %v413, %v410
      %v444 = vpack.c.b16 %v414, %v411
      %v445 = vpack.c.b16 %v415, %v412
      %v446 = vpack.c.b16 %v419, %v416
      %v447 = vpack.c.b16 %v420, %v417
      %v448 = vpack.c.b16 %v421, %v418
      %v449 = vpack.c.b16 %v425, %v422
      %v450 = vpack.c.b16 %v426, %v423
      %v451 = vpack.c.b16 %v427, %v424
      %476 = vmatprep.subr.bf16.mxu0 %v450
      %477 = vmatpush1.bf16.msra.mxu0 %v449
      %478 = vmatprep.subr.bf16.mxu0 %v447
      %479 = vmatpush1.bf16.msra.mxu0 %v446
      %480 = vmatprep.subr.bf16.mxu0 %v444
      %481 = vmatpush1.bf16.msra.mxu0 %v443
      %482 = vmatprep.subr.bf16.mxu0 %v441
      %483 = vmatpush1.bf16.msra.mxu0 %v440
      %484 = vmatprep.subr.bf16.mxu0 %v438
      %485 = vmatpush1.bf16.msra.mxu0 %v437
      %486 = vmatprep.subr.bf16.mxu0 %v435
      %487 = vmatpush1.bf16.msra.mxu0 %v434
      %488 = vmatprep.subr.bf16.mxu0 %v432
      %489 = vmatpush1.bf16.msra.mxu0 %v431
      %490 = vmatprep.subr.bf16.mxu0 %v429
      %491 = vmatpush1.bf16.msra.mxu0 %v428
      %492 = vmatprep.subr.bf16.mxu0 0
      %493 = vmatpush2.bf16.msra.mxu0 0
      %494 = vmatprep.subr.bf16.mxu0 0
      %495 = vmatpush2.bf16.msra.mxu0 0
      %496 = vmatprep.subr.bf16.mxu0 0
      %497 = vmatpush2.bf16.msra.mxu0 0
      %498 = vmatprep.subr.bf16.mxu0 0
      %499 = vmatpush2.bf16.msra.mxu0 0
      %500 = vmatprep.subr.bf16.mxu0 0
      %501 = vmatpush2.bf16.msra.mxu0 0
      %502 = vmatprep.subr.bf16.mxu0 0
      %503 = vmatpush2.bf16.msra.mxu0 0
      %504 = vmatprep.subr.bf16.mxu0 0
      %505 = vmatpush2.bf16.msra.mxu0 0
      %506 = vmatprep.subr.bf16.mxu0 0
      %507 = vmatpush2.bf16.msra.mxu0 0
      %508 = vmatprep.mubr.bf16.mxu0 0
      %509 = vmatmul.mubr.bf16.gmra.mxu0 %v298
      %v510 = vpop.f32.mrf.mxu0
      %v511 = vadd.f32 %v336, %v510
      %v512 = vpop.f32.mrf.mxu0
      %v513 = vadd.f32 %v340, %v512
      %v514 = vpop.f32.mrf.mxu0
      %v515 = vpop.f32.mrf.mxu0
      %516 = vdwg.mxu0
      %517 = vmatprep.subr.bf16.mxu0 0
      %518 = vmatpush1.bf16.msra.mxu0 %v451
      %519 = vmatprep.subr.bf16.mxu0 0
      %520 = vmatpush1.bf16.msra.mxu0 %v448
      %521 = vmatprep.subr.bf16.mxu0 0
      %522 = vmatpush1.bf16.msra.mxu0 %v445
      %523 = vmatprep.subr.bf16.mxu0 0
      %524 = vmatpush1.bf16.msra.mxu0 %v442
      %525 = vmatprep.subr.bf16.mxu0 0
      %526 = vmatpush1.bf16.msra.mxu0 %v439
      %527 = vmatprep.subr.bf16.mxu0 0
      %528 = vmatpush1.bf16.msra.mxu0 %v436
      %529 = vmatprep.subr.bf16.mxu0 0
      %530 = vmatpush1.bf16.msra.mxu0 %v433
      %531 = vmatprep.subr.bf16.mxu0 0
      %532 = vmatpush1.bf16.msra.mxu0 %v430
      %533 = vmatprep.subr.bf16.mxu0 0
      %534 = vmatpush2.bf16.msra.mxu0 0
      %535 = vmatprep.subr.bf16.mxu0 0
      %536 = vmatpush2.bf16.msra.mxu0 0
      %537 = vmatprep.subr.bf16.mxu0 0
      %538 = vmatpush2.bf16.msra.mxu0 0
      %539 = vmatprep.subr.bf16.mxu0 0
      %540 = vmatpush2.bf16.msra.mxu0 0
      %541 = vmatprep.subr.bf16.mxu0 0
      %542 = vmatpush2.bf16.msra.mxu0 0
      %543 = vmatprep.subr.bf16.mxu0 0
      %544 = vmatpush2.bf16.msra.mxu0 0
      %545 = vmatprep.subr.bf16.mxu0 0
      %546 = vmatpush2.bf16.msra.mxu0 0
      %547 = vmatprep.subr.bf16.mxu0 0
      %548 = vmatpush2.bf16.msra.mxu0 0
      %549 = vmatprep.mubr.bf16.mxu0 0
      %550 = vmatmul.mubr.bf16.gmra.mxu0 %v298
      %v551 = vpop.f32.mrf.mxu0
      %v552 = vadd.f32 %v344, %v551
      %v553 = vpop.f32.mrf.mxu0
      %v554 = vpop.f32.mrf.mxu0
      %v555 = vpop.f32.mrf.mxu0
      %556 = vdwg.mxu0
      %v557 = vadd.f32 %v296, %v511
      %v558 = vxor.u32 %v557, 2147483648
      %v559 = vmul.f32 %v558, 1.442695
      %v560 = vpow.pop %v559
      %v561 = vadd.f32 %v560, 1.0
      %v562 = vrcp.pop %v561
      %v563 = vmul.f32 1.0, %v562
      %v565 = vrot.slane %v296, 2
      %v567 = vadd.f32 %v565, %v513
      %v568 = vxor.u32 %v567, 2147483648
      %v569 = vmul.f32 %v568, 1.442695
      %v570 = vpow.pop %v569
      %v571 = vadd.f32 %v570, 1.0
      %v572 = vrcp.pop %v571
      %v573 = vmul.f32 1.0, %v572
      %v574 = vmul.f32 %v563, %v552
      %v575 = vrot.slane %v296, 4
      %v577 = vadd.f32 %v575, %v574
      %v578 = vtanh.pop %v577
      %v579 = vsub.f32 1.0, %v573
      %v580 = vmul.f32 %v579, %v578
      %v581 = vmul.f32 %v573, %v292
      %v582 = vadd.f32 %v580, %v581
      %v583 = vpack.c.bf16 %v293, %v293
      %v584 = vld [vmem:[%s2] sm:$0xff]
      %v585 = vld [vmem:[%s2 + $0x8] sm:$0xf]
      %v586 = vld [vmem:[%s2 + $0xc] sm:$0xff]
      %v587 = vld [vmem:[%s2 + $0x14] sm:$0xf]
      %v588 = vld [vmem:[%s2 + $0x18] sm:$0xff]
      %v589 = vld [vmem:[%s2 + $0x20] sm:$0xf]
      %v590 = vld [vmem:[%s2 + $0x24] sm:$0xff]
      %v591 = vld [vmem:[%s2 + $0x2c] sm:$0xf]
      %v592 = vld [vmem:[%s2 + $0x30] sm:$0xff]
      %v593 = vld [vmem:[%s2 + $0x38] sm:$0xf]
      %v594 = vld [vmem:[%s2 + $0x3c] sm:$0xff]
      %v595 = vld [vmem:[%s2 + $0x44] sm:$0xf]
      %v596 = vld [vmem:[%s2 + $0x48] sm:$0xff]
      %v597 = vld [vmem:[%s2 + $0x50] sm:$0xf]
      %v598 = vld [vmem:[%s2 + $0x54] sm:$0xff]
      %v599 = vld [vmem:[%s2 + $0x5c] sm:$0xf]
      %v600 = vld [vmem:[%s2 + $0x60] sm:$0xff]
      %v601 = vld [vmem:[%s2 + $0x68] sm:$0xf]
      %v602 = vld [vmem:[%s2 + $0x6c] sm:$0xff]
      %v603 = vld [vmem:[%s2 + $0x74] sm:$0xf]
      %v604 = vld [vmem:[%s2 + $0x78] sm:$0xff]
      %v605 = vld [vmem:[%s2 + $0x80] sm:$0xf]
      %v606 = vld [vmem:[%s2 + $0x84] sm:$0xff]
      %v607 = vld [vmem:[%s2 + $0x8c] sm:$0xf]
      %v608 = vld [vmem:[%s2 + $0x90] sm:$0xff]
      %v609 = vld [vmem:[%s2 + $0x98] sm:$0xf]
      %v610 = vld [vmem:[%s2 + $0x9c] sm:$0xff]
      %v611 = vld [vmem:[%s2 + $0xa4] sm:$0xf]
      %v612 = vld [vmem:[%s2 + $0xa8] sm:$0xff]
      %v613 = vld [vmem:[%s2 + $0xb0] sm:$0xf]
      %v614 = vld [vmem:[%s2 + $0xb4] sm:$0xff]
      %v615 = vld [vmem:[%s2 + $0xbc] sm:$0xf]
      %v616 = vld [vmem:[%s4] sm:$0x7]
      %v618 = vlaneseq
      %v619 = vshrl.u32 %v618, 7
      %v620 = vsub.s32 0, %v619
      %v621 = vrot.slane %v616, %v620
      %v622 = vlaneseq
      %v623 = vshrl.u32 %v622, 7
      %v624 = vsub.s32 1, %v623
      %v625 = vrot.slane %v616, %v624
      %v626 = vlaneseq
      %v627 = vshrl.u32 %v626, 7
      %v628 = vsub.s32 2, %v627
      %v629 = vrot.slane %v616, %v628
      %v665 = vunpack.c.l.b16 %v584
      %v666 = vunpack.c.h.b16 %v584
      %v667 = vunpack.c.l.b16 %v585
      %v668 = vunpack.c.l.b16 %v586
      %v669 = vunpack.c.h.b16 %v586
      %v670 = vunpack.c.l.b16 %v587
      %v671 = vunpack.c.l.b16 %v588
      %v672 = vunpack.c.h.b16 %v588
      %v673 = vunpack.c.l.b16 %v589
      %v674 = vunpack.c.l.b16 %v590
      %v675 = vunpack.c.h.b16 %v590
      %v676 = vunpack.c.l.b16 %v591
      %v677 = vunpack.c.l.b16 %v592
      %v678 = vunpack.c.h.b16 %v592
      %v679 = vunpack.c.l.b16 %v593
      %v680 = vunpack.c.l.b16 %v594
      %v681 = vunpack.c.h.b16 %v594
      %v682 = vunpack.c.l.b16 %v595
      %v683 = vunpack.c.l.b16 %v596
      %v684 = vunpack.c.h.b16 %v596
      %v685 = vunpack.c.l.b16 %v597
      %v686 = vunpack.c.l.b16 %v598
      %v687 = vunpack.c.h.b16 %v598
      %v688 = vunpack.c.l.b16 %v599
      %v689 = vunpack.c.l.b16 %v600
      %v690 = vunpack.c.h.b16 %v600
      %v691 = vunpack.c.l.b16 %v601
      %v692 = vunpack.c.l.b16 %v602
      %v693 = vunpack.c.h.b16 %v602
      %v694 = vunpack.c.l.b16 %v603
      %v695 = vunpack.c.l.b16 %v604
      %v696 = vunpack.c.h.b16 %v604
      %v697 = vunpack.c.l.b16 %v605
      %v698 = vunpack.c.l.b16 %v606
      %v699 = vunpack.c.h.b16 %v606
      %v700 = vunpack.c.l.b16 %v607
      %v701 = vunpack.c.l.b16 %v608
      %v702 = vunpack.c.h.b16 %v608
      %v703 = vunpack.c.l.b16 %v609
      %v704 = vunpack.c.l.b16 %v610
      %v705 = vunpack.c.h.b16 %v610
      %v706 = vunpack.c.l.b16 %v611
      %v707 = vunpack.c.l.b16 %v612
      %v708 = vunpack.c.h.b16 %v612
      %v709 = vunpack.c.l.b16 %v613
      %v710 = vunpack.c.l.b16 %v614
      %v711 = vunpack.c.h.b16 %v614
      %v712 = vunpack.c.l.b16 %v615
      %v713 = vpack.c.b16 %v668, %v665
      %v714 = vpack.c.b16 %v669, %v666
      %v715 = vpack.c.b16 %v670, %v667
      %v716 = vpack.c.b16 %v674, %v671
      %v717 = vpack.c.b16 %v675, %v672
      %v718 = vpack.c.b16 %v676, %v673
      %v719 = vpack.c.b16 %v680, %v677
      %v720 = vpack.c.b16 %v681, %v678
      %v721 = vpack.c.b16 %v682, %v679
      %v722 = vpack.c.b16 %v686, %v683
      %v723 = vpack.c.b16 %v687, %v684
      %v724 = vpack.c.b16 %v688, %v685
      %v725 = vpack.c.b16 %v692, %v689
      %v726 = vpack.c.b16 %v693, %v690
      %v727 = vpack.c.b16 %v694, %v691
      %v728 = vpack.c.b16 %v698, %v695
      %v729 = vpack.c.b16 %v699, %v696
      %v730 = vpack.c.b16 %v700, %v697
      %v731 = vpack.c.b16 %v704, %v701
      %v732 = vpack.c.b16 %v705, %v702
      %v733 = vpack.c.b16 %v706, %v703
      %v734 = vpack.c.b16 %v710, %v707
      %v735 = vpack.c.b16 %v711, %v708
      %v736 = vpack.c.b16 %v712, %v709
      %761 = vmatprep.subr.bf16.mxu0 %v735
      %762 = vmatpush1.bf16.msra.mxu0 %v734
      %763 = vmatprep.subr.bf16.mxu0 %v732
      %764 = vmatpush1.bf16.msra.mxu0 %v731
      %765 = vmatprep.subr.bf16.mxu0 %v729
      %766 = vmatpush1.bf16.msra.mxu0 %v728
      %767 = vmatprep.subr.bf16.mxu0 %v726
      %768 = vmatpush1.bf16.msra.mxu0 %v725
      %769 = vmatprep.subr.bf16.mxu0 %v723
      %770 = vmatpush1.bf16.msra.mxu0 %v722
      %771 = vmatprep.subr.bf16.mxu0 %v720
      %772 = vmatpush1.bf16.msra.mxu0 %v719
      %773 = vmatprep.subr.bf16.mxu0 %v717
      %774 = vmatpush1.bf16.msra.mxu0 %v716
      %775 = vmatprep.subr.bf16.mxu0 %v714
      %776 = vmatpush1.bf16.msra.mxu0 %v713
      %777 = vmatprep.subr.bf16.mxu0 0
      %778 = vmatpush2.bf16.msra.mxu0 0
      %779 = vmatprep.subr.bf16.mxu0 0
      %780 = vmatpush2.bf16.msra.mxu0 0
      %781 = vmatprep.subr.bf16.mxu0 0
      %782 = vmatpush2.bf16.msra.mxu0 0
      %783 = vmatprep.subr.bf16.mxu0 0
      %784 = vmatpush2.bf16.msra.mxu0 0
      %785 = vmatprep.subr.bf16.mxu0 0
      %786 = vmatpush2.bf16.msra.mxu0 0
      %787 = vmatprep.subr.bf16.mxu0 0
      %788 = vmatpush2.bf16.msra.mxu0 0
      %789 = vmatprep.subr.bf16.mxu0 0
      %790 = vmatpush2.bf16.msra.mxu0 0
      %791 = vmatprep.subr.bf16.mxu0 0
      %792 = vmatpush2.bf16.msra.mxu0 0
      %793 = vmatprep.mubr.bf16.mxu0 0
      %794 = vmatmul.mubr.bf16.gmra.mxu0 %v583
      %v795 = vpop.f32.mrf.mxu0
      %v796 = vadd.f32 %v621, %v795
      %v797 = vpop.f32.mrf.mxu0
      %v798 = vadd.f32 %v625, %v797
      %v799 = vpop.f32.mrf.mxu0
      %v800 = vpop.f32.mrf.mxu0
      %801 = vdwg.mxu0
      %802 = vmatprep.subr.bf16.mxu0 0
      %803 = vmatpush1.bf16.msra.mxu0 %v736
      %804 = vmatprep.subr.bf16.mxu0 0
      %805 = vmatpush1.bf16.msra.mxu0 %v733
      %806 = vmatprep.subr.bf16.mxu0 0
      %807 = vmatpush1.bf16.msra.mxu0 %v730
      %808 = vmatprep.subr.bf16.mxu0 0
      %809 = vmatpush1.bf16.msra.mxu0 %v727
      %810 = vmatprep.subr.bf16.mxu0 0
      %811 = vmatpush1.bf16.msra.mxu0 %v724
      %812 = vmatprep.subr.bf16.mxu0 0
      %813 = vmatpush1.bf16.msra.mxu0 %v721
      %814 = vmatprep.subr.bf16.mxu0 0
      %815 = vmatpush1.bf16.msra.mxu0 %v718
      %816 = vmatprep.subr.bf16.mxu0 0
      %817 = vmatpush1.bf16.msra.mxu0 %v715
      %818 = vmatprep.subr.bf16.mxu0 0
      %819 = vmatpush2.bf16.msra.mxu0 0
      %820 = vmatprep.subr.bf16.mxu0 0
      %821 = vmatpush2.bf16.msra.mxu0 0
      %822 = vmatprep.subr.bf16.mxu0 0
      %823 = vmatpush2.bf16.msra.mxu0 0
      %824 = vmatprep.subr.bf16.mxu0 0
      %825 = vmatpush2.bf16.msra.mxu0 0
      %826 = vmatprep.subr.bf16.mxu0 0
      %827 = vmatpush2.bf16.msra.mxu0 0
      %828 = vmatprep.subr.bf16.mxu0 0
      %829 = vmatpush2.bf16.msra.mxu0 0
      %830 = vmatprep.subr.bf16.mxu0 0
      %831 = vmatpush2.bf16.msra.mxu0 0
      %832 = vmatprep.subr.bf16.mxu0 0
      %833 = vmatpush2.bf16.msra.mxu0 0
      %834 = vmatprep.mubr.bf16.mxu0 0
      %835 = vmatmul.mubr.bf16.gmra.mxu0 %v583
      %v836 = vpop.f32.mrf.mxu0
      %v837 = vadd.f32 %v629, %v836
      %v838 = vpop.f32.mrf.mxu0
      %v839 = vpop.f32.mrf.mxu0
      %v840 = vpop.f32.mrf.mxu0
      %841 = vdwg.mxu0
      %v842 = vrot.slane %v296, 6
      %v844 = vadd.f32 %v842, %v796
      %v845 = vxor.u32 %v844, 2147483648
      %v846 = vmul.f32 %v845, 1.442695
      %v847 = vpow.pop %v846
      %v848 = vadd.f32 %v847, 1.0
      %v849 = vrcp.pop %v848
      %v850 = vmul.f32 1.0, %v849
      %v851 = vadd.f32 %v297, %v798
      %v852 = vxor.u32 %v851, 2147483648
      %v853 = vmul.f32 %v852, 1.442695
      %v854 = vpow.pop %v853
      %v855 = vadd.f32 %v854, 1.0
      %v856 = vrcp.pop %v855
      %v857 = vmul.f32 1.0, %v856
      %v858 = vmul.f32 %v850, %v837
      %v860 = vrot.slane %v297, 2
      %v862 = vadd.f32 %v860, %v858
      %v863 = vtanh.pop %v862
      %v864 = vsub.f32 1.0, %v857
      %v865 = vmul.f32 %v864, %v863
      %v866 = vmul.f32 %v857, %v293
      %v867 = vadd.f32 %v865, %v866
      %868 = vst [vmem:[#allocation2] sm:$0x3] %v582
      %869 = vst [vmem:[#allocation3] sm:$0x3] %v867
      %870 = vst [vmem:[%s7] sm:$0x3] %v582
      %p871 = scmp.lt.s32.totalorder %s19, 7
      %s872 = scalar_select %p871, %s19, 7
      %s873 = smul.addr %s872, 2
      %s874 = scalar_lea.vmem %s5, %s873
      %p875 = scmp.lt.s32.totalorder %s19, 7
      %s876 = scalar_select %p875, %s19, 7
      %s877 = smul.addr %s876, 2
      %s878 = scalar_lea.vmem %s6, %s877
      // Predicated region
      $region45: #{model1_forward.7} parent=39 // pred_check
        %p879 = pneg %p147
      $region46: #{model1_forward.7} parent=39 // pred_check_branch
        %881 = sbr.rel (%p879) target = $region48
      $region47: #{model1_forward.7} parent=39 // pred_region
        _
      $region48: #{model1_forward.7} parent=39 // pred_fallthru
        _
      // Predicated region
      $region49: #{model1_forward.7} parent=39 // pred_check
        %p882 = pneg %p173
      $region50: #{model1_forward.7} parent=39 // pred_check_branch
        %884 = sbr.rel (%p882) target = $region52
      $region51: #{model1_forward.7} parent=39 // pred_region
        _
      $region52: #{model1_forward.7} parent=39 // pred_fallthru
        _
      // Predicated region
      $region53: #{model1_forward.7} parent=39 // pred_check
        %p885 = pneg %p194
      $region54: #{model1_forward.7} parent=39 // pred_check_branch
        %887 = sbr.rel (%p885) target = $region56
      $region55: #{model1_forward.7} parent=39 // pred_region
        _
      $region56: #{model1_forward.7} parent=39 // pred_fallthru
        _
      // Predicated region
      $region57: #{model1_forward.7} parent=39 // pred_check
        %p888 = pneg %p194
      $region58: #{model1_forward.7} parent=39 // pred_check_branch
        %890 = sbr.rel (%p888) target = $region60
      $region59: #{model1_forward.7} parent=39 // pred_region
        _
      $region60: #{model1_forward.7} parent=39 // pred_fallthru
        _
    $region40: #{model1_forward.7} parent=5 // pred_fallthru
      _
    %p891 = scmp.le.s32.totalorder 2, %s14
    // Predicated region
    $region61: #{model1_forward.7} parent=5 // pred_check
      %p892 = pneg %p891
    $region62: #{model1_forward.7} parent=5 // pred_check_branch
      %894 = sbr.rel (%p892) target = $region64
    $region63: #{model1_forward.7} parent=5 // pred_region
      %s895 = ssub.s32 %s14, 2
      // Predicated region
      $region65: #{model1_forward.7} parent=63 // pred_check
        %p896 = pneg %p153
      $region66: #{model1_forward.7} parent=63 // pred_check_branch
        %898 = sbr.rel (%p896) target = $region68
      $region67: #{model1_forward.7} parent=63 // pred_region
        %p899 = scmp.lt.s32.totalorder %s20, 7
        %s900 = scalar_select %p899, %s20, 7
        %s901 = smul.addr %s900, 2
        %s902 = scalar_lea.vmem %s5, %s901
      $region68: #{model1_forward.7} parent=63 // pred_fallthru
        _
      // Predicated region
      $region69: #{model1_forward.7} parent=63 // pred_check
        %p903 = pneg %p179
      $region70: #{model1_forward.7} parent=63 // pred_check_branch
        %905 = sbr.rel (%p903) target = $region72
      $region71: #{model1_forward.7} parent=63 // pred_region
        %p906 = scmp.lt.s32.totalorder %s20, 7
        %s907 = scalar_select %p906, %s20, 7
        %s908 = smul.addr %s907, 2
        %s909 = scalar_lea.vmem %s6, %s908
      $region72: #{model1_forward.7} parent=63 // pred_fallthru
        _
    $region64: #{model1_forward.7} parent=5 // pred_fallthru
      _
  $region6: #{model1_forward.7} parent=0 // loop_footer
    %s18 = sadd.s32 1, %s14
  $region7: #{model1_forward.7} parent=0 // loop_footer_branch
    %13 = sbr.rel target = $region3
  $region8: #{model1_forward.7} parent=0 // loop_exit
    _

// kernel: model1_forward.8
$region0: #{model1_forward.8}
  #allocation0 [shape = 'u32[]', space=smem, size = 0x4, offset = 0x4, fixed_abs, tag = 'smem constant byte address 0x4 - core index']
  #allocation1 [shape = 'u32[144,128]{1,0:T(1,128)}', space=vmem, size = 0x12000, scoped, tag = 'internal scratch']
  %s0 = inlined_call_operand.vmem [shape: f32[16,269], index: 0, kind: input, shape index: {}]
  %s1 = inlined_call_operand.vmem [shape: bf16[269,269], index: 1, kind: input, shape index: {}]
  %s2 = inlined_call_operand.vmem [shape: f32[1,269], index: 2, kind: input, shape index: {}]
  %s3 = inlined_call_operand.vmem [shape: bf16[269,64], index: 3, kind: input, shape index: {}]
  %s4 = inlined_call_operand.vmem [shape: f32[1,64], index: 4, kind: input, shape index: {}]
  %s5 = inlined_call_operand.vmem [shape: bf16[64,64], index: 5, kind: input, shape index: {}]
  %s6 = inlined_call_operand.vmem [shape: f32[1,64], index: 6, kind: input, shape index: {}]
  %s7 = inlined_call_operand.vmem [shape: bf16[64,40], index: 7, kind: input, shape index: {}]
  %s8 = inlined_call_operand.vmem [shape: f32[1,40], index: 8, kind: input, shape index: {}]
  %s9 = inlined_call_operand.vmem [shape: f32[16,40], index: 9, kind: output, shape index: {}]
  %s10 = sld [smem:[#allocation0]]
  $region46: #{model1_forward.8} parent=0
    _
  %s12 = ssub.s32 1, %s10
  %s13 = scalar_select 0, %s12, %s10
  // Predicated region
  $region2: #{model1_forward.8} parent=0 // pred_check
    _
  $region3: #{model1_forward.8} parent=0 // pred_check_branch
    %15 = sbr.rel (0) target = $region5
  $region4: #{model1_forward.8} parent=0 // pred_region
    _
  $region5: #{model1_forward.8} parent=0 // pred_fallthru
    _
  // Predicated region
  $region6: #{model1_forward.8} parent=0 // pred_check
    _
  $region7: #{model1_forward.8} parent=0 // pred_check_branch
    %17 = sbr.rel (0) target = $region9
  $region8: #{model1_forward.8} parent=0 // pred_region
    _
  $region9: #{model1_forward.8} parent=0 // pred_fallthru
    _
  // Predicated region
  $region10: #{model1_forward.8} parent=0 // pred_check
    _
  $region11: #{model1_forward.8} parent=0 // pred_check_branch
    %19 = sbr.rel (0) target = $region13
  $region12: #{model1_forward.8} parent=0 // pred_region
    _
  $region13: #{model1_forward.8} parent=0 // pred_fallthru
    _
  // Predicated region
  $region14: #{model1_forward.8} parent=0 // pred_check
    _
  $region15: #{model1_forward.8} parent=0 // pred_check_branch
    %21 = sbr.rel (0) target = $region17
  $region16: #{model1_forward.8} parent=0 // pred_region
    _
  $region17: #{model1_forward.8} parent=0 // pred_fallthru
    _
  // Predicated region
  $region18: #{model1_forward.8} parent=0 // pred_check
    _
  $region19: #{model1_forward.8} parent=0 // pred_check_branch
    %23 = sbr.rel (0) target = $region21
  $region20: #{model1_forward.8} parent=0 // pred_region
    _
  $region21: #{model1_forward.8} parent=0 // pred_fallthru
    _
  // Predicated region
  $region22: #{model1_forward.8} parent=0 // pred_check
    _
  $region23: #{model1_forward.8} parent=0 // pred_check_branch
    %25 = sbr.rel (0) target = $region25
  $region24: #{model1_forward.8} parent=0 // pred_region
    _
  $region25: #{model1_forward.8} parent=0 // pred_fallthru
    _
  // Predicated region
  $region26: #{model1_forward.8} parent=0 // pred_check
    _
  $region27: #{model1_forward.8} parent=0 // pred_check_branch
    %27 = sbr.rel (0) target = $region29
  $region28: #{model1_forward.8} parent=0 // pred_region
    _
  $region29: #{model1_forward.8} parent=0 // pred_fallthru
    _
  // Predicated region
  $region30: #{model1_forward.8} parent=0 // pred_check
    _
  $region31: #{model1_forward.8} parent=0 // pred_check_branch
    %29 = sbr.rel (0) target = $region33
  $region32: #{model1_forward.8} parent=0 // pred_region
    _
  $region33: #{model1_forward.8} parent=0 // pred_fallthru
    _
  // Predicated region
  $region34: #{model1_forward.8} parent=0 // pred_check
    _
  $region35: #{model1_forward.8} parent=0 // pred_check_branch
    %31 = sbr.rel (0) target = $region37
  $region36: #{model1_forward.8} parent=0 // pred_region
    _
  $region37: #{model1_forward.8} parent=0 // pred_fallthru
    _
  %v33 = vld [vmem:[%s0] sm:$0xff]
  %v34 = vld [vmem:[%s0 + $0x8] sm:$0xff]
  %v35 = vld [vmem:[%s0 + $0x10] sm:$0xff]
  %v36 = vld [vmem:[%s0 + $0x18] sm:$0xff]
  %v37 = vld [vmem:[%s0 + $0x20] sm:$0xff]
  %v38 = vld [vmem:[%s0 + $0x28] sm:$0xff]
  %v39 = vmax.f32 %v33, 0.0
  %v40 = vmax.f32 %v34, 0.0
  %v41 = vmax.f32 %v35, 0.0
  %v42 = vmax.f32 %v36, 0.0
  %v43 = vmax.f32 %v37, 0.0
  %v44 = vmax.f32 %v38, 0.0
  %v45 = vpack.c.bf16 %v42, %v39
  %v46 = vpack.c.bf16 %v43, %v40
  %v47 = vpack.c.bf16 %v44, %v41
  %v48 = vld [vmem:[%s1] sm:$0xff]
  %v49 = vld [vmem:[%s1 + $0x8] sm:$0xf]
  %v50 = vld [vmem:[%s1 + $0xc] sm:$0xff]
  %v51 = vld [vmem:[%s1 + $0x14] sm:$0xf]
  %v52 = vld [vmem:[%s1 + $0x18] sm:$0xff]
  %v53 = vld [vmem:[%s1 + $0x20] sm:$0xf]
  %v54 = vld [vmem:[%s1 + $0x24] sm:$0xff]
  %v55 = vld [vmem:[%s1 + $0x2c] sm:$0xf]
  %v56 = vld [vmem:[%s1 + $0x30] sm:$0xff]
  %v57 = vld [vmem:[%s1 + $0x38] sm:$0xf]
  %v58 = vld [vmem:[%s1 + $0x3c] sm:$0xff]
  %v59 = vld [vmem:[%s1 + $0x44] sm:$0xf]
  %v60 = vld [vmem:[%s1 + $0x48] sm:$0xff]
  %v61 = vld [vmem:[%s1 + $0x50] sm:$0xf]
  %v62 = vld [vmem:[%s1 + $0x54] sm:$0xff]
  %v63 = vld [vmem:[%s1 + $0x5c] sm:$0xf]
  %v64 = vld [vmem:[%s1 + $0x60] sm:$0xff]
  %v65 = vld [vmem:[%s1 + $0x68] sm:$0xf]
  %v66 = vld [vmem:[%s1 + $0x6c] sm:$0xff]
  %v67 = vld [vmem:[%s1 + $0x74] sm:$0xf]
  %v68 = vld [vmem:[%s1 + $0x78] sm:$0xff]
  %v69 = vld [vmem:[%s1 + $0x80] sm:$0xf]
  %v70 = vld [vmem:[%s1 + $0x84] sm:$0xff]
  %v71 = vld [vmem:[%s1 + $0x8c] sm:$0xf]
  %v72 = vld [vmem:[%s1 + $0x90] sm:$0xff]
  %v73 = vld [vmem:[%s1 + $0x98] sm:$0xf]
  %v74 = vld [vmem:[%s1 + $0x9c] sm:$0xff]
  %v75 = vld [vmem:[%s1 + $0xa4] sm:$0xf]
  %v76 = vld [vmem:[%s1 + $0xa8] sm:$0xff]
  %v77 = vld [vmem:[%s1 + $0xb0] sm:$0xf]
  %v78 = vld [vmem:[%s1 + $0xb4] sm:$0xff]
  %v79 = vld [vmem:[%s1 + $0xbc] sm:$0xf]
  %v80 = vld [vmem:[%s1 + $0xc0] sm:$0xff]
  %v81 = vld [vmem:[%s1 + $0xc8] sm:$0xf]
  %v82 = vld [vmem:[%s1 + $0xcc] sm:$0xff]
  %v83 = vld [vmem:[%s1 + $0xd4] sm:$0xf]
  %v84 = vld [vmem:[%s1 + $0xd8] sm:$0xff]
  %v85 = vld [vmem:[%s1 + $0xe0] sm:$0xf]
  %v86 = vld [vmem:[%s1 + $0xe4] sm:$0xff]
  %v87 = vld [vmem:[%s1 + $0xec] sm:$0xf]
  %v88 = vld [vmem:[%s1 + $0xf0] sm:$0xff]
  %v89 = vld [vmem:[%s1 + $0xf8] sm:$0xf]
  %v90 = vld [vmem:[%s1 + $0xfc] sm:$0xff]
  %v91 = vld [vmem:[%s1 + $0x104] sm:$0xf]
  %v92 = vld [vmem:[%s1 + $0x108] sm:$0xff]
  %v93 = vld [vmem:[%s1 + $0x110] sm:$0xf]
  %v94 = vld [vmem:[%s1 + $0x114] sm:$0xff]
  %v95 = vld [vmem:[%s1 + $0x11c] sm:$0xf]
  %v96 = vld [vmem:[%s1 + $0x120] sm:$0xff]
  %v97 = vld [vmem:[%s1 + $0x128] sm:$0xf]
  %v98 = vld [vmem:[%s1 + $0x12c] sm:$0xff]
  %v99 = vld [vmem:[%s1 + $0x134] sm:$0xf]
  %v100 = vld [vmem:[%s1 + $0x138] sm:$0xff]
  %v101 = vld [vmem:[%s1 + $0x140] sm:$0xf]
  %v102 = vld [vmem:[%s1 + $0x144] sm:$0xff]
  %v103 = vld [vmem:[%s1 + $0x14c] sm:$0xf]
  %v104 = vld [vmem:[%s1 + $0x150] sm:$0xff]
  %v105 = vld [vmem:[%s1 + $0x158] sm:$0xf]
  %v106 = vld [vmem:[%s1 + $0x15c] sm:$0xff]
  %v107 = vld [vmem:[%s1 + $0x164] sm:$0xf]
  %v108 = vld [vmem:[%s1 + $0x168] sm:$0xff]
  %v109 = vld [vmem:[%s1 + $0x170] sm:$0xf]
  %v110 = vld [vmem:[%s1 + $0x174] sm:$0xff]
  %v111 = vld [vmem:[%s1 + $0x17c] sm:$0xf]
  %v112 = vld [vmem:[%s1 + $0x180] sm:$0xff]
  %v113 = vld [vmem:[%s1 + $0x188] sm:$0xf]
  %v114 = vld [vmem:[%s1 + $0x18c] sm:$0x77]
  %v115 = vld [vmem:[%s1 + $0x194] sm:$0x7]
  %v116 = vld [vmem:[%s2] sm:$0x7]
  %v118 = vlaneseq
  %v119 = vshrl.u32 %v118, 7
  %v120 = vsub.s32 0, %v119
  %v121 = vrot.slane %v116, %v120
  %v122 = vlaneseq
  %v123 = vshrl.u32 %v122, 7
  %v124 = vsub.s32 1, %v123
  %v125 = vrot.slane %v116, %v124
  %v126 = vlaneseq
  %v127 = vshrl.u32 %v126, 7
  %v128 = vsub.s32 2, %v127
  %v129 = vrot.slane %v116, %v128
  %v201 = vunpack.c.l.b16 %v48
  %v202 = vunpack.c.h.b16 %v48
  %v203 = vunpack.c.l.b16 %v49
  %v204 = vunpack.c.l.b16 %v50
  %v205 = vunpack.c.h.b16 %v50
  %v206 = vunpack.c.l.b16 %v51
  %v207 = vunpack.c.l.b16 %v52
  %v208 = vunpack.c.h.b16 %v52
  %v209 = vunpack.c.l.b16 %v53
  %v210 = vunpack.c.l.b16 %v54
  %v211 = vunpack.c.h.b16 %v54
  %v212 = vunpack.c.l.b16 %v55
  %v213 = vunpack.c.l.b16 %v56
  %v214 = vunpack.c.h.b16 %v56
  %v215 = vunpack.c.l.b16 %v57
  %v216 = vunpack.c.l.b16 %v58
  %v217 = vunpack.c.h.b16 %v58
  %v218 = vunpack.c.l.b16 %v59
  %v219 = vunpack.c.l.b16 %v60
  %v220 = vunpack.c.h.b16 %v60
  %v221 = vunpack.c.l.b16 %v61
  %v222 = vunpack.c.l.b16 %v62
  %v223 = vunpack.c.h.b16 %v62
  %v224 = vunpack.c.l.b16 %v63
  %v225 = vunpack.c.l.b16 %v64
  %v226 = vunpack.c.h.b16 %v64
  %v227 = vunpack.c.l.b16 %v65
  %v228 = vunpack.c.l.b16 %v66
  %v229 = vunpack.c.h.b16 %v66
  %v230 = vunpack.c.l.b16 %v67
  %v231 = vunpack.c.l.b16 %v68
  %v232 = vunpack.c.h.b16 %v68
  %v233 = vunpack.c.l.b16 %v69
  %v234 = vunpack.c.l.b16 %v70
  %v235 = vunpack.c.h.b16 %v70
  %v236 = vunpack.c.l.b16 %v71
  %v237 = vunpack.c.l.b16 %v72
  %v238 = vunpack.c.h.b16 %v72
  %v239 = vunpack.c.l.b16 %v73
  %v240 = vunpack.c.l.b16 %v74
  %v241 = vunpack.c.h.b16 %v74
  %v242 = vunpack.c.l.b16 %v75
  %v243 = vunpack.c.l.b16 %v76
  %v244 = vunpack.c.h.b16 %v76
  %v245 = vunpack.c.l.b16 %v77
  %v246 = vunpack.c.l.b16 %v78
  %v247 = vunpack.c.h.b16 %v78
  %v248 = vunpack.c.l.b16 %v79
  %v249 = vunpack.c.l.b16 %v80
  %v250 = vunpack.c.h.b16 %v80
  %v251 = vunpack.c.l.b16 %v81
  %v252 = vunpack.c.l.b16 %v82
  %v253 = vunpack.c.h.b16 %v82
  %v254 = vunpack.c.l.b16 %v83
  %v255 = vunpack.c.l.b16 %v84
  %v256 = vunpack.c.h.b16 %v84
  %v257 = vunpack.c.l.b16 %v85
  %v258 = vunpack.c.l.b16 %v86
  %v259 = vunpack.c.h.b16 %v86
  %v260 = vunpack.c.l.b16 %v87
  %v261 = vunpack.c.l.b16 %v88
  %v262 = vunpack.c.h.b16 %v88
  %v263 = vunpack.c.l.b16 %v89
  %v264 = vunpack.c.l.b16 %v90
  %v265 = vunpack.c.h.b16 %v90
  %v266 = vunpack.c.l.b16 %v91
  %v267 = vunpack.c.l.b16 %v92
  %v268 = vunpack.c.h.b16 %v92
  %v269 = vunpack.c.l.b16 %v93
  %v270 = vunpack.c.l.b16 %v94
  %v271 = vunpack.c.h.b16 %v94
  %v272 = vunpack.c.l.b16 %v95
  %v273 = vunpack.c.l.b16 %v96
  %v274 = vunpack.c.h.b16 %v96
  %v275 = vunpack.c.l.b16 %v97
  %v276 = vunpack.c.l.b16 %v98
  %v277 = vunpack.c.h.b16 %v98
  %v278 = vunpack.c.l.b16 %v99
  %v279 = vunpack.c.l.b16 %v100
  %v280 = vunpack.c.h.b16 %v100
  %v281 = vunpack.c.l.b16 %v101
  %v282 = vunpack.c.l.b16 %v102
  %v283 = vunpack.c.h.b16 %v102
  %v284 = vunpack.c.l.b16 %v103
  %v285 = vunpack.c.l.b16 %v104
  %v286 = vunpack.c.h.b16 %v104
  %v287 = vunpack.c.l.b16 %v105
  %v288 = vunpack.c.l.b16 %v106
  %v289 = vunpack.c.h.b16 %v106
  %v290 = vunpack.c.l.b16 %v107
  %v291 = vunpack.c.l.b16 %v108
  %v292 = vunpack.c.h.b16 %v108
  %v293 = vunpack.c.l.b16 %v109
  %v294 = vunpack.c.l.b16 %v110
  %v295 = vunpack.c.h.b16 %v110
  %v296 = vunpack.c.l.b16 %v111
  %v297 = vunpack.c.l.b16 %v112
  %v298 = vunpack.c.h.b16 %v112
  %v299 = vunpack.c.l.b16 %v113
  %v300 = vunpack.c.l.b16 %v114
  %v301 = vunpack.c.h.b16 %v114
  %v302 = vunpack.c.l.b16 %v115
  %v303 = vpack.c.b16 %v204, %v201
  %v304 = vpack.c.b16 %v205, %v202
  %v305 = vpack.c.b16 %v206, %v203
  %v306 = vpack.c.b16 %v210, %v207
  %v307 = vpack.c.b16 %v211, %v208
  %v308 = vpack.c.b16 %v212, %v209
  %v309 = vpack.c.b16 %v216, %v213
  %v310 = vpack.c.b16 %v217, %v214
  %v311 = vpack.c.b16 %v218, %v215
  %v312 = vpack.c.b16 %v222, %v219
  %v313 = vpack.c.b16 %v223, %v220
  %v314 = vpack.c.b16 %v224, %v221
  %v315 = vpack.c.b16 %v228, %v225
  %v316 = vpack.c.b16 %v229, %v226
  %v317 = vpack.c.b16 %v230, %v227
  %v318 = vpack.c.b16 %v234, %v231
  %v319 = vpack.c.b16 %v235, %v232
  %v320 = vpack.c.b16 %v236, %v233
  %v321 = vpack.c.b16 %v240, %v237
  %v322 = vpack.c.b16 %v241, %v238
  %v323 = vpack.c.b16 %v242, %v239
  %v324 = vpack.c.b16 %v246, %v243
  %v325 = vpack.c.b16 %v247, %v244
  %v326 = vpack.c.b16 %v248, %v245
  %v327 = vpack.c.b16 %v252, %v249
  %v328 = vpack.c.b16 %v253, %v250
  %v329 = vpack.c.b16 %v254, %v251
  %v330 = vpack.c.b16 %v258, %v255
  %v331 = vpack.c.b16 %v259, %v256
  %v332 = vpack.c.b16 %v260, %v257
  %v333 = vpack.c.b16 %v264, %v261
  %v334 = vpack.c.b16 %v265, %v262
  %v335 = vpack.c.b16 %v266, %v263
  %v336 = vpack.c.b16 %v270, %v267
  %v337 = vpack.c.b16 %v271, %v268
  %v338 = vpack.c.b16 %v272, %v269
  %v339 = vpack.c.b16 %v276, %v273
  %v340 = vpack.c.b16 %v277, %v274
  %v341 = vpack.c.b16 %v278, %v275
  %v342 = vpack.c.b16 %v282, %v279
  %v343 = vpack.c.b16 %v283, %v280
  %v344 = vpack.c.b16 %v284, %v281
  %v345 = vpack.c.b16 %v288, %v285
  %v346 = vpack.c.b16 %v289, %v286
  %v347 = vpack.c.b16 %v290, %v287
  %v348 = vpack.c.b16 %v294, %v291
  %v349 = vpack.c.b16 %v295, %v292
  %v350 = vpack.c.b16 %v296, %v293
  %v351 = vpack.c.b16 %v300, %v297
  %v352 = vpack.c.b16 %v301, %v298
  %v353 = vpack.c.b16 %v302, %v299
  %vm402 = vcmask 105472
  %v404 = vsel %vm402, %v47, 0
  %vm406 = vcmask 1045504
  %vm407 = vcmask 1046528
  %v408 = vsel %vm406, 4294967295, 65535
  %v409 = vsel %vm407, %v408, 0
  %v411 = vand.u32 %v351, %v409
  %v414 = vand.u32 %v352, %v409
  %v417 = vand.u32 %v353, %v409
  %419 = vmatprep.subr.bf16.mxu0 %v325
  %420 = vmatpush1.bf16.msra.mxu0 %v324
  %421 = vmatprep.subr.bf16.mxu0 %v322
  %422 = vmatpush1.bf16.msra.mxu0 %v321
  %423 = vmatprep.subr.bf16.mxu0 %v319
  %424 = vmatpush1.bf16.msra.mxu0 %v318
  %425 = vmatprep.subr.bf16.mxu0 %v316
  %426 = vmatpush1.bf16.msra.mxu0 %v315
  %427 = vmatprep.subr.bf16.mxu0 %v313
  %428 = vmatpush1.bf16.msra.mxu0 %v312
  %429 = vmatprep.subr.bf16.mxu0 %v310
  %430 = vmatpush1.bf16.msra.mxu0 %v309
  %431 = vmatprep.subr.bf16.mxu0 %v307
  %432 = vmatpush1.bf16.msra.mxu0 %v306
  %433 = vmatprep.subr.bf16.mxu0 %v304
  %434 = vmatpush1.bf16.msra.mxu0 %v303
  %435 = vmatprep.subr.bf16.mxu0 %v349
  %436 = vmatpush2.bf16.msra.mxu0 %v348
  %437 = vmatprep.subr.bf16.mxu0 %v346
  %438 = vmatpush2.bf16.msra.mxu0 %v345
  %439 = vmatprep.subr.bf16.mxu0 %v343
  %440 = vmatpush2.bf16.msra.mxu0 %v342
  %441 = vmatprep.subr.bf16.mxu0 %v340
  %442 = vmatpush2.bf16.msra.mxu0 %v339
  %443 = vmatprep.subr.bf16.mxu0 %v337
  %444 = vmatpush2.bf16.msra.mxu0 %v336
  %445 = vmatprep.subr.bf16.mxu0 %v334
  %446 = vmatpush2.bf16.msra.mxu0 %v333
  %447 = vmatprep.subr.bf16.mxu0 %v331
  %448 = vmatpush2.bf16.msra.mxu0 %v330
  %449 = vmatprep.subr.bf16.mxu0 %v328
  %450 = vmatpush2.bf16.msra.mxu0 %v327
  %451 = vmatprep.mubr.bf16.mxu0 %v46
  %452 = vmatmul.mubr.bf16.gmra.mxu0 %v45
  %v453 = vpop.f32.mrf.mxu0
  %v454 = vadd.f32 %v121, %v453
  %v455 = vpop.f32.mrf.mxu0
  %v456 = vadd.f32 %v125, %v455
  %v457 = vpop.f32.mrf.mxu0
  %v458 = vadd.f32 %v121, %v457
  %v459 = vpop.f32.mrf.mxu0
  %v460 = vadd.f32 %v125, %v459
  %461 = vdwg.mxu0
  %462 = vmatprep.subr.bf16.mxu0 0
  %463 = vmatpush1.bf16.msra.mxu0 0
  %464 = vmatprep.subr.bf16.mxu0 0
  %465 = vmatpush1.bf16.msra.mxu0 0
  %466 = vmatprep.subr.bf16.mxu0 0
  %467 = vmatpush1.bf16.msra.mxu0 0
  %468 = vmatprep.subr.bf16.mxu0 0
  %469 = vmatpush1.bf16.msra.mxu0 0
  %470 = vmatprep.subr.bf16.mxu0 0
  %471 = vmatpush1.bf16.msra.mxu0 0
  %472 = vmatprep.subr.bf16.mxu0 0
  %473 = vmatpush1.bf16.msra.mxu0 0
  %474 = vmatprep.subr.bf16.mxu0 0
  %475 = vmatpush1.bf16.msra.mxu0 0
  %476 = vmatprep.subr.bf16.mxu0 %v414
  %477 = vmatpush1.bf16.msra.mxu0 %v411
  %478 = vmatprep.subr.bf16.mxu0 0
  %479 = vmatpush2.bf16.msra.mxu0 0
  %480 = vmatprep.subr.bf16.mxu0 0
  %481 = vmatpush2.bf16.msra.mxu0 0
  %482 = vmatprep.subr.bf16.mxu0 0
  %483 = vmatpush2.bf16.msra.mxu0 0
  %484 = vmatprep.subr.bf16.mxu0 0
  %485 = vmatpush2.bf16.msra.mxu0 0
  %486 = vmatprep.subr.bf16.mxu0 0
  %487 = vmatpush2.bf16.msra.mxu0 0
  %488 = vmatprep.subr.bf16.mxu0 0
  %489 = vmatpush2.bf16.msra.mxu0 0
  %490 = vmatprep.subr.bf16.mxu0 0
  %491 = vmatpush2.bf16.msra.mxu0 0
  %492 = vmatprep.subr.bf16.mxu0 0
  %493 = vmatpush2.bf16.msra.mxu0 0
  %494 = vmatprep.mubr.bf16.mxu0 0
  %495 = vmatmul.mubr.bf16.gmra.mxu0 %v404
  %v496 = vpop.f32.mrf.mxu0
  %v497 = vadd.f32 %v454, %v496
  %v498 = vpop.f32.mrf.mxu0
  %v499 = vadd.f32 %v456, %v498
  %v500 = vpop.f32.mrf.mxu0
  %v501 = vadd.f32 %v458, %v500
  %v502 = vpop.f32.mrf.mxu0
  %v503 = vadd.f32 %v460, %v502
  %504 = vdwg.mxu0
  %505 = vmatprep.subr.bf16.mxu0 0
  %506 = vmatpush1.bf16.msra.mxu0 %v326
  %507 = vmatprep.subr.bf16.mxu0 0
  %508 = vmatpush1.bf16.msra.mxu0 %v323
  %509 = vmatprep.subr.bf16.mxu0 0
  %510 = vmatpush1.bf16.msra.mxu0 %v320
  %511 = vmatprep.subr.bf16.mxu0 0
  %512 = vmatpush1.bf16.msra.mxu0 %v317
  %513 = vmatprep.subr.bf16.mxu0 0
  %514 = vmatpush1.bf16.msra.mxu0 %v314
  %515 = vmatprep.subr.bf16.mxu0 0
  %516 = vmatpush1.bf16.msra.mxu0 %v311
  %517 = vmatprep.subr.bf16.mxu0 0
  %518 = vmatpush1.bf16.msra.mxu0 %v308
  %519 = vmatprep.subr.bf16.mxu0 0
  %520 = vmatpush1.bf16.msra.mxu0 %v305
  %521 = vmatprep.subr.bf16.mxu0 0
  %522 = vmatpush2.bf16.msra.mxu0 %v350
  %523 = vmatprep.subr.bf16.mxu0 0
  %524 = vmatpush2.bf16.msra.mxu0 %v347
  %525 = vmatprep.subr.bf16.mxu0 0
  %526 = vmatpush2.bf16.msra.mxu0 %v344
  %527 = vmatprep.subr.bf16.mxu0 0
  %528 = vmatpush2.bf16.msra.mxu0 %v341
  %529 = vmatprep.subr.bf16.mxu0 0
  %530 = vmatpush2.bf16.msra.mxu0 %v338
  %531 = vmatprep.subr.bf16.mxu0 0
  %532 = vmatpush2.bf16.msra.mxu0 %v335
  %533 = vmatprep.subr.bf16.mxu0 0
  %534 = vmatpush2.bf16.msra.mxu0 %v332
  %535 = vmatprep.subr.bf16.mxu0 0
  %536 = vmatpush2.bf16.msra.mxu0 %v329
  %537 = vmatprep.mubr.bf16.mxu0 %v46
  %538 = vmatmul.mubr.bf16.gmra.mxu0 %v45
  %v539 = vpop.f32.mrf.mxu0
  %v540 = vadd.f32 %v129, %v539
  %v541 = vpop.f32.mrf.mxu0
  %v542 = vpop.f32.mrf.mxu0
  %v543 = vadd.f32 %v129, %v542
  %v544 = vpop.f32.mrf.mxu0
  %545 = vdwg.mxu0
  %546 = vmatprep.subr.bf16.mxu0 0
  %547 = vmatpush1.bf16.msra.mxu0 0
  %548 = vmatprep.subr.bf16.mxu0 0
  %549 = vmatpush1.bf16.msra.mxu0 0
  %550 = vmatprep.subr.bf16.mxu0 0
  %551 = vmatpush1.bf16.msra.mxu0 0
  %552 = vmatprep.subr.bf16.mxu0 0
  %553 = vmatpush1.bf16.msra.mxu0 0
  %554 = vmatprep.subr.bf16.mxu0 0
  %555 = vmatpush1.bf16.msra.mxu0 0
  %556 = vmatprep.subr.bf16.mxu0 0
  %557 = vmatpush1.bf16.msra.mxu0 0
  %558 = vmatprep.subr.bf16.mxu0 0
  %559 = vmatpush1.bf16.msra.mxu0 0
  %560 = vmatprep.subr.bf16.mxu0 0
  %561 = vmatpush1.bf16.msra.mxu0 %v417
  %562 = vmatprep.subr.bf16.mxu0 0
  %563 = vmatpush2.bf16.msra.mxu0 0
  %564 = vmatprep.subr.bf16.mxu0 0
  %565 = vmatpush2.bf16.msra.mxu0 0
  %566 = vmatprep.subr.bf16.mxu0 0
  %567 = vmatpush2.bf16.msra.mxu0 0
  %568 = vmatprep.subr.bf16.mxu0 0
  %569 = vmatpush2.bf16.msra.mxu0 0
  %570 = vmatprep.subr.bf16.mxu0 0
  %571 = vmatpush2.bf16.msra.mxu0 0
  %572 = vmatprep.subr.bf16.mxu0 0
  %573 = vmatpush2.bf16.msra.mxu0 0
  %574 = vmatprep.subr.bf16.mxu0 0
  %575 = vmatpush2.bf16.msra.mxu0 0
  %576 = vmatprep.subr.bf16.mxu0 0
  %577 = vmatpush2.bf16.msra.mxu0 0
  %578 = vmatprep.mubr.bf16.mxu0 0
  %579 = vmatmul.mubr.bf16.gmra.mxu0 %v404
  %v580 = vpop.f32.mrf.mxu0
  %v581 = vadd.f32 %v540, %v580
  %v582 = vpop.f32.mrf.mxu0
  %v583 = vpop.f32.mrf.mxu0
  %v584 = vadd.f32 %v543, %v583
  %v585 = vpop.f32.mrf.mxu0
  %586 = vdwg.mxu0
  %v587 = vmax.f32 %v497, 0.0
  %v588 = vmax.f32 %v499, 0.0
  %v589 = vmax.f32 %v581, 0.0
  %v590 = vmax.f32 %v501, 0.0
  %v591 = vmax.f32 %v503, 0.0
  %v592 = vmax.f32 %v584, 0.0
  %v593 = vpack.c.bf16 %v590, %v587
  %v594 = vpack.c.bf16 %v591, %v588
  %v595 = vpack.c.bf16 %v592, %v589
  %v596 = vld [vmem:[%s3] sm:$0xf]
  %v597 = vld [vmem:[%s3 + $0x4] sm:$0xf]
  %v598 = vld [vmem:[%s3 + $0x8] sm:$0xf]
  %v599 = vld [vmem:[%s3 + $0xc] sm:$0xf]
  %v600 = vld [vmem:[%s3 + $0x10] sm:$0xf]
  %v601 = vld [vmem:[%s3 + $0x14] sm:$0xf]
  %v602 = vld [vmem:[%s3 + $0x18] sm:$0xf]
  %v603 = vld [vmem:[%s3 + $0x1c] sm:$0xf]
  %v604 = vld [vmem:[%s3 + $0x20] sm:$0xf]
  %v605 = vld [vmem:[%s3 + $0x24] sm:$0xf]
  %v606 = vld [vmem:[%s3 + $0x28] sm:$0xf]
  %v607 = vld [vmem:[%s3 + $0x2c] sm:$0xf]
  %v608 = vld [vmem:[%s3 + $0x30] sm:$0xf]
  %v609 = vld [vmem:[%s3 + $0x34] sm:$0xf]
  %v610 = vld [vmem:[%s3 + $0x38] sm:$0xf]
  %v611 = vld [vmem:[%s3 + $0x3c] sm:$0xf]
  %v612 = vld [vmem:[%s3 + $0x40] sm:$0xf]
  %v613 = vld [vmem:[%s3 + $0x44] sm:$0xf]
  %v614 = vld [vmem:[%s3 + $0x48] sm:$0xf]
  %v615 = vld [vmem:[%s3 + $0x4c] sm:$0xf]
  %v616 = vld [vmem:[%s3 + $0x50] sm:$0xf]
  %v617 = vld [vmem:[%s3 + $0x54] sm:$0xf]
  %v618 = vld [vmem:[%s3 + $0x58] sm:$0xf]
  %v619 = vld [vmem:[%s3 + $0x5c] sm:$0xf]
  %v620 = vld [vmem:[%s3 + $0x60] sm:$0xf]
  %v621 = vld [vmem:[%s3 + $0x64] sm:$0xf]
  %v622 = vld [vmem:[%s3 + $0x68] sm:$0xf]
  %v623 = vld [vmem:[%s3 + $0x6c] sm:$0xf]
  %v624 = vld [vmem:[%s3 + $0x70] sm:$0xf]
  %v625 = vld [vmem:[%s3 + $0x74] sm:$0xf]
  %v626 = vld [vmem:[%s3 + $0x78] sm:$0xf]
  %v627 = vld [vmem:[%s3 + $0x7c] sm:$0xf]
  %v628 = vld [vmem:[%s3 + $0x80] sm:$0xf]
  %v629 = vld [vmem:[%s3 + $0x84] sm:$0x7]
  %v630 = vld [vmem:[%s4] sm:$0x1]
  %v632 = vlaneseq
  %v633 = vshrl.u32 %v632, 7
  %v634 = vsub.s32 0, %v633
  %v635 = vrot.slane %v630, %v634
  %v671 = vunpack.c.l.b16 %v596
  %v672 = vunpack.c.l.b16 %v597
  %v673 = vunpack.c.l.b16 %v598
  %v674 = vunpack.c.l.b16 %v599
  %v675 = vunpack.c.l.b16 %v600
  %v676 = vunpack.c.l.b16 %v601
  %v677 = vunpack.c.l.b16 %v602
  %v678 = vunpack.c.l.b16 %v603
  %v679 = vunpack.c.l.b16 %v604
  %v680 = vunpack.c.l.b16 %v605
  %v681 = vunpack.c.l.b16 %v606
  %v682 = vunpack.c.l.b16 %v607
  %v683 = vunpack.c.l.b16 %v608
  %v684 = vunpack.c.l.b16 %v609
  %v685 = vunpack.c.l.b16 %v610
  %v686 = vunpack.c.l.b16 %v611
  %v687 = vunpack.c.l.b16 %v612
  %v688 = vunpack.c.l.b16 %v613
  %v689 = vunpack.c.l.b16 %v614
  %v690 = vunpack.c.l.b16 %v615
  %v691 = vunpack.c.l.b16 %v616
  %v692 = vunpack.c.l.b16 %v617
  %v693 = vunpack.c.l.b16 %v618
  %v694 = vunpack.c.l.b16 %v619
  %v695 = vunpack.c.l.b16 %v620
  %v696 = vunpack.c.l.b16 %v621
  %v697 = vunpack.c.l.b16 %v622
  %v698 = vunpack.c.l.b16 %v623
  %v699 = vunpack.c.l.b16 %v624
  %v700 = vunpack.c.l.b16 %v625
  %v701 = vunpack.c.l.b16 %v626
  %v702 = vunpack.c.l.b16 %v627
  %v703 = vunpack.c.l.b16 %v628
  %v704 = vunpack.c.l.b16 %v629
  %v705 = vpack.c.b16 %v672, %v671
  %v706 = vpack.c.b16 %v674, %v673
  %v707 = vpack.c.b16 %v676, %v675
  %v708 = vpack.c.b16 %v678, %v677
  %v709 = vpack.c.b16 %v680, %v679
  %v710 = vpack.c.b16 %v682, %v681
  %v711 = vpack.c.b16 %v684, %v683
  %v712 = vpack.c.b16 %v686, %v685
  %v713 = vpack.c.b16 %v688, %v687
  %v714 = vpack.c.b16 %v690, %v689
  %v715 = vpack.c.b16 %v692, %v691
  %v716 = vpack.c.b16 %v694, %v693
  %v717 = vpack.c.b16 %v696, %v695
  %v718 = vpack.c.b16 %v698, %v697
  %v719 = vpack.c.b16 %v700, %v699
  %v720 = vpack.c.b16 %v702, %v701
  %v721 = vpack.c.b16 %v704, %v703
  %v739 = vsel %vm402, %v595, 0
  %v742 = vand.u32 %v721, %v409
  %744 = vmatprep.subr.bf16.mxu0 0
  %745 = vmatpush1.bf16.msra.mxu0 %v712
  %746 = vmatprep.subr.bf16.mxu0 0
  %747 = vmatpush1.bf16.msra.mxu0 %v711
  %748 = vmatprep.subr.bf16.mxu0 0
  %749 = vmatpush1.bf16.msra.mxu0 %v710
  %750 = vmatprep.subr.bf16.mxu0 0
  %751 = vmatpush1.bf16.msra.mxu0 %v709
  %752 = vmatprep.subr.bf16.mxu0 0
  %753 = vmatpush1.bf16.msra.mxu0 %v708
  %754 = vmatprep.subr.bf16.mxu0 0
  %755 = vmatpush1.bf16.msra.mxu0 %v707
  %756 = vmatprep.subr.bf16.mxu0 0
  %757 = vmatpush1.bf16.msra.mxu0 %v706
  %758 = vmatprep.subr.bf16.mxu0 0
  %759 = vmatpush1.bf16.msra.mxu0 %v705
  %760 = vmatprep.subr.bf16.mxu0 0
  %761 = vmatpush2.bf16.msra.mxu0 %v720
  %762 = vmatprep.subr.bf16.mxu0 0
  %763 = vmatpush2.bf16.msra.mxu0 %v719
  %764 = vmatprep.subr.bf16.mxu0 0
  %765 = vmatpush2.bf16.msra.mxu0 %v718
  %766 = vmatprep.subr.bf16.mxu0 0
  %767 = vmatpush2.bf16.msra.mxu0 %v717
  %768 = vmatprep.subr.bf16.mxu0 0
  %769 = vmatpush2.bf16.msra.mxu0 %v716
  %770 = vmatprep.subr.bf16.mxu0 0
  %771 = vmatpush2.bf16.msra.mxu0 %v715
  %772 = vmatprep.subr.bf16.mxu0 0
  %773 = vmatpush2.bf16.msra.mxu0 %v714
  %774 = vmatprep.subr.bf16.mxu0 0
  %775 = vmatpush2.bf16.msra.mxu0 %v713
  %776 = vmatprep.mubr.bf16.mxu0 %v594
  %777 = vmatmul.mubr.bf16.gmra.mxu0 %v593
  %v778 = vpop.f32.mrf.mxu0
  %v779 = vadd.f32 %v635, %v778
  %v780 = vpop.f32.mrf.mxu0
  %v781 = vpop.f32.mrf.mxu0
  %v782 = vadd.f32 %v635, %v781
  %v783 = vpop.f32.mrf.mxu0
  %784 = vdwg.mxu0
  %785 = vmatprep.subr.bf16.mxu0 0
  %786 = vmatpush1.bf16.msra.mxu0 0
  %787 = vmatprep.subr.bf16.mxu0 0
  %788 = vmatpush1.bf16.msra.mxu0 0
  %789 = vmatprep.subr.bf16.mxu0 0
  %790 = vmatpush1.bf16.msra.mxu0 0
  %791 = vmatprep.subr.bf16.mxu0 0
  %792 = vmatpush1.bf16.msra.mxu0 0
  %793 = vmatprep.subr.bf16.mxu0 0
  %794 = vmatpush1.bf16.msra.mxu0 0
  %795 = vmatprep.subr.bf16.mxu0 0
  %796 = vmatpush1.bf16.msra.mxu0 0
  %797 = vmatprep.subr.bf16.mxu0 0
  %798 = vmatpush1.bf16.msra.mxu0 0
  %799 = vmatprep.subr.bf16.mxu0 0
  %800 = vmatpush1.bf16.msra.mxu0 %v742
  %801 = vmatprep.subr.bf16.mxu0 0
  %802 = vmatpush2.bf16.msra.mxu0 0
  %803 = vmatprep.subr.bf16.mxu0 0
  %804 = vmatpush2.bf16.msra.mxu0 0
  %805 = vmatprep.subr.bf16.mxu0 0
  %806 = vmatpush2.bf16.msra.mxu0 0
  %807 = vmatprep.subr.bf16.mxu0 0
  %808 = vmatpush2.bf16.msra.mxu0 0
  %809 = vmatprep.subr.bf16.mxu0 0
  %810 = vmatpush2.bf16.msra.mxu0 0
  %811 = vmatprep.subr.bf16.mxu0 0
  %812 = vmatpush2.bf16.msra.mxu0 0
  %813 = vmatprep.subr.bf16.mxu0 0
  %814 = vmatpush2.bf16.msra.mxu0 0
  %815 = vmatprep.subr.bf16.mxu0 0
  %816 = vmatpush2.bf16.msra.mxu0 0
  %817 = vmatprep.mubr.bf16.mxu0 0
  %818 = vmatmul.mubr.bf16.gmra.mxu0 %v739
  %v819 = vpop.f32.mrf.mxu0
  %v820 = vadd.f32 %v779, %v819
  %v821 = vpop.f32.mrf.mxu0
  %v822 = vpop.f32.mrf.mxu0
  %v823 = vadd.f32 %v782, %v822
  %v824 = vpop.f32.mrf.mxu0
  %825 = vdwg.mxu0
  %v826 = vmax.f32 %v820, 0.0
  %v827 = vmax.f32 %v823, 0.0
  %v828 = vpack.c.bf16 %v827, %v826
  %v829 = vld [vmem:[%s5] sm:$0xf]
  %v830 = vld [vmem:[%s5 + $0x4] sm:$0xf]
  %v831 = vld [vmem:[%s5 + $0x8] sm:$0xf]
  %v832 = vld [vmem:[%s5 + $0xc] sm:$0xf]
  %v833 = vld [vmem:[%s5 + $0x10] sm:$0xf]
  %v834 = vld [vmem:[%s5 + $0x14] sm:$0xf]
  %v835 = vld [vmem:[%s5 + $0x18] sm:$0xf]
  %v836 = vld [vmem:[%s5 + $0x1c] sm:$0xf]
  %v837 = vld [vmem:[%s6] sm:$0x1]
  %v839 = vlaneseq
  %v840 = vshrl.u32 %v839, 7
  %v841 = vsub.s32 0, %v840
  %v842 = vrot.slane %v837, %v841
  %v852 = vunpack.c.l.b16 %v829
  %v853 = vunpack.c.l.b16 %v830
  %v854 = vunpack.c.l.b16 %v831
  %v855 = vunpack.c.l.b16 %v832
  %v856 = vunpack.c.l.b16 %v833
  %v857 = vunpack.c.l.b16 %v834
  %v858 = vunpack.c.l.b16 %v835
  %v859 = vunpack.c.l.b16 %v836
  %v860 = vpack.c.b16 %v853, %v852
  %v861 = vpack.c.b16 %v855, %v854
  %v862 = vpack.c.b16 %v857, %v856
  %v863 = vpack.c.b16 %v859, %v858
  %vm868 = vcmask 523264
  %v870 = vsel %vm868, %v828, 0
  %872 = vmatprep.subr.bf16.mxu0 0
  %873 = vmatpush1.bf16.msra.mxu0 0
  %874 = vmatprep.subr.bf16.mxu0 0
  %875 = vmatpush1.bf16.msra.mxu0 0
  %876 = vmatprep.subr.bf16.mxu0 0
  %877 = vmatpush1.bf16.msra.mxu0 0
  %878 = vmatprep.subr.bf16.mxu0 0
  %879 = vmatpush1.bf16.msra.mxu0 0
  %880 = vmatprep.subr.bf16.mxu0 0
  %881 = vmatpush1.bf16.msra.mxu0 %v863
  %882 = vmatprep.subr.bf16.mxu0 0
  %883 = vmatpush1.bf16.msra.mxu0 %v862
  %884 = vmatprep.subr.bf16.mxu0 0
  %885 = vmatpush1.bf16.msra.mxu0 %v861
  %886 = vmatprep.subr.bf16.mxu0 0
  %887 = vmatpush1.bf16.msra.mxu0 %v860
  %888 = vmatprep.subr.bf16.mxu0 0
  %889 = vmatpush2.bf16.msra.mxu0 0
  %890 = vmatprep.subr.bf16.mxu0 0
  %891 = vmatpush2.bf16.msra.mxu0 0
  %892 = vmatprep.subr.bf16.mxu0 0
  %893 = vmatpush2.bf16.msra.mxu0 0
  %894 = vmatprep.subr.bf16.mxu0 0
  %895 = vmatpush2.bf16.msra.mxu0 0
  %896 = vmatprep.subr.bf16.mxu0 0
  %897 = vmatpush2.bf16.msra.mxu0 0
  %898 = vmatprep.subr.bf16.mxu0 0
  %899 = vmatpush2.bf16.msra.mxu0 0
  %900 = vmatprep.subr.bf16.mxu0 0
  %901 = vmatpush2.bf16.msra.mxu0 0
  %902 = vmatprep.subr.bf16.mxu0 0
  %903 = vmatpush2.bf16.msra.mxu0 0
  %904 = vmatprep.mubr.bf16.mxu0 0
  %905 = vmatmul.mubr.bf16.gmra.mxu0 %v870
  %v906 = vpop.f32.mrf.mxu0
  %v907 = vadd.f32 %v842, %v906
  %v908 = vpop.f32.mrf.mxu0
  %v909 = vpop.f32.mrf.mxu0
  %v910 = vadd.f32 %v842, %v909
  %v911 = vpop.f32.mrf.mxu0
  %912 = vdwg.mxu0
  %v913 = vmax.f32 %v907, 0.0
  %v914 = vmax.f32 %v910, 0.0
  %v915 = vpack.c.bf16 %v914, %v913
  %v916 = vld [vmem:[%s7] sm:$0xf]
  %v917 = vld [vmem:[%s7 + $0x4] sm:$0xf]
  %v918 = vld [vmem:[%s7 + $0x8] sm:$0xf]
  %v919 = vld [vmem:[%s7 + $0xc] sm:$0xf]
  %v920 = vld [vmem:[%s7 + $0x10] sm:$0xf]
  %v921 = vld [vmem:[%s7 + $0x14] sm:$0xf]
  %v922 = vld [vmem:[%s7 + $0x18] sm:$0xf]
  %v923 = vld [vmem:[%s7 + $0x1c] sm:$0xf]
  %v924 = vld [vmem:[%s8] sm:$0x1]
  %v926 = vlaneseq
  %v927 = vshrl.u32 %v926, 7
  %v928 = vsub.s32 0, %v927
  %v929 = vrot.slane %v924, %v928
  %v939 = vunpack.c.l.b16 %v916
  %v940 = vunpack.c.l.b16 %v917
  %v941 = vunpack.c.l.b16 %v918
  %v942 = vunpack.c.l.b16 %v919
  %v943 = vunpack.c.l.b16 %v920
  %v944 = vunpack.c.l.b16 %v921
  %v945 = vunpack.c.l.b16 %v922
  %v946 = vunpack.c.l.b16 %v923
  %v947 = vpack.c.b16 %v940, %v939
  %v948 = vpack.c.b16 %v942, %v941
  %v949 = vpack.c.b16 %v944, %v943
  %v950 = vpack.c.b16 %v946, %v945
  %v956 = vsel %vm868, %v915, 0
  %958 = vmatprep.subr.bf16.mxu0 0
  %959 = vmatpush1.bf16.msra.mxu0 0
  %960 = vmatprep.subr.bf16.mxu0 0
  %961 = vmatpush1.bf16.msra.mxu0 0
  %962 = vmatprep.subr.bf16.mxu0 0
  %963 = vmatpush1.bf16.msra.mxu0 0
  %964 = vmatprep.subr.bf16.mxu0 0
  %965 = vmatpush1.bf16.msra.mxu0 0
  %966 = vmatprep.subr.bf16.mxu0 0
  %967 = vmatpush1.bf16.msra.mxu0 %v950
  %968 = vmatprep.subr.bf16.mxu0 0
  %969 = vmatpush1.bf16.msra.mxu0 %v949
  %970 = vmatprep.subr.bf16.mxu0 0
  %971 = vmatpush1.bf16.msra.mxu0 %v948
  %972 = vmatprep.subr.bf16.mxu0 0
  %973 = vmatpush1.bf16.msra.mxu0 %v947
  %974 = vmatprep.subr.bf16.mxu0 0
  %975 = vmatpush2.bf16.msra.mxu0 0
  %976 = vmatprep.subr.bf16.mxu0 0
  %977 = vmatpush2.bf16.msra.mxu0 0
  %978 = vmatprep.subr.bf16.mxu0 0
  %979 = vmatpush2.bf16.msra.mxu0 0
  %980 = vmatprep.subr.bf16.mxu0 0
  %981 = vmatpush2.bf16.msra.mxu0 0
  %982 = vmatprep.subr.bf16.mxu0 0
  %983 = vmatpush2.bf16.msra.mxu0 0
  %984 = vmatprep.subr.bf16.mxu0 0
  %985 = vmatpush2.bf16.msra.mxu0 0
  %986 = vmatprep.subr.bf16.mxu0 0
  %987 = vmatpush2.bf16.msra.mxu0 0
  %988 = vmatprep.subr.bf16.mxu0 0
  %989 = vmatpush2.bf16.msra.mxu0 0
  %990 = vmatprep.mubr.bf16.mxu0 0
  %991 = vmatmul.mubr.bf16.gmra.mxu0 %v956
  %v992 = vpop.f32.mrf.mxu0
  %v993 = vadd.f32 %v929, %v992
  %v994 = vpop.f32.mrf.mxu0
  %v995 = vpop.f32.mrf.mxu0
  %v996 = vadd.f32 %v929, %v995
  %v997 = vpop.f32.mrf.mxu0
  %998 = vdwg.mxu0
  %vm999 = vcmask 326656
  %1000 = vst.msk [vmem:[%s9] sm:$0xff] %vm999, %v993
  %1001 = vst.msk [vmem:[%s9 + $0x8] sm:$0xff] %vm999, %v996
  // Predicated region
  $region38: #{model1_forward.8} parent=0 // pred_check
    _
  $region39: #{model1_forward.8} parent=0 // pred_check_branch
    %1003 = sbr.rel (0) target = $region41
  $region40: #{model1_forward.8} parent=0 // pred_region
    _
  $region41: #{model1_forward.8} parent=0 // pred_fallthru
    _
  // Predicated region
  $region42: #{model1_forward.8} parent=0 // pred_check
    _
  $region43: #{model1_forward.8} parent=0 // pred_check_branch
    %1005 = sbr.rel (0) target = $region45
  $region44: #{model1_forward.8} parent=0 // pred_region
    _
  $region45: #{model1_forward.8} parent=0 // pred_fallthru
    _

// kernel: model1_forward.9
$region0: #{model1_forward.9}
  #allocation0 [shape = 'u32[]', space=smem, size = 0x4, offset = 0x4, fixed_abs, tag = 'smem constant byte address 0x4 - core index']
  #allocation1 [shape = 'u32[144,128]{1,0:T(1,128)}', space=vmem, size = 0x12000, scoped, tag = 'internal scratch']
  %s0 = inlined_call_operand.vmem [shape: f32[16,153], index: 0, kind: input, shape index: {}]
  %s1 = inlined_call_operand.vmem [shape: bf16[153,256], index: 1, kind: input, shape index: {}]
  %s2 = inlined_call_operand.vmem [shape: f32[1,256], index: 2, kind: input, shape index: {}]
  %s3 = inlined_call_operand.vmem [shape: bf16[256,64], index: 3, kind: input, shape index: {}]
  %s4 = inlined_call_operand.vmem [shape: f32[1,64], index: 4, kind: input, shape index: {}]
  %s5 = inlined_call_operand.vmem [shape: f32[16,64], index: 5, kind: output, shape index: {}]
  %s6 = sld [smem:[#allocation0]]
  $region30: #{model1_forward.9} parent=0
    _
  %s8 = ssub.s32 1, %s6
  %s9 = scalar_select 0, %s8, %s6
  // Predicated region
  $region2: #{model1_forward.9} parent=0 // pred_check
    _
  $region3: #{model1_forward.9} parent=0 // pred_check_branch
    %11 = sbr.rel (0) target = $region5
  $region4: #{model1_forward.9} parent=0 // pred_region
    _
  $region5: #{model1_forward.9} parent=0 // pred_fallthru
    _
  // Predicated region
  $region6: #{model1_forward.9} parent=0 // pred_check
    _
  $region7: #{model1_forward.9} parent=0 // pred_check_branch
    %13 = sbr.rel (0) target = $region9
  $region8: #{model1_forward.9} parent=0 // pred_region
    _
  $region9: #{model1_forward.9} parent=0 // pred_fallthru
    _
  // Predicated region
  $region10: #{model1_forward.9} parent=0 // pred_check
    _
  $region11: #{model1_forward.9} parent=0 // pred_check_branch
    %15 = sbr.rel (0) target = $region13
  $region12: #{model1_forward.9} parent=0 // pred_region
    _
  $region13: #{model1_forward.9} parent=0 // pred_fallthru
    _
  // Predicated region
  $region14: #{model1_forward.9} parent=0 // pred_check
    _
  $region15: #{model1_forward.9} parent=0 // pred_check_branch
    %17 = sbr.rel (0) target = $region17
  $region16: #{model1_forward.9} parent=0 // pred_region
    _
  $region17: #{model1_forward.9} parent=0 // pred_fallthru
    _
  // Predicated region
  $region18: #{model1_forward.9} parent=0 // pred_check
    _
  $region19: #{model1_forward.9} parent=0 // pred_check_branch
    %19 = sbr.rel (0) target = $region21
  $region20: #{model1_forward.9} parent=0 // pred_region
    _
  $region21: #{model1_forward.9} parent=0 // pred_fallthru
    _
  %v21 = vld [vmem:[%s0] sm:$0xff]
  %v22 = vld [vmem:[%s0 + $0x8] sm:$0xff]
  %v23 = vld [vmem:[%s0 + $0x10] sm:$0xff]
  %v24 = vld [vmem:[%s0 + $0x18] sm:$0xff]
  %v25 = vmax.f32 %v21, 0.0
  %v26 = vmax.f32 %v22, 0.0
  %v27 = vmax.f32 %v23, 0.0
  %v28 = vmax.f32 %v24, 0.0
  %v29 = vpack.c.bf16 %v27, %v25
  %v30 = vpack.c.bf16 %v28, %v26
  %v31 = vld [vmem:[%s1] sm:$0xff]
  %v32 = vld [vmem:[%s1 + $0x8] sm:$0xff]
  %v33 = vld [vmem:[%s1 + $0x10] sm:$0xff]
  %v34 = vld [vmem:[%s1 + $0x18] sm:$0xff]
  %v35 = vld [vmem:[%s1 + $0x20] sm:$0xff]
  %v36 = vld [vmem:[%s1 + $0x28] sm:$0xff]
  %v37 = vld [vmem:[%s1 + $0x30] sm:$0xff]
  %v38 = vld [vmem:[%s1 + $0x38] sm:$0xff]
  %v39 = vld [vmem:[%s1 + $0x40] sm:$0xff]
  %v40 = vld [vmem:[%s1 + $0x48] sm:$0xff]
  %v41 = vld [vmem:[%s1 + $0x50] sm:$0xff]
  %v42 = vld [vmem:[%s1 + $0x58] sm:$0xff]
  %v43 = vld [vmem:[%s1 + $0x60] sm:$0xff]
  %v44 = vld [vmem:[%s1 + $0x68] sm:$0xff]
  %v45 = vld [vmem:[%s1 + $0x70] sm:$0xff]
  %v46 = vld [vmem:[%s1 + $0x78] sm:$0xff]
  %v47 = vld [vmem:[%s1 + $0x80] sm:$0xff]
  %v48 = vld [vmem:[%s1 + $0x88] sm:$0xff]
  %v49 = vld [vmem:[%s1 + $0x90] sm:$0xff]
  %v50 = vld [vmem:[%s1 + $0x98] sm:$0x11]
  %v51 = vld [vmem:[%s2] sm:$0x3]
  %v53 = vlaneseq
  %v54 = vshrl.u32 %v53, 7
  %v55 = vsub.s32 0, %v54
  %v56 = vrot.slane %v51, %v55
  %v57 = vlaneseq
  %v58 = vshrl.u32 %v57, 7
  %v59 = vsub.s32 1, %v58
  %v60 = vrot.slane %v51, %v59
  %v83 = vunpack.c.l.b16 %v31
  %v84 = vunpack.c.h.b16 %v31
  %v85 = vunpack.c.l.b16 %v32
  %v86 = vunpack.c.h.b16 %v32
  %v87 = vunpack.c.l.b16 %v33
  %v88 = vunpack.c.h.b16 %v33
  %v89 = vunpack.c.l.b16 %v34
  %v90 = vunpack.c.h.b16 %v34
  %v91 = vunpack.c.l.b16 %v35
  %v92 = vunpack.c.h.b16 %v35
  %v93 = vunpack.c.l.b16 %v36
  %v94 = vunpack.c.h.b16 %v36
  %v95 = vunpack.c.l.b16 %v37
  %v96 = vunpack.c.h.b16 %v37
  %v97 = vunpack.c.l.b16 %v38
  %v98 = vunpack.c.h.b16 %v38
  %v99 = vunpack.c.l.b16 %v39
  %v100 = vunpack.c.h.b16 %v39
  %v101 = vunpack.c.l.b16 %v40
  %v102 = vunpack.c.h.b16 %v40
  %v103 = vunpack.c.l.b16 %v41
  %v104 = vunpack.c.h.b16 %v41
  %v105 = vunpack.c.l.b16 %v42
  %v106 = vunpack.c.h.b16 %v42
  %v107 = vunpack.c.l.b16 %v43
  %v108 = vunpack.c.h.b16 %v43
  %v109 = vunpack.c.l.b16 %v44
  %v110 = vunpack.c.h.b16 %v44
  %v111 = vunpack.c.l.b16 %v45
  %v112 = vunpack.c.h.b16 %v45
  %v113 = vunpack.c.l.b16 %v46
  %v114 = vunpack.c.h.b16 %v46
  %v115 = vunpack.c.l.b16 %v47
  %v116 = vunpack.c.h.b16 %v47
  %v117 = vunpack.c.l.b16 %v48
  %v118 = vunpack.c.h.b16 %v48
  %v119 = vunpack.c.l.b16 %v49
  %v120 = vunpack.c.h.b16 %v49
  %v121 = vunpack.c.l.b16 %v50
  %v122 = vunpack.c.h.b16 %v50
  %v123 = vpack.c.b16 %v85, %v83
  %v124 = vpack.c.b16 %v86, %v84
  %v125 = vpack.c.b16 %v89, %v87
  %v126 = vpack.c.b16 %v90, %v88
  %v127 = vpack.c.b16 %v93, %v91
  %v128 = vpack.c.b16 %v94, %v92
  %v129 = vpack.c.b16 %v97, %v95
  %v130 = vpack.c.b16 %v98, %v96
  %v131 = vpack.c.b16 %v101, %v99
  %v132 = vpack.c.b16 %v102, %v100
  %v133 = vpack.c.b16 %v105, %v103
  %v134 = vpack.c.b16 %v106, %v104
  %v135 = vpack.c.b16 %v109, %v107
  %v136 = vpack.c.b16 %v110, %v108
  %v137 = vpack.c.b16 %v113, %v111
  %v138 = vpack.c.b16 %v114, %v112
  %v139 = vpack.c.b16 %v117, %v115
  %v140 = vpack.c.b16 %v118, %v116
  %v141 = vpack.c.b16 %v121, %v119
  %v142 = vpack.c.b16 %v122, %v120
  %vm161 = vcmask 203776
  %v163 = vsel %vm161, %v30, 0
  %vm165 = vcmask 1043456
  %vm166 = vcmask 1044480
  %v167 = vsel %vm165, 4294967295, 65535
  %v168 = vsel %vm166, %v167, 0
  %v170 = vand.u32 %v141, %v168
  %v173 = vand.u32 %v142, %v168
  %175 = vmatprep.subr.bf16.mxu0 %v138
  %176 = vmatpush1.bf16.msra.mxu0 %v137
  %177 = vmatprep.subr.bf16.mxu0 %v136
  %178 = vmatpush1.bf16.msra.mxu0 %v135
  %179 = vmatprep.subr.bf16.mxu0 %v134
  %180 = vmatpush1.bf16.msra.mxu0 %v133
  %181 = vmatprep.subr.bf16.mxu0 %v132
  %182 = vmatpush1.bf16.msra.mxu0 %v131
  %183 = vmatprep.subr.bf16.mxu0 %v130
  %184 = vmatpush1.bf16.msra.mxu0 %v129
  %185 = vmatprep.subr.bf16.mxu0 %v128
  %186 = vmatpush1.bf16.msra.mxu0 %v127
  %187 = vmatprep.subr.bf16.mxu0 %v126
  %188 = vmatpush1.bf16.msra.mxu0 %v125
  %189 = vmatprep.subr.bf16.mxu0 %v124
  %190 = vmatpush1.bf16.msra.mxu0 %v123
  %191 = vmatprep.subr.bf16.mxu0 0
  %192 = vmatpush2.bf16.msra.mxu0 0
  %193 = vmatprep.subr.bf16.mxu0 0
  %194 = vmatpush2.bf16.msra.mxu0 0
  %195 = vmatprep.subr.bf16.mxu0 0
  %196 = vmatpush2.bf16.msra.mxu0 0
  %197 = vmatprep.subr.bf16.mxu0 0
  %198 = vmatpush2.bf16.msra.mxu0 0
  %199 = vmatprep.subr.bf16.mxu0 0
  %200 = vmatpush2.bf16.msra.mxu0 0
  %201 = vmatprep.subr.bf16.mxu0 0
  %202 = vmatpush2.bf16.msra.mxu0 0
  %203 = vmatprep.subr.bf16.mxu0 %v173
  %204 = vmatpush2.bf16.msra.mxu0 %v170
  %205 = vmatprep.subr.bf16.mxu0 %v140
  %206 = vmatpush2.bf16.msra.mxu0 %v139
  %207 = vmatprep.mubr.bf16.mxu0 %v163
  %208 = vmatmul.mubr.bf16.gmra.mxu0 %v29
  %v209 = vpop.f32.mrf.mxu0
  %v210 = vadd.f32 %v56, %v209
  %v211 = vpop.f32.mrf.mxu0
  %v212 = vadd.f32 %v60, %v211
  %v213 = vpop.f32.mrf.mxu0
  %v214 = vadd.f32 %v56, %v213
  %v215 = vpop.f32.mrf.mxu0
  %v216 = vadd.f32 %v60, %v215
  %217 = vdwg.mxu0
  %v218 = vmax.f32 %v210, 0.0
  %v219 = vmax.f32 %v212, 0.0
  %v220 = vmax.f32 %v214, 0.0
  %v221 = vmax.f32 %v216, 0.0
  %v222 = vpack.c.bf16 %v220, %v218
  %v223 = vpack.c.bf16 %v221, %v219
  %v224 = vld [vmem:[%s3] sm:$0xf]
  %v225 = vld [vmem:[%s3 + $0x4] sm:$0xf]
  %v226 = vld [vmem:[%s3 + $0x8] sm:$0xf]
  %v227 = vld [vmem:[%s3 + $0xc] sm:$0xf]
  %v228 = vld [vmem:[%s3 + $0x10] sm:$0xf]
  %v229 = vld [vmem:[%s3 + $0x14] sm:$0xf]
  %v230 = vld [vmem:[%s3 + $0x18] sm:$0xf]
  %v231 = vld [vmem:[%s3 + $0x1c] sm:$0xf]
  %v232 = vld [vmem:[%s3 + $0x20] sm:$0xf]
  %v233 = vld [vmem:[%s3 + $0x24] sm:$0xf]
  %v234 = vld [vmem:[%s3 + $0x28] sm:$0xf]
  %v235 = vld [vmem:[%s3 + $0x2c] sm:$0xf]
  %v236 = vld [vmem:[%s3 + $0x30] sm:$0xf]
  %v237 = vld [vmem:[%s3 + $0x34] sm:$0xf]
  %v238 = vld [vmem:[%s3 + $0x38] sm:$0xf]
  %v239 = vld [vmem:[%s3 + $0x3c] sm:$0xf]
  %v240 = vld [vmem:[%s3 + $0x40] sm:$0xf]
  %v241 = vld [vmem:[%s3 + $0x44] sm:$0xf]
  %v242 = vld [vmem:[%s3 + $0x48] sm:$0xf]
  %v243 = vld [vmem:[%s3 + $0x4c] sm:$0xf]
  %v244 = vld [vmem:[%s3 + $0x50] sm:$0xf]
  %v245 = vld [vmem:[%s3 + $0x54] sm:$0xf]
  %v246 = vld [vmem:[%s3 + $0x58] sm:$0xf]
  %v247 = vld [vmem:[%s3 + $0x5c] sm:$0xf]
  %v248 = vld [vmem:[%s3 + $0x60] sm:$0xf]
  %v249 = vld [vmem:[%s3 + $0x64] sm:$0xf]
  %v250 = vld [vmem:[%s3 + $0x68] sm:$0xf]
  %v251 = vld [vmem:[%s3 + $0x6c] sm:$0xf]
  %v252 = vld [vmem:[%s3 + $0x70] sm:$0xf]
  %v253 = vld [vmem:[%s3 + $0x74] sm:$0xf]
  %v254 = vld [vmem:[%s3 + $0x78] sm:$0xf]
  %v255 = vld [vmem:[%s3 + $0x7c] sm:$0xf]
  %v256 = vld [vmem:[%s4] sm:$0x1]
  %v258 = vlaneseq
  %v259 = vshrl.u32 %v258, 7
  %v260 = vsub.s32 0, %v259
  %v261 = vrot.slane %v256, %v260
  %v295 = vunpack.c.l.b16 %v224
  %v296 = vunpack.c.l.b16 %v225
  %v297 = vunpack.c.l.b16 %v226
  %v298 = vunpack.c.l.b16 %v227
  %v299 = vunpack.c.l.b16 %v228
  %v300 = vunpack.c.l.b16 %v229
  %v301 = vunpack.c.l.b16 %v230
  %v302 = vunpack.c.l.b16 %v231
  %v303 = vunpack.c.l.b16 %v232
  %v304 = vunpack.c.l.b16 %v233
  %v305 = vunpack.c.l.b16 %v234
  %v306 = vunpack.c.l.b16 %v235
  %v307 = vunpack.c.l.b16 %v236
  %v308 = vunpack.c.l.b16 %v237
  %v309 = vunpack.c.l.b16 %v238
  %v310 = vunpack.c.l.b16 %v239
  %v311 = vunpack.c.l.b16 %v240
  %v312 = vunpack.c.l.b16 %v241
  %v313 = vunpack.c.l.b16 %v242
  %v314 = vunpack.c.l.b16 %v243
  %v315 = vunpack.c.l.b16 %v244
  %v316 = vunpack.c.l.b16 %v245
  %v317 = vunpack.c.l.b16 %v246
  %v318 = vunpack.c.l.b16 %v247
  %v319 = vunpack.c.l.b16 %v248
  %v320 = vunpack.c.l.b16 %v249
  %v321 = vunpack.c.l.b16 %v250
  %v322 = vunpack.c.l.b16 %v251
  %v323 = vunpack.c.l.b16 %v252
  %v324 = vunpack.c.l.b16 %v253
  %v325 = vunpack.c.l.b16 %v254
  %v326 = vunpack.c.l.b16 %v255
  %v327 = vpack.c.b16 %v296, %v295
  %v328 = vpack.c.b16 %v298, %v297
  %v329 = vpack.c.b16 %v300, %v299
  %v330 = vpack.c.b16 %v302, %v301
  %v331 = vpack.c.b16 %v304, %v303
  %v332 = vpack.c.b16 %v306, %v305
  %v333 = vpack.c.b16 %v308, %v307
  %v334 = vpack.c.b16 %v310, %v309
  %v335 = vpack.c.b16 %v312, %v311
  %v336 = vpack.c.b16 %v314, %v313
  %v337 = vpack.c.b16 %v316, %v315
  %v338 = vpack.c.b16 %v318, %v317
  %v339 = vpack.c.b16 %v320, %v319
  %v340 = vpack.c.b16 %v322, %v321
  %v341 = vpack.c.b16 %v324, %v323
  %v342 = vpack.c.b16 %v326, %v325
  %359 = vmatprep.subr.bf16.mxu0 0
  %360 = vmatpush1.bf16.msra.mxu0 %v334
  %361 = vmatprep.subr.bf16.mxu0 0
  %362 = vmatpush1.bf16.msra.mxu0 %v333
  %363 = vmatprep.subr.bf16.mxu0 0
  %364 = vmatpush1.bf16.msra.mxu0 %v332
  %365 = vmatprep.subr.bf16.mxu0 0
  %366 = vmatpush1.bf16.msra.mxu0 %v331
  %367 = vmatprep.subr.bf16.mxu0 0
  %368 = vmatpush1.bf16.msra.mxu0 %v330
  %369 = vmatprep.subr.bf16.mxu0 0
  %370 = vmatpush1.bf16.msra.mxu0 %v329
  %371 = vmatprep.subr.bf16.mxu0 0
  %372 = vmatpush1.bf16.msra.mxu0 %v328
  %373 = vmatprep.subr.bf16.mxu0 0
  %374 = vmatpush1.bf16.msra.mxu0 %v327
  %375 = vmatprep.subr.bf16.mxu0 0
  %376 = vmatpush2.bf16.msra.mxu0 %v342
  %377 = vmatprep.subr.bf16.mxu0 0
  %378 = vmatpush2.bf16.msra.mxu0 %v341
  %379 = vmatprep.subr.bf16.mxu0 0
  %380 = vmatpush2.bf16.msra.mxu0 %v340
  %381 = vmatprep.subr.bf16.mxu0 0
  %382 = vmatpush2.bf16.msra.mxu0 %v339
  %383 = vmatprep.subr.bf16.mxu0 0
  %384 = vmatpush2.bf16.msra.mxu0 %v338
  %385 = vmatprep.subr.bf16.mxu0 0
  %386 = vmatpush2.bf16.msra.mxu0 %v337
  %387 = vmatprep.subr.bf16.mxu0 0
  %388 = vmatpush2.bf16.msra.mxu0 %v336
  %389 = vmatprep.subr.bf16.mxu0 0
  %390 = vmatpush2.bf16.msra.mxu0 %v335
  %391 = vmatprep.mubr.bf16.mxu0 %v223
  %392 = vmatmul.mubr.bf16.gmra.mxu0 %v222
  %v393 = vpop.f32.mrf.mxu0
  %v394 = vadd.f32 %v261, %v393
  %v395 = vpop.f32.mrf.mxu0
  %v396 = vpop.f32.mrf.mxu0
  %v397 = vadd.f32 %v261, %v396
  %v398 = vpop.f32.mrf.mxu0
  %399 = vdwg.mxu0
  %vm400 = vcmask 523264
  %401 = vst.msk [vmem:[%s5] sm:$0xff] %vm400, %v394
  %402 = vst.msk [vmem:[%s5 + $0x8] sm:$0xff] %vm400, %v397
  // Predicated region
  $region22: #{model1_forward.9} parent=0 // pred_check
    _
  $region23: #{model1_forward.9} parent=0 // pred_check_branch
    %404 = sbr.rel (0) target = $region25
  $region24: #{model1_forward.9} parent=0 // pred_region
    _
  $region25: #{model1_forward.9} parent=0 // pred_fallthru
    _
  // Predicated region
  $region26: #{model1_forward.9} parent=0 // pred_check
    _
  $region27: #{model1_forward.9} parent=0 // pred_check_branch
    %406 = sbr.rel (0) target = $region29
  $region28: #{model1_forward.9} parent=0 // pred_region
    _
  $region29: #{model1_forward.9} parent=0 // pred_fallthru
    _

</llo_original>
